<compile_context>
chip_gen: v7x
topology: tpu7x:2x2x1
jax: 0.10.0
libtpu: 0.0.40
codegen_flags: <defaults>
</compile_context>

<pallas_src>
import jax
import jax.numpy as jnp
from jax.experimental import pallas as pl
from jax.experimental.pallas import tpu as pltpu


# ----------------------------- model config ---------------------------------
CLASSES = 10
CHANNELS = 1
IMG_SIZE = 28
LATENT_DIM = 100
IMG_FLAT = CHANNELS * IMG_SIZE * IMG_SIZE          # 784
IMG_FLAT_PAD = 896                                  # 7 * 128, lane-dense output

GEN_DIMS = [LATENT_DIM + CLASSES, 128, 256, 512, 1024, IMG_FLAT]
DISC_DIMS = [CLASSES + IMG_FLAT, 1024, 512, 256, 128, 1]
BN_EPS = 1e-5

_VMEM_LIMIT = 48 * 1024 * 1024      # safe on v5e/v6e (128 MiB) and v7x (64 MiB)
_DISC_MAX_BLOCK = 256               # batch rows per grid step (fills an MXU pass)


# ------------------------------ kernel helpers --------------------------------
def _leaky(x):
    return jnp.where(x > 0, x, 0.2 * x)


def _bn_batch(x, gamma, beta):
    # BatchNorm1d with batch statistics (biased variance), eps = 1e-5. f32 math.
    mean = jnp.mean(x, axis=0, keepdims=True)
    var = jnp.mean((x - mean) ** 2, axis=0, keepdims=True)
    return gamma * (x - mean) * jax.lax.rsqrt(var + BN_EPS) + beta


def _bdot(a, w):
    # bf16 matmul operands, f32 accumulation on the MXU.
    return jnp.dot(a.astype(jnp.bfloat16), w[...],
                   preferred_element_type=jnp.float32)


# ------------------------------ kernels --------------------------------------
def _gen_kernel(emb_ref, z_ref,
                w1e, w1z, b1,
                w2, g2, be2,
                w3, g3, be3,
                w4, g4, be4,
                w5, b5,
                out_ref):
    # Layer 1: Linear(cat(emb, z)) + LeakyReLU, with the concat split into
    # two matmuls (no materialized (B, 110) array).
    h = _bdot(emb_ref[...], w1e) + _bdot(z_ref[...], w1z) + b1[...]
    h = _leaky(h)
    # Layers 2-4: Linear + BN(batch stats) + LeakyReLU.
    # The linear bias cancels exactly under batch-stat BN, so it is omitted.
    h = _bdot(h, w2)
    h = _leaky(_bn_batch(h, g2[...], be2[...]))
    h = _bdot(h, w3)
    h = _leaky(_bn_batch(h, g3[...], be3[...]))
    h = _bdot(h, w4)
    h = _leaky(_bn_batch(h, g4[...], be4[...]))
    # Output: Linear + Tanh (lane-dense padded to 896; wrapper slices to 784)
    h = _bdot(h, w5) + b5[...]
    out_ref[...] = jnp.tanh(h)


def _disc_kernel(img_ref, emb_ref,
                 w1i, w1e, b1,
                 w2, b2,
                 w3, b3,
                 w45, b45,
                 out_ref):
    # Layer 1: Linear(cat(img, emb)) + LeakyReLU, split matmul.
    h = _bdot(img_ref[...], w1i) + _bdot(emb_ref[...], w1e) + b1[...]
    h = _leaky(h)
    # Layer 2: Linear + (Dropout: identity) + LeakyReLU
    h = _bdot(h, w2) + b2[...]
    h = _leaky(h)
    # Layer 3: Linear + (Dropout: identity) + LeakyReLU
    h = _bdot(h, w3) + b3[...]
    h = _leaky(h)
    # Layers 4+5 fused (no activation in between): Linear -> Linear + Sigmoid
    h = _bdot(h, w45) + b45[...]
    out_ref[...] = jax.nn.sigmoid(h)


# ------------------------------ wrappers --------------------------------------
def _vmem_spec():
    return pl.BlockSpec(memory_space=pltpu.MemorySpace.VMEM)


def _full_spec(shape):
    # Whole array resident, constant block index across the batch grid.
    return pl.BlockSpec(shape, lambda i: (0,) * len(shape))


@jax.jit
def generator_forward(params, z, emb):
    """z: (B, latent_dim), emb: (B, classes) -> image (B, C, H, W).

    Single-block over the batch: BatchNorm1d uses batch statistics, so the
    whole batch must be visible to one kernel invocation.
    """
    b = z.shape[0]
    flat_args = (
        params["g_w1e"], params["g_w1z"], params["g_b1"],
        params["g_w2"], params["g_g2"], params["g_be2"],
        params["g_w3"], params["g_g3"], params["g_be3"],
        params["g_w4"], params["g_g4"], params["g_be4"],
        params["g_w5"], params["g_b5"],
    )

    weight_bytes = sum(int(p.size) * p.dtype.itemsize for p in flat_args)
    flops = 2 * b * (CLASSES * 128 + LATENT_DIM * 128 + 128 * 256
                     + 256 * 512 + 512 * 1024 + 1024 * IMG_FLAT_PAD)
    bytes_accessed = (weight_bytes + b * (CLASSES + LATENT_DIM) * 4
                      + b * IMG_FLAT_PAD * 4)

    out = pl.pallas_call(
        _gen_kernel,
        out_shape=jax.ShapeDtypeStruct((b, IMG_FLAT_PAD), jnp.float32),
        in_specs=[_vmem_spec()] * (2 + len(flat_args)),
        out_specs=_vmem_spec(),
        compiler_params=pltpu.CompilerParams(vmem_limit_bytes=_VMEM_LIMIT),
        cost_estimate=pl.CostEstimate(flops=flops,
                                      transcendentals=b * IMG_FLAT_PAD,
                                      bytes_accessed=bytes_accessed),
    )(emb, z, *flat_args)
    return out[:, :IMG_FLAT].reshape(b, CHANNELS, IMG_SIZE, IMG_SIZE)


@jax.jit
def discriminator_forward(params, x_img, emb):
    """x_img: (B, img_flat), emb: (B, classes) -> (B, 1) probabilities."""
    b = x_img.shape[0]
    block_b = b if b <= _DISC_MAX_BLOCK else _DISC_MAX_BLOCK
    grid = (pl.cdiv(b, block_b),)

    flat_args = (
        params["d_w1i"], params["d_w1e"], params["d_b1"],
        params["d_w2"], params["d_b2"],
        params["d_w3"], params["d_b3"],
        params["d_w45"], params["d_b45"],
    )

    weight_bytes = sum(int(p.size) * p.dtype.itemsize for p in flat_args)
    flops = 2 * b * (IMG_FLAT * 1024 + CLASSES * 1024 + 1024 * 512
                     + 512 * 256 + 256 * 1)
    bytes_accessed = weight_bytes + b * (IMG_FLAT + CLASSES) * 4 + b * 4

    weight_specs = [_full_spec(p.shape) for p in flat_args]

    return pl.pallas_call(
        _disc_kernel,
        out_shape=jax.ShapeDtypeStruct((b, 1), jnp.float32),
        grid=grid,
        in_specs=[pl.BlockSpec((block_b, IMG_FLAT), lambda i: (i, 0)),
                  pl.BlockSpec((block_b, CLASSES), lambda i: (i, 0)),
                  *weight_specs],
        out_specs=pl.BlockSpec((block_b, 1), lambda i: (i, 0)),
        compiler_params=pltpu.CompilerParams(
            dimension_semantics=("parallel",),
            vmem_limit_bytes=_VMEM_LIMIT),
        cost_estimate=pl.CostEstimate(flops=flops,
                                      transcendentals=b,
                                      bytes_accessed=bytes_accessed),
    )(x_img, emb, *flat_args)


def cgan_forward(params, inp, labels):
    """Mirrors CGAN.forward: dim==2 -> generator, dim==4 -> discriminator."""
    emb = jnp.take(params["emb"], labels, axis=0)  # (B, classes)
    if inp.ndim == 2:
        return generator_forward(params, inp, emb)
    elif inp.ndim == 4:
        x_img = inp.reshape(inp.shape[0], -1)
        return discriminator_forward(params, x_img, emb)
    else:
        raise ValueError("input must be rank 2 (latent) or rank 4 (image)")


# --------------------------- parameter init -----------------------------------
def init_params(key):
    params = {}
    key, k = jax.random.split(key)
    # nn.Embedding(10, 10): N(0, 1)
    params["emb"] = jax.random.normal(k, (CLASSES, CLASSES), jnp.float32)

    def linear_init(key, fan_in, fan_out):
        kw, kb = jax.random.split(key)
        bound = 1.0 / jnp.sqrt(fan_in)
        w = jax.random.uniform(kw, (fan_in, fan_out), jnp.float32, -bound, bound)
        b = jax.random.uniform(kb, (1, fan_out), jnp.float32, -bound, bound)
        return w, b

    # ----- Generator -----
    gw, gb = [], []
    for i in range(5):
        key, k = jax.random.split(key)
        w, bias = linear_init(k, GEN_DIMS[i], GEN_DIMS[i + 1])
        gw.append(w)
        gb.append(bias)

    # Layer 1 split into (embedding rows | latent rows); weights stored bf16.
    params["g_w1e"] = gw[0][:CLASSES].astype(jnp.bfloat16)    # (10, 128)
    params["g_w1z"] = gw[0][CLASSES:].astype(jnp.bfloat16)    # (100, 128)
    params["g_b1"] = gb[0]                                    # f32
    for i in (2, 3, 4):
        # Linear bias omitted: it cancels exactly under batch-statistic BN.
        params[f"g_w{i}"] = gw[i - 1].astype(jnp.bfloat16)
        params[f"g_g{i}"] = jnp.ones((1, GEN_DIMS[i]), jnp.float32)    # BN gamma
        params[f"g_be{i}"] = jnp.zeros((1, GEN_DIMS[i]), jnp.float32)  # BN beta
    # Output layer padded to a lane-dense 896 columns (extra cols are zero).
    pad = IMG_FLAT_PAD - IMG_FLAT
    params["g_w5"] = jnp.pad(gw[4], ((0, 0), (0, pad))).astype(jnp.bfloat16)
    params["g_b5"] = jnp.pad(gb[4], ((0, 0), (0, pad)))

    # ----- Discriminator -----
    dw, db = [], []
    for i in range(5):
        key, k = jax.random.split(key)
        w, bias = linear_init(k, DISC_DIMS[i], DISC_DIMS[i + 1])
        dw.append(w)
        db.append(bias)

    # Layer 1 split into (image rows | embedding rows).
    params["d_w1i"] = dw[0][:IMG_FLAT].astype(jnp.bfloat16)   # (784, 1024)
    params["d_w1e"] = dw[0][IMG_FLAT:].astype(jnp.bfloat16)   # (10, 1024)
    params["d_b1"] = db[0]
    params["d_w2"] = dw[1].astype(jnp.bfloat16)
    params["d_b2"] = db[1]
    params["d_w3"] = dw[2].astype(jnp.bfloat16)
    params["d_b3"] = db[2]
    # Layers 4+5 fused (Linear -> Linear, no activation between): exact algebra.
    w45 = dw[3] @ dw[4]                 # (256, 1)
    b45 = db[3] @ dw[4] + db[4]         # (1, 1)
    params["d_w45"] = w45.astype(jnp.bfloat16)
    params["d_b45"] = b45
    return params


# --------------------------------- main ---------------------------------------
if __name__ == "__main__":
    key = jax.random.PRNGKey(0)
    key, kp, kz, kl = jax.random.split(key, 4)

    params = init_params(kp)

    B = 8
    labels = jax.random.randint(kl, (B,), 0, CLASSES)
    z = jax.random.normal(kz, (B, LATENT_DIM), jnp.float32)

    # Generator path (input.dim() == 2)
    fake_imgs = cgan_forward(params, z, labels)
    fake_imgs = jax.block_until_ready(fake_imgs)
    assert fake_imgs.shape == (B, CHANNELS, IMG_SIZE, IMG_SIZE)
    assert bool(jnp.all(jnp.isfinite(fake_imgs)))

    # Discriminator path (input.dim() == 4)
    probs = cgan_forward(params, fake_imgs, labels)
    probs = jax.block_until_ready(probs)
    assert probs.shape == (B, 1)
    assert bool(jnp.all((probs >= 0.0) & (probs <= 1.0)))

    print("KERNEL_OK")
</pallas_src>

<mosaic_0001>
module attributes {stable_mosaic.version = 11 : i64} {
  func.func @_gen_kernel(%arg0: memref<8x10xf32, #tpu.memory_space<vmem>>, %arg1: memref<8x100xf32, #tpu.memory_space<vmem>>, %arg2: memref<10x128xbf16, #tpu.memory_space<vmem>>, %arg3: memref<100x128xbf16, #tpu.memory_space<vmem>>, %arg4: memref<1x128xf32, #tpu.memory_space<vmem>>, %arg5: memref<128x256xbf16, #tpu.memory_space<vmem>>, %arg6: memref<1x256xf32, #tpu.memory_space<vmem>>, %arg7: memref<1x256xf32, #tpu.memory_space<vmem>>, %arg8: memref<256x512xbf16, #tpu.memory_space<vmem>>, %arg9: memref<1x512xf32, #tpu.memory_space<vmem>>, %arg10: memref<1x512xf32, #tpu.memory_space<vmem>>, %arg11: memref<512x1024xbf16, #tpu.memory_space<vmem>>, %arg12: memref<1x1024xf32, #tpu.memory_space<vmem>>, %arg13: memref<1x1024xf32, #tpu.memory_space<vmem>>, %arg14: memref<1024x896xbf16, #tpu.memory_space<vmem>>, %arg15: memref<1x896xf32, #tpu.memory_space<vmem>>, %arg16: memref<8x896xf32, #tpu.memory_space<vmem>>) attributes {dimension_semantics = [], scalar_prefetch = 0 : i64, scratch_operands = 0 : i64, tpu.core_type = #tpu.core_type<tc>} {
    %c0 = arith.constant 0 : index
    %c0_0 = arith.constant 0 : index
    %0 = vector.load %arg0[%c0, %c0_0] : memref<8x10xf32, #tpu.memory_space<vmem>>, vector<8x10xf32>
    %1 = arith.truncf %0 : vector<8x10xf32> to vector<8x10xbf16>
    %c0_1 = arith.constant 0 : index
    %c0_2 = arith.constant 0 : index
    %2 = vector.load %arg2[%c0_1, %c0_2] : memref<10x128xbf16, #tpu.memory_space<vmem>>, vector<10x128xbf16>
    %cst = arith.constant dense<0.000000e+00> : vector<8x128xf32>
    %3 = tpu.matmul %1, %2, %cst {dimension_numbers = #tpu.dot_dimension_numbers<[1], [0], [0], [1], [0, 0, 1, 1], [], []>} : vector<8x10xbf16>, vector<10x128xbf16>, vector<8x128xf32> -> vector<8x128xf32>
    %c0_3 = arith.constant 0 : index
    %c0_4 = arith.constant 0 : index
    %4 = vector.load %arg1[%c0_3, %c0_4] : memref<8x100xf32, #tpu.memory_space<vmem>>, vector<8x100xf32>
    %5 = arith.truncf %4 : vector<8x100xf32> to vector<8x100xbf16>
    %c0_5 = arith.constant 0 : index
    %c0_6 = arith.constant 0 : index
    %6 = vector.load %arg3[%c0_5, %c0_6] : memref<100x128xbf16, #tpu.memory_space<vmem>>, vector<100x128xbf16>
    %cst_7 = arith.constant dense<0.000000e+00> : vector<8x128xf32>
    %7 = tpu.matmul %5, %6, %cst_7 {dimension_numbers = #tpu.dot_dimension_numbers<[1], [0], [0], [1], [0, 0, 1, 1], [], []>} : vector<8x100xbf16>, vector<100x128xbf16>, vector<8x128xf32> -> vector<8x128xf32>
    %8 = arith.addf %3, %7 : vector<8x128xf32>
    %c0_8 = arith.constant 0 : index
    %c0_9 = arith.constant 0 : index
    %9 = vector.load %arg4[%c0_8, %c0_9] : memref<1x128xf32, #tpu.memory_space<vmem>>, vector<1x128xf32>
    %10 = vector.broadcast %9 : vector<1x128xf32> to vector<8x128xf32>
    %11 = arith.addf %8, %10 : vector<8x128xf32>
    %cst_10 = arith.constant 0.000000e+00 : f32
    %12 = vector.broadcast %cst_10 : f32 to vector<8x128xf32>
    %13 = arith.cmpf ogt, %11, %12 : vector<8x128xf32>
    %cst_11 = arith.constant 2.000000e-01 : f32
    %14 = vector.broadcast %cst_11 : f32 to vector<8x128xf32>
    %15 = arith.mulf %14, %11 : vector<8x128xf32>
    %16 = arith.select %13, %11, %15 : vector<8x128xi1>, vector<8x128xf32>
    %17 = arith.truncf %16 : vector<8x128xf32> to vector<8x128xbf16>
    %c0_12 = arith.constant 0 : index
    %c0_13 = arith.constant 0 : index
    %18 = vector.load %arg5[%c0_12, %c0_13] : memref<128x256xbf16, #tpu.memory_space<vmem>>, vector<128x256xbf16>
    %cst_14 = arith.constant dense<0.000000e+00> : vector<8x256xf32>
    %19 = tpu.matmul %17, %18, %cst_14 {dimension_numbers = #tpu.dot_dimension_numbers<[1], [0], [0], [1], [0, 0, 1, 1], [], []>} : vector<8x128xbf16>, vector<128x256xbf16>, vector<8x256xf32> -> vector<8x256xf32>
    %c0_15 = arith.constant 0 : index
    %c0_16 = arith.constant 0 : index
    %20 = vector.load %arg6[%c0_15, %c0_16] : memref<1x256xf32, #tpu.memory_space<vmem>>, vector<1x256xf32>
    %c0_17 = arith.constant 0 : index
    %c0_18 = arith.constant 0 : index
    %21 = vector.load %arg7[%c0_17, %c0_18] : memref<1x256xf32, #tpu.memory_space<vmem>>, vector<1x256xf32>
    %cst_19 = arith.constant dense<0.000000e+00> : vector<256xf32>
    %22 = vector.multi_reduction <add>, %19, %cst_19 [0] : vector<8x256xf32> to vector<256xf32>
    %23 = vector.shape_cast %22 : vector<256xf32> to vector<1x256xf32>
    %cst_20 = arith.constant 8.000000e+00 : f32
    %24 = vector.broadcast %cst_20 : f32 to vector<1x256xf32>
    %25 = arith.divf %23, %24 : vector<1x256xf32>
    %26 = vector.broadcast %25 : vector<1x256xf32> to vector<8x256xf32>
    %27 = arith.subf %19, %26 : vector<8x256xf32>
    %28 = arith.mulf %27, %27 : vector<8x256xf32>
    %cst_21 = arith.constant dense<0.000000e+00> : vector<256xf32>
    %29 = vector.multi_reduction <add>, %28, %cst_21 [0] : vector<8x256xf32> to vector<256xf32>
    %30 = vector.shape_cast %29 : vector<256xf32> to vector<1x256xf32>
    %cst_22 = arith.constant 8.000000e+00 : f32
    %31 = vector.broadcast %cst_22 : f32 to vector<1x256xf32>
    %32 = arith.divf %30, %31 : vector<1x256xf32>
    %33 = vector.broadcast %25 : vector<1x256xf32> to vector<8x256xf32>
    %34 = arith.subf %19, %33 : vector<8x256xf32>
    %35 = vector.broadcast %20 : vector<1x256xf32> to vector<8x256xf32>
    %36 = arith.mulf %35, %34 : vector<8x256xf32>
    %cst_23 = arith.constant 9.99999974E-6 : f32
    %37 = vector.broadcast %cst_23 : f32 to vector<1x256xf32>
    %38 = arith.addf %32, %37 : vector<1x256xf32>
    %39 = math.rsqrt %38 : vector<1x256xf32>
    %40 = vector.broadcast %39 : vector<1x256xf32> to vector<8x256xf32>
    %41 = arith.mulf %36, %40 : vector<8x256xf32>
    %42 = vector.broadcast %21 : vector<1x256xf32> to vector<8x256xf32>
    %43 = arith.addf %41, %42 : vector<8x256xf32>
    %cst_24 = arith.constant 0.000000e+00 : f32
    %44 = vector.broadcast %cst_24 : f32 to vector<8x256xf32>
    %45 = arith.cmpf ogt, %43, %44 : vector<8x256xf32>
    %cst_25 = arith.constant 2.000000e-01 : f32
    %46 = vector.broadcast %cst_25 : f32 to vector<8x256xf32>
    %47 = arith.mulf %46, %43 : vector<8x256xf32>
    %48 = arith.select %45, %43, %47 : vector<8x256xi1>, vector<8x256xf32>
    %49 = arith.truncf %48 : vector<8x256xf32> to vector<8x256xbf16>
    %c0_26 = arith.constant 0 : index
    %c0_27 = arith.constant 0 : index
    %50 = vector.load %arg8[%c0_26, %c0_27] : memref<256x512xbf16, #tpu.memory_space<vmem>>, vector<256x512xbf16>
    %cst_28 = arith.constant dense<0.000000e+00> : vector<8x512xf32>
    %51 = tpu.matmul %49, %50, %cst_28 {dimension_numbers = #tpu.dot_dimension_numbers<[1], [0], [0], [1], [0, 0, 1, 1], [], []>} : vector<8x256xbf16>, vector<256x512xbf16>, vector<8x512xf32> -> vector<8x512xf32>
    %c0_29 = arith.constant 0 : index
    %c0_30 = arith.constant 0 : index
    %52 = vector.load %arg9[%c0_29, %c0_30] : memref<1x512xf32, #tpu.memory_space<vmem>>, vector<1x512xf32>
    %c0_31 = arith.constant 0 : index
    %c0_32 = arith.constant 0 : index
    %53 = vector.load %arg10[%c0_31, %c0_32] : memref<1x512xf32, #tpu.memory_space<vmem>>, vector<1x512xf32>
    %cst_33 = arith.constant dense<0.000000e+00> : vector<512xf32>
    %54 = vector.multi_reduction <add>, %51, %cst_33 [0] : vector<8x512xf32> to vector<512xf32>
    %55 = vector.shape_cast %54 : vector<512xf32> to vector<1x512xf32>
    %cst_34 = arith.constant 8.000000e+00 : f32
    %56 = vector.broadcast %cst_34 : f32 to vector<1x512xf32>
    %57 = arith.divf %55, %56 : vector<1x512xf32>
    %58 = vector.broadcast %57 : vector<1x512xf32> to vector<8x512xf32>
    %59 = arith.subf %51, %58 : vector<8x512xf32>
    %60 = arith.mulf %59, %59 : vector<8x512xf32>
    %cst_35 = arith.constant dense<0.000000e+00> : vector<512xf32>
    %61 = vector.multi_reduction <add>, %60, %cst_35 [0] : vector<8x512xf32> to vector<512xf32>
    %62 = vector.shape_cast %61 : vector<512xf32> to vector<1x512xf32>
    %cst_36 = arith.constant 8.000000e+00 : f32
    %63 = vector.broadcast %cst_36 : f32 to vector<1x512xf32>
    %64 = arith.divf %62, %63 : vector<1x512xf32>
    %65 = vector.broadcast %57 : vector<1x512xf32> to vector<8x512xf32>
    %66 = arith.subf %51, %65 : vector<8x512xf32>
    %67 = vector.broadcast %52 : vector<1x512xf32> to vector<8x512xf32>
    %68 = arith.mulf %67, %66 : vector<8x512xf32>
    %cst_37 = arith.constant 9.99999974E-6 : f32
    %69 = vector.broadcast %cst_37 : f32 to vector<1x512xf32>
    %70 = arith.addf %64, %69 : vector<1x512xf32>
    %71 = math.rsqrt %70 : vector<1x512xf32>
    %72 = vector.broadcast %71 : vector<1x512xf32> to vector<8x512xf32>
    %73 = arith.mulf %68, %72 : vector<8x512xf32>
    %74 = vector.broadcast %53 : vector<1x512xf32> to vector<8x512xf32>
    %75 = arith.addf %73, %74 : vector<8x512xf32>
    %cst_38 = arith.constant 0.000000e+00 : f32
    %76 = vector.broadcast %cst_38 : f32 to vector<8x512xf32>
    %77 = arith.cmpf ogt, %75, %76 : vector<8x512xf32>
    %cst_39 = arith.constant 2.000000e-01 : f32
    %78 = vector.broadcast %cst_39 : f32 to vector<8x512xf32>
    %79 = arith.mulf %78, %75 : vector<8x512xf32>
    %80 = arith.select %77, %75, %79 : vector<8x512xi1>, vector<8x512xf32>
    %81 = arith.truncf %80 : vector<8x512xf32> to vector<8x512xbf16>
    %c0_40 = arith.constant 0 : index
    %c0_41 = arith.constant 0 : index
    %82 = vector.load %arg11[%c0_40, %c0_41] : memref<512x1024xbf16, #tpu.memory_space<vmem>>, vector<512x1024xbf16>
    %cst_42 = arith.constant dense<0.000000e+00> : vector<8x1024xf32>
    %83 = tpu.matmul %81, %82, %cst_42 {dimension_numbers = #tpu.dot_dimension_numbers<[1], [0], [0], [1], [0, 0, 1, 1], [], []>} : vector<8x512xbf16>, vector<512x1024xbf16>, vector<8x1024xf32> -> vector<8x1024xf32>
    %c0_43 = arith.constant 0 : index
    %c0_44 = arith.constant 0 : index
    %84 = vector.load %arg12[%c0_43, %c0_44] : memref<1x1024xf32, #tpu.memory_space<vmem>>, vector<1x1024xf32>
    %c0_45 = arith.constant 0 : index
    %c0_46 = arith.constant 0 : index
    %85 = vector.load %arg13[%c0_45, %c0_46] : memref<1x1024xf32, #tpu.memory_space<vmem>>, vector<1x1024xf32>
    %cst_47 = arith.constant dense<0.000000e+00> : vector<1024xf32>
    %86 = vector.multi_reduction <add>, %83, %cst_47 [0] : vector<8x1024xf32> to vector<1024xf32>
    %87 = vector.shape_cast %86 : vector<1024xf32> to vector<1x1024xf32>
    %cst_48 = arith.constant 8.000000e+00 : f32
    %88 = vector.broadcast %cst_48 : f32 to vector<1x1024xf32>
    %89 = arith.divf %87, %88 : vector<1x1024xf32>
    %90 = vector.broadcast %89 : vector<1x1024xf32> to vector<8x1024xf32>
    %91 = arith.subf %83, %90 : vector<8x1024xf32>
    %92 = arith.mulf %91, %91 : vector<8x1024xf32>
    %cst_49 = arith.constant dense<0.000000e+00> : vector<1024xf32>
    %93 = vector.multi_reduction <add>, %92, %cst_49 [0] : vector<8x1024xf32> to vector<1024xf32>
    %94 = vector.shape_cast %93 : vector<1024xf32> to vector<1x1024xf32>
    %cst_50 = arith.constant 8.000000e+00 : f32
    %95 = vector.broadcast %cst_50 : f32 to vector<1x1024xf32>
    %96 = arith.divf %94, %95 : vector<1x1024xf32>
    %97 = vector.broadcast %89 : vector<1x1024xf32> to vector<8x1024xf32>
    %98 = arith.subf %83, %97 : vector<8x1024xf32>
    %99 = vector.broadcast %84 : vector<1x1024xf32> to vector<8x1024xf32>
    %100 = arith.mulf %99, %98 : vector<8x1024xf32>
    %cst_51 = arith.constant 9.99999974E-6 : f32
    %101 = vector.broadcast %cst_51 : f32 to vector<1x1024xf32>
    %102 = arith.addf %96, %101 : vector<1x1024xf32>
    %103 = math.rsqrt %102 : vector<1x1024xf32>
    %104 = vector.broadcast %103 : vector<1x1024xf32> to vector<8x1024xf32>
    %105 = arith.mulf %100, %104 : vector<8x1024xf32>
    %106 = vector.broadcast %85 : vector<1x1024xf32> to vector<8x1024xf32>
    %107 = arith.addf %105, %106 : vector<8x1024xf32>
    %cst_52 = arith.constant 0.000000e+00 : f32
    %108 = vector.broadcast %cst_52 : f32 to vector<8x1024xf32>
    %109 = arith.cmpf ogt, %107, %108 : vector<8x1024xf32>
    %cst_53 = arith.constant 2.000000e-01 : f32
    %110 = vector.broadcast %cst_53 : f32 to vector<8x1024xf32>
    %111 = arith.mulf %110, %107 : vector<8x1024xf32>
    %112 = arith.select %109, %107, %111 : vector<8x1024xi1>, vector<8x1024xf32>
    %113 = arith.truncf %112 : vector<8x1024xf32> to vector<8x1024xbf16>
    %c0_54 = arith.constant 0 : index
    %c0_55 = arith.constant 0 : index
    %114 = vector.load %arg14[%c0_54, %c0_55] : memref<1024x896xbf16, #tpu.memory_space<vmem>>, vector<1024x896xbf16>
    %cst_56 = arith.constant dense<0.000000e+00> : vector<8x896xf32>
    %115 = tpu.matmul %113, %114, %cst_56 {dimension_numbers = #tpu.dot_dimension_numbers<[1], [0], [0], [1], [0, 0, 1, 1], [], []>} : vector<8x1024xbf16>, vector<1024x896xbf16>, vector<8x896xf32> -> vector<8x896xf32>
    %c0_57 = arith.constant 0 : index
    %c0_58 = arith.constant 0 : index
    %116 = vector.load %arg15[%c0_57, %c0_58] : memref<1x896xf32, #tpu.memory_space<vmem>>, vector<1x896xf32>
    %117 = vector.broadcast %116 : vector<1x896xf32> to vector<8x896xf32>
    %118 = arith.addf %115, %117 : vector<8x896xf32>
    %119 = math.tanh %118 : vector<8x896xf32>
    %c0_59 = arith.constant 0 : index
    %c0_60 = arith.constant 0 : index
    %120 = vector.load %arg16[%c0_59, %c0_60] : memref<8x896xf32, #tpu.memory_space<vmem>>, vector<8x896xf32>
    tpu.vector_store %arg16[%c0_59, %c0_60], %119 {strides = array<i32>} : memref<8x896xf32, #tpu.memory_space<vmem>>, vector<8x896xf32>,
    return
  }
}

</mosaic_0001>

<llo_original>
// kernel: generator_forward.1
$region0: #{generator_forward.1}
  #allocation0 [shape = 'u32[]', space=smem, size = 0x4, offset = 0x4, fixed_abs, tag = 'smem constant byte address 0x4 - core index']
  #allocation1 [shape = 'u32[144,128]{1,0:T(1,128)}', space=vmem, size = 0x12000, scoped, tag = 'internal scratch']
  %s0 = inlined_call_operand.hbm [shape: f32[8,10], index: 0, kind: input, shape index: {}]
  %s1 = inlined_call_operand.hbm [shape: f32[8,100], index: 1, kind: input, shape index: {}]
  %s2 = inlined_call_operand.hbm [shape: bf16[10,128], index: 2, kind: input, shape index: {}]
  %s3 = inlined_call_operand.hbm [shape: bf16[100,128], index: 3, kind: input, shape index: {}]
  %s4 = inlined_call_operand.hbm [shape: f32[1,128], index: 4, kind: input, shape index: {}]
  %s5 = inlined_call_operand.hbm [shape: bf16[128,256], index: 5, kind: input, shape index: {}]
  %s6 = inlined_call_operand.hbm [shape: f32[1,256], index: 6, kind: input, shape index: {}]
  %s7 = inlined_call_operand.hbm [shape: f32[1,256], index: 7, kind: input, shape index: {}]
  %s8 = inlined_call_operand.hbm [shape: bf16[256,512], index: 8, kind: input, shape index: {}]
  %s9 = inlined_call_operand.hbm [shape: f32[1,512], index: 9, kind: input, shape index: {}]
  %s10 = inlined_call_operand.hbm [shape: f32[1,512], index: 10, kind: input, shape index: {}]
  %s11 = inlined_call_operand.hbm [shape: bf16[512,1024], index: 11, kind: input, shape index: {}]
  %s12 = inlined_call_operand.hbm [shape: f32[1,1024], index: 12, kind: input, shape index: {}]
  %s13 = inlined_call_operand.hbm [shape: f32[1,1024], index: 13, kind: input, shape index: {}]
  %s14 = inlined_call_operand.hbm [shape: bf16[1024,896], index: 14, kind: input, shape index: {}]
  %s15 = inlined_call_operand.hbm [shape: f32[1,896], index: 15, kind: input, shape index: {}]
  %s16 = inlined_call_operand.vmem [shape: f32[8,896], index: 16, kind: output, shape index: {}]
  %s17 = sld [smem:[#allocation0]]
  $region138: #{generator_forward.1} parent=0
    _
  %s19 = ssub.s32 1, %s17
  %s20 = scalar_select 0, %s19, %s17
  $region1: #{generator_forward.1} parent=0
    #allocation2 [shape = 'u8[4096]{0}', space=vmem, size = 0x1000, scoped, tag = 'input window, operand 0, single buffered']
    #allocation3 [shape = 's32[1]{0}', space=sflag, size = 0x4, scoped, tag = 'scoped memory for generator_forward.1']
    #allocation4 [shape = 'u8[4096]{0}', space=vmem, size = 0x1000, scoped, tag = 'input window, operand 1, single buffered']
    #allocation5 [shape = 's32[1]{0}', space=sflag, size = 0x4, scoped, tag = 'scoped memory for generator_forward.1']
    #allocation6 [shape = 'u8[4096]{0}', space=vmem, size = 0x1000, scoped, tag = 'input window, operand 2, single buffered']
    #allocation7 [shape = 'u8[26624]{0}', space=vmem, size = 0x6800, scoped, tag = 'input window, operand 3, single buffered']
    #allocation8 [shape = 's32[1]{0}', space=sflag, size = 0x4, scoped, tag = 'scoped memory for generator_forward.1']
    #allocation9 [shape = 'u8[512]{0}', space=vmem, size = 0x400, scoped, tag = 'input window, operand 4, single buffered']
    #allocation10 [shape = 'u8[65536]{0}', space=vmem, size = 0x10000, scoped, tag = 'input window, operand 5, single buffered']
    #allocation11 [shape = 's32[1]{0}', space=sflag, size = 0x4, scoped, tag = 'scoped memory for generator_forward.1']
    #allocation12 [shape = 'u8[1024]{0}', space=vmem, size = 0x400, scoped, tag = 'input window, operand 6, single buffered']
    #allocation13 [shape = 'u8[1024]{0}', space=vmem, size = 0x400, scoped, tag = 'input window, operand 7, single buffered']
    #allocation14 [shape = 's32[1]{0}', space=sflag, size = 0x4, scoped, tag = 'scoped memory for generator_forward.1']
    #allocation15 [shape = 'u8[262144]{0}', space=vmem, size = 0x40000, scoped, tag = 'input window, operand 8, single buffered']
    #allocation16 [shape = 'u8[2048]{0}', space=vmem, size = 0x800, scoped, tag = 'input window, operand 9, single buffered']
    #allocation17 [shape = 's32[1]{0}', space=sflag, size = 0x4, scoped, tag = 'scoped memory for generator_forward.1']
    #allocation18 [shape = 'u8[2048]{0}', space=vmem, size = 0x800, scoped, tag = 'input window, operand 10, single buffered']
    #allocation19 [shape = 'u8[1048576]{0}', space=vmem, size = 0x100000, scoped, tag = 'input window, operand 11, single buffered']
    #allocation20 [shape = 's32[1]{0}', space=sflag, size = 0x4, scoped, tag = 'scoped memory for generator_forward.1']
    #allocation21 [shape = 'u8[4096]{0}', space=vmem, size = 0x1000, scoped, tag = 'input window, operand 12, single buffered']
    #allocation22 [shape = 'u8[4096]{0}', space=vmem, size = 0x1000, scoped, tag = 'input window, operand 13, single buffered']
    #allocation23 [shape = 's32[1]{0}', space=sflag, size = 0x4, scoped, tag = 'scoped memory for generator_forward.1']
    #allocation24 [shape = 'u8[1835008]{0}', space=vmem, size = 0x1c0000, scoped, tag = 'input window, operand 14, single buffered']
    #allocation25 [shape = 'u8[3584]{0}', space=vmem, size = 0x1000, scoped, tag = 'input window, operand 15, single buffered']
    #allocation26 [shape = 's32[1]{0}', space=sflag, size = 0x4, scoped, tag = 'scoped memory for generator_forward.1']
    %21 = vsyncpa [#allocation3], 0
    %22 = vsyncpa [#allocation5], 0
    %23 = vsyncpa [#allocation8], 0
    %24 = vsyncpa [#allocation11], 0
    %25 = vsyncpa [#allocation14], 0
    %26 = vsyncpa [#allocation17], 0
    %27 = vsyncpa [#allocation20], 0
    %28 = vsyncpa [#allocation23], 0
    %29 = vsyncpa [#allocation26], 0
    // Predicated region
    $region2: #{generator_forward.1} parent=1 // pred_check
      _
    $region3: #{generator_forward.1} parent=1 // pred_check_branch
      %31 = sbr.rel (0) target = $region5
    $region4: #{generator_forward.1} parent=1 // pred_region
      %s33 = ssub.s32 128, 128
      %34 = vsyncadd [#allocation3], %s33
      %s36 = sshll.u32 [#allocation2], 4
      %s37 = int_to_ptr.vmem [resolvable:$true] %s36
      %39 = dma.hbm_to_vmem [thread:$0]  %s0, 128, %s37, [#allocation3]
    $region5: #{generator_forward.1} parent=1 // pred_fallthru
      _
    // Predicated region
    $region6: #{generator_forward.1} parent=1 // pred_check
      _
    $region7: #{generator_forward.1} parent=1 // pred_check_branch
      %41 = sbr.rel (0) target = $region9
    $region8: #{generator_forward.1} parent=1 // pred_region
      %s43 = ssub.s32 128, 128
      %44 = vsyncadd [#allocation5], %s43
      %s46 = sshll.u32 [#allocation4], 4
      %s47 = int_to_ptr.vmem [resolvable:$true] %s46
      %49 = dma.hbm_to_vmem [thread:$0]  %s1, 128, %s47, [#allocation5]
    $region9: #{generator_forward.1} parent=1 // pred_fallthru
      _
    // Predicated region
    $region10: #{generator_forward.1} parent=1 // pred_check
      _
    $region11: #{generator_forward.1} parent=1 // pred_check_branch
      %51 = sbr.rel (0) target = $region13
    $region12: #{generator_forward.1} parent=1 // pred_region
      %s53 = ssub.s32 128, 128
      %54 = vsyncadd [#allocation5], %s53
      %s55 = sshll.u32 [#allocation6], 4
      %s56 = int_to_ptr.vmem [resolvable:$true] %s55
      %61 = dma.hbm_to_vmem [thread:$0]  %s2, 128, %s56, [#allocation5], 64, 64, 4
    $region13: #{generator_forward.1} parent=1 // pred_fallthru
      _
    // Predicated region
    $region14: #{generator_forward.1} parent=1 // pred_check
      _
    $region15: #{generator_forward.1} parent=1 // pred_check_branch
      %63 = sbr.rel (0) target = $region17
    $region16: #{generator_forward.1} parent=1 // pred_region
      %s65 = ssub.s32 832, 832
      %66 = vsyncadd [#allocation8], %s65
      %s67 = sshll.u32 [#allocation7], 4
      %s68 = int_to_ptr.vmem [resolvable:$true] %s67
      %73 = dma.hbm_to_vmem [thread:$0]  %s3, 832, %s68, [#allocation8], 64, 64, 4
    $region17: #{generator_forward.1} parent=1 // pred_fallthru
      _
    // Predicated region
    $region18: #{generator_forward.1} parent=1 // pred_check
      _
    $region19: #{generator_forward.1} parent=1 // pred_check_branch
      %75 = sbr.rel (0) target = $region21
    $region20: #{generator_forward.1} parent=1 // pred_region
      %s77 = ssub.s32 16, 16
      %78 = vsyncadd [#allocation8], %s77
      %s80 = sshll.u32 [#allocation9], 4
      %s81 = int_to_ptr.vmem [resolvable:$true] %s80
      %83 = dma.hbm_to_vmem [thread:$0]  %s4, 16, %s81, [#allocation8]
    $region21: #{generator_forward.1} parent=1 // pred_fallthru
      _
    // Predicated region
    $region22: #{generator_forward.1} parent=1 // pred_check
      _
    $region23: #{generator_forward.1} parent=1 // pred_check_branch
      %85 = sbr.rel (0) target = $region25
    $region24: #{generator_forward.1} parent=1 // pred_region
      %s87 = ssub.s32 2048, 2048
      %88 = vsyncadd [#allocation11], %s87
      %s89 = sshll.u32 [#allocation10], 4
      %s90 = int_to_ptr.vmem [resolvable:$true] %s89
      %95 = dma.hbm_to_vmem [thread:$0]  %s5, 2048, %s90, [#allocation11], 128, 128, 8
    $region25: #{generator_forward.1} parent=1 // pred_fallthru
      _
    // Predicated region
    $region26: #{generator_forward.1} parent=1 // pred_check
      _
    $region27: #{generator_forward.1} parent=1 // pred_check_branch
      %97 = sbr.rel (0) target = $region29
    $region28: #{generator_forward.1} parent=1 // pred_region
      %s99 = ssub.s32 32, 32
      %100 = vsyncadd [#allocation11], %s99
      %s102 = sshll.u32 [#allocation12], 4
      %s103 = int_to_ptr.vmem [resolvable:$true] %s102
      %105 = dma.hbm_to_vmem [thread:$0]  %s6, 32, %s103, [#allocation11]
    $region29: #{generator_forward.1} parent=1 // pred_fallthru
      _
    // Predicated region
    $region30: #{generator_forward.1} parent=1 // pred_check
      _
    $region31: #{generator_forward.1} parent=1 // pred_check_branch
      %107 = sbr.rel (0) target = $region33
    $region32: #{generator_forward.1} parent=1 // pred_region
      %s109 = ssub.s32 32, 32
      %110 = vsyncadd [#allocation14], %s109
      %s112 = sshll.u32 [#allocation13], 4
      %s113 = int_to_ptr.vmem [resolvable:$true] %s112
      %115 = dma.hbm_to_vmem [thread:$0]  %s7, 32, %s113, [#allocation14]
    $region33: #{generator_forward.1} parent=1 // pred_fallthru
      _
    // Predicated region
    $region34: #{generator_forward.1} parent=1 // pred_check
      _
    $region35: #{generator_forward.1} parent=1 // pred_check_branch
      %117 = sbr.rel (0) target = $region37
    $region36: #{generator_forward.1} parent=1 // pred_region
      %s119 = ssub.s32 8192, 8192
      %120 = vsyncadd [#allocation14], %s119
      %s121 = sshll.u32 [#allocation15], 4
      %s122 = int_to_ptr.vmem [resolvable:$true] %s121
      %127 = dma.hbm_to_vmem [thread:$0]  %s8, 8192, %s122, [#allocation14], 256, 256, 16
    $region37: #{generator_forward.1} parent=1 // pred_fallthru
      _
    // Predicated region
    $region38: #{generator_forward.1} parent=1 // pred_check
      _
    $region39: #{generator_forward.1} parent=1 // pred_check_branch
      %129 = sbr.rel (0) target = $region41
    $region40: #{generator_forward.1} parent=1 // pred_region
      %s131 = ssub.s32 64, 64
      %132 = vsyncadd [#allocation17], %s131
      %s134 = sshll.u32 [#allocation16], 4
      %s135 = int_to_ptr.vmem [resolvable:$true] %s134
      %137 = dma.hbm_to_vmem [thread:$0]  %s9, 64, %s135, [#allocation17]
    $region41: #{generator_forward.1} parent=1 // pred_fallthru
      _
    // Predicated region
    $region42: #{generator_forward.1} parent=1 // pred_check
      _
    $region43: #{generator_forward.1} parent=1 // pred_check_branch
      %139 = sbr.rel (0) target = $region45
    $region44: #{generator_forward.1} parent=1 // pred_region
      %s141 = ssub.s32 64, 64
      %142 = vsyncadd [#allocation17], %s141
      %s144 = sshll.u32 [#allocation18], 4
      %s145 = int_to_ptr.vmem [resolvable:$true] %s144
      %147 = dma.hbm_to_vmem [thread:$0]  %s10, 64, %s145, [#allocation17]
    $region45: #{generator_forward.1} parent=1 // pred_fallthru
      _
    // Predicated region
    $region46: #{generator_forward.1} parent=1 // pred_check
      _
    $region47: #{generator_forward.1} parent=1 // pred_check_branch
      %149 = sbr.rel (0) target = $region49
    $region48: #{generator_forward.1} parent=1 // pred_region
      %s151 = ssub.s32 32768, 32768
      %152 = vsyncadd [#allocation20], %s151
      %s153 = sshll.u32 [#allocation19], 4
      %s154 = int_to_ptr.vmem [resolvable:$true] %s153
      %159 = dma.hbm_to_vmem [thread:$0]  %s11, 32768, %s154, [#allocation20], 512, 512, 32
    $region49: #{generator_forward.1} parent=1 // pred_fallthru
      _
    // Predicated region
    $region50: #{generator_forward.1} parent=1 // pred_check
      _
    $region51: #{generator_forward.1} parent=1 // pred_check_branch
      %161 = sbr.rel (0) target = $region53
    $region52: #{generator_forward.1} parent=1 // pred_region
      %s163 = ssub.s32 128, 128
      %164 = vsyncadd [#allocation20], %s163
      %s166 = sshll.u32 [#allocation21], 4
      %s167 = int_to_ptr.vmem [resolvable:$true] %s166
      %169 = dma.hbm_to_vmem [thread:$0]  %s12, 128, %s167, [#allocation20]
    $region53: #{generator_forward.1} parent=1 // pred_fallthru
      _
    // Predicated region
    $region54: #{generator_forward.1} parent=1 // pred_check
      _
    $region55: #{generator_forward.1} parent=1 // pred_check_branch
      %171 = sbr.rel (0) target = $region57
    $region56: #{generator_forward.1} parent=1 // pred_region
      %s173 = ssub.s32 128, 128
      %174 = vsyncadd [#allocation23], %s173
      %s176 = sshll.u32 [#allocation22], 4
      %s177 = int_to_ptr.vmem [resolvable:$true] %s176
      %179 = dma.hbm_to_vmem [thread:$0]  %s13, 128, %s177, [#allocation23]
    $region57: #{generator_forward.1} parent=1 // pred_fallthru
      _
    // Predicated region
    $region58: #{generator_forward.1} parent=1 // pred_check
      _
    $region59: #{generator_forward.1} parent=1 // pred_check_branch
      %181 = sbr.rel (0) target = $region61
    $region60: #{generator_forward.1} parent=1 // pred_region
      %s183 = ssub.s32 57344, 57344
      %184 = vsyncadd [#allocation23], %s183
      %s185 = sshll.u32 [#allocation24], 4
      %s186 = int_to_ptr.vmem [resolvable:$true] %s185
      %191 = dma.hbm_to_vmem [thread:$0]  %s14, 57344, %s186, [#allocation23], 448, 448, 28
    $region61: #{generator_forward.1} parent=1 // pred_fallthru
      _
    // Predicated region
    $region62: #{generator_forward.1} parent=1 // pred_check
      _
    $region63: #{generator_forward.1} parent=1 // pred_check_branch
      %193 = sbr.rel (0) target = $region65
    $region64: #{generator_forward.1} parent=1 // pred_region
      %s195 = ssub.s32 112, 112
      %196 = vsyncadd [#allocation26], %s195
      %s198 = sshll.u32 [#allocation25], 4
      %s199 = int_to_ptr.vmem [resolvable:$true] %s198
      %201 = dma.hbm_to_vmem [thread:$0]  %s15, 112, %s199, [#allocation26]
    $region65: #{generator_forward.1} parent=1 // pred_fallthru
      _
    // Predicated region
    $region66: #{generator_forward.1} parent=1 // pred_check
      _
    $region67: #{generator_forward.1} parent=1 // pred_check_branch
      %203 = sbr.rel (0) target = $region69
    $region68: #{generator_forward.1} parent=1 // pred_region
      %204 = dma.done [#allocation3], 128
    $region69: #{generator_forward.1} parent=1 // pred_fallthru
      _
    // Predicated region
    $region70: #{generator_forward.1} parent=1 // pred_check
      _
    $region71: #{generator_forward.1} parent=1 // pred_check_branch
      %206 = sbr.rel (0) target = $region73
    $region72: #{generator_forward.1} parent=1 // pred_region
      %207 = dma.done [#allocation5], 128
    $region73: #{generator_forward.1} parent=1 // pred_fallthru
      _
    // Predicated region
    $region74: #{generator_forward.1} parent=1 // pred_check
      _
    $region75: #{generator_forward.1} parent=1 // pred_check_branch
      %209 = sbr.rel (0) target = $region77
    $region76: #{generator_forward.1} parent=1 // pred_region
      %210 = dma.done [#allocation5], 128
    $region77: #{generator_forward.1} parent=1 // pred_fallthru
      _
    // Predicated region
    $region78: #{generator_forward.1} parent=1 // pred_check
      _
    $region79: #{generator_forward.1} parent=1 // pred_check_branch
      %212 = sbr.rel (0) target = $region81
    $region80: #{generator_forward.1} parent=1 // pred_region
      %213 = dma.done [#allocation8], 832
    $region81: #{generator_forward.1} parent=1 // pred_fallthru
      _
    // Predicated region
    $region82: #{generator_forward.1} parent=1 // pred_check
      _
    $region83: #{generator_forward.1} parent=1 // pred_check_branch
      %215 = sbr.rel (0) target = $region85
    $region84: #{generator_forward.1} parent=1 // pred_region
      %216 = dma.done [#allocation8], 16
    $region85: #{generator_forward.1} parent=1 // pred_fallthru
      _
    // Predicated region
    $region86: #{generator_forward.1} parent=1 // pred_check
      _
    $region87: #{generator_forward.1} parent=1 // pred_check_branch
      %218 = sbr.rel (0) target = $region89
    $region88: #{generator_forward.1} parent=1 // pred_region
      %219 = dma.done [#allocation11], 2048
    $region89: #{generator_forward.1} parent=1 // pred_fallthru
      _
    // Predicated region
    $region90: #{generator_forward.1} parent=1 // pred_check
      _
    $region91: #{generator_forward.1} parent=1 // pred_check_branch
      %221 = sbr.rel (0) target = $region93
    $region92: #{generator_forward.1} parent=1 // pred_region
      %222 = dma.done [#allocation11], 32
    $region93: #{generator_forward.1} parent=1 // pred_fallthru
      _
    // Predicated region
    $region94: #{generator_forward.1} parent=1 // pred_check
      _
    $region95: #{generator_forward.1} parent=1 // pred_check_branch
      %224 = sbr.rel (0) target = $region97
    $region96: #{generator_forward.1} parent=1 // pred_region
      %225 = dma.done [#allocation14], 32
    $region97: #{generator_forward.1} parent=1 // pred_fallthru
      _
    // Predicated region
    $region98: #{generator_forward.1} parent=1 // pred_check
      _
    $region99: #{generator_forward.1} parent=1 // pred_check_branch
      %227 = sbr.rel (0) target = $region101
    $region100: #{generator_forward.1} parent=1 // pred_region
      %228 = dma.done [#allocation14], 8192
    $region101: #{generator_forward.1} parent=1 // pred_fallthru
      _
    // Predicated region
    $region102: #{generator_forward.1} parent=1 // pred_check
      _
    $region103: #{generator_forward.1} parent=1 // pred_check_branch
      %230 = sbr.rel (0) target = $region105
    $region104: #{generator_forward.1} parent=1 // pred_region
      %231 = dma.done [#allocation17], 64
    $region105: #{generator_forward.1} parent=1 // pred_fallthru
      _
    // Predicated region
    $region106: #{generator_forward.1} parent=1 // pred_check
      _
    $region107: #{generator_forward.1} parent=1 // pred_check_branch
      %233 = sbr.rel (0) target = $region109
    $region108: #{generator_forward.1} parent=1 // pred_region
      %234 = dma.done [#allocation17], 64
    $region109: #{generator_forward.1} parent=1 // pred_fallthru
      _
    // Predicated region
    $region110: #{generator_forward.1} parent=1 // pred_check
      _
    $region111: #{generator_forward.1} parent=1 // pred_check_branch
      %236 = sbr.rel (0) target = $region113
    $region112: #{generator_forward.1} parent=1 // pred_region
      %237 = dma.done [#allocation20], 32768
    $region113: #{generator_forward.1} parent=1 // pred_fallthru
      _
    // Predicated region
    $region114: #{generator_forward.1} parent=1 // pred_check
      _
    $region115: #{generator_forward.1} parent=1 // pred_check_branch
      %239 = sbr.rel (0) target = $region117
    $region116: #{generator_forward.1} parent=1 // pred_region
      %240 = dma.done [#allocation20], 128
    $region117: #{generator_forward.1} parent=1 // pred_fallthru
      _
    // Predicated region
    $region118: #{generator_forward.1} parent=1 // pred_check
      _
    $region119: #{generator_forward.1} parent=1 // pred_check_branch
      %242 = sbr.rel (0) target = $region121
    $region120: #{generator_forward.1} parent=1 // pred_region
      %243 = dma.done [#allocation23], 128
    $region121: #{generator_forward.1} parent=1 // pred_fallthru
      _
    // Predicated region
    $region122: #{generator_forward.1} parent=1 // pred_check
      _
    $region123: #{generator_forward.1} parent=1 // pred_check_branch
      %245 = sbr.rel (0) target = $region125
    $region124: #{generator_forward.1} parent=1 // pred_region
      %246 = dma.done [#allocation23], 57344
    $region125: #{generator_forward.1} parent=1 // pred_fallthru
      _
    // Predicated region
    $region126: #{generator_forward.1} parent=1 // pred_check
      _
    $region127: #{generator_forward.1} parent=1 // pred_check_branch
      %248 = sbr.rel (0) target = $region129
    $region128: #{generator_forward.1} parent=1 // pred_region
      %249 = dma.done [#allocation26], 112
    $region129: #{generator_forward.1} parent=1 // pred_fallthru
      _
    %v251 = vld [vmem:[#allocation2] sm:$0xff]
    %v252 = vpack.c.bf16 %v251, %v251
    %v253 = vld [vmem:[#allocation6] sm:$0xf]
    %v254 = vld [vmem:[#allocation6 + $0x4] sm:$0x1]
    %v255 = vld [vmem:[#allocation4] sm:$0xff]
    %v256 = vpack.c.bf16 %v255, %v255
    %v257 = vld [vmem:[#allocation7] sm:$0xf]
    %v258 = vld [vmem:[#allocation7 + $0x4] sm:$0xf]
    %v259 = vld [vmem:[#allocation7 + $0x8] sm:$0xf]
    %v260 = vld [vmem:[#allocation7 + $0xc] sm:$0xf]
    %v261 = vld [vmem:[#allocation7 + $0x10] sm:$0xf]
    %v262 = vld [vmem:[#allocation7 + $0x14] sm:$0xf]
    %v263 = vld [vmem:[#allocation7 + $0x18] sm:$0xf]
    %v264 = vld [vmem:[#allocation7 + $0x1c] sm:$0xf]
    %v265 = vld [vmem:[#allocation7 + $0x20] sm:$0xf]
    %v266 = vld [vmem:[#allocation7 + $0x24] sm:$0xf]
    %v267 = vld [vmem:[#allocation7 + $0x28] sm:$0xf]
    %v268 = vld [vmem:[#allocation7 + $0x2c] sm:$0xf]
    %v269 = vld [vmem:[#allocation7 + $0x30] sm:$0x3]
    %v283 = vunpack.c.l.b16 %v257
    %v284 = vunpack.c.l.b16 %v258
    %v285 = vunpack.c.l.b16 %v259
    %v286 = vunpack.c.l.b16 %v260
    %v287 = vunpack.c.l.b16 %v261
    %v288 = vunpack.c.l.b16 %v262
    %v289 = vunpack.c.l.b16 %v263
    %v290 = vunpack.c.l.b16 %v264
    %v291 = vunpack.c.l.b16 %v265
    %v292 = vunpack.c.l.b16 %v266
    %v293 = vunpack.c.l.b16 %v267
    %v294 = vunpack.c.l.b16 %v268
    %v295 = vunpack.c.l.b16 %v269
    %v296 = vpack.c.b16 %v284, %v283
    %v297 = vpack.c.b16 %v286, %v285
    %v298 = vpack.c.b16 %v288, %v287
    %v299 = vpack.c.b16 %v290, %v289
    %v300 = vpack.c.b16 %v292, %v291
    %v301 = vpack.c.b16 %v294, %v293
    %v302 = vpack.c.b16 %v295, %v295
    %vm309 = vcmask 818176
    %v311 = vsel %vm309, %v256, 0
    %vm313 = vcmask 1041408
    %v315 = vsel %vm313, %v302, 0
    %317 = vmatprep.subr.bf16.mxu0 0
    %318 = vmatpush1.bf16.msra.mxu0 %v296
    %319 = vmatprep.subr.bf16.mxu0 0
    %320 = vmatpush1.bf16.msra.mxu0 %v297
    %321 = vmatprep.subr.bf16.mxu0 0
    %322 = vmatpush1.bf16.msra.mxu0 %v298
    %323 = vmatprep.subr.bf16.mxu0 0
    %324 = vmatpush1.bf16.msra.mxu0 %v299
    %325 = vmatprep.subr.bf16.mxu0 0
    %326 = vmatpush1.bf16.msra.mxu0 %v300
    %327 = vmatprep.subr.bf16.mxu0 0
    %328 = vmatpush1.bf16.msra.mxu0 %v301
    %329 = vmatprep.subr.bf16.mxu0 0
    %330 = vmatpush1.bf16.msra.mxu0 %v315
    %331 = vmatprep.subr.bf16.mxu0 0
    %332 = vmatpush1.bf16.msra.mxu0 0
    %333 = vmatprep.subr.bf16.mxu0 0
    %334 = vmatpush1.bf16.msra.mxu0 0
    %335 = vmatprep.subr.bf16.mxu0 0
    %336 = vmatpush1.bf16.msra.mxu0 0
    %337 = vmatprep.subr.bf16.mxu0 0
    %338 = vmatpush1.bf16.msra.mxu0 0
    %339 = vmatprep.subr.bf16.mxu0 0
    %340 = vmatpush1.bf16.msra.mxu0 0
    %341 = vmatprep.subr.bf16.mxu0 0
    %342 = vmatpush1.bf16.msra.mxu0 0
    %343 = vmatprep.subr.bf16.mxu0 0
    %344 = vmatpush1.bf16.msra.mxu0 0
    %345 = vmatprep.subr.bf16.mxu0 0
    %346 = vmatpush1.bf16.msra.mxu0 0
    %347 = vmatprep.subr.bf16.mxu0 0
    %348 = vmatpush1.bf16.msra.mxu0 0
    %349 = vmatprep.mubr.bf16.mxu0 0
    %350 = vmatmul.mubr.bf16.gmra.mrb[0].mxu0 %v311
    %v351 = vpop.f32.mrb[0].mxu0
    %v352 = vadd.f32 0.0, %v351
    %v353 = vpop.f32.mrb[0].mxu0
    %v354 = vpop.f32.mrb[0].mxu0
    %v355 = vpop.f32.mrb[0].mxu0
    %356 = vdwg.mxu0
    %v359 = vunpack.c.l.b16 %v253
    %v360 = vunpack.c.l.b16 %v254
    %v361 = vpack.c.b16 %v360, %v359
    %vm362 = vcmask 80896
    %v364 = vsel %vm362, %v252, 0
    %vm366 = vcmask 1044480
    %v368 = vsel %vm366, %v361, 0
    %370 = vmatprep.subr.bf16.mxu0 0
    %371 = vmatpush1.bf16.msra.mxu0 %v368
    %372 = vmatprep.subr.bf16.mxu0 0
    %373 = vmatpush1.bf16.msra.mxu0 0
    %374 = vmatprep.subr.bf16.mxu0 0
    %375 = vmatpush1.bf16.msra.mxu0 0
    %376 = vmatprep.subr.bf16.mxu0 0
    %377 = vmatpush1.bf16.msra.mxu0 0
    %378 = vmatprep.subr.bf16.mxu0 0
    %379 = vmatpush1.bf16.msra.mxu0 0
    %380 = vmatprep.subr.bf16.mxu0 0
    %381 = vmatpush1.bf16.msra.mxu0 0
    %382 = vmatprep.subr.bf16.mxu0 0
    %383 = vmatpush1.bf16.msra.mxu0 0
    %384 = vmatprep.subr.bf16.mxu0 0
    %385 = vmatpush1.bf16.msra.mxu0 0
    %386 = vmatprep.subr.bf16.mxu0 0
    %387 = vmatpush1.bf16.msra.mxu0 0
    %388 = vmatprep.subr.bf16.mxu0 0
    %389 = vmatpush1.bf16.msra.mxu0 0
    %390 = vmatprep.subr.bf16.mxu0 0
    %391 = vmatpush1.bf16.msra.mxu0 0
    %392 = vmatprep.subr.bf16.mxu0 0
    %393 = vmatpush1.bf16.msra.mxu0 0
    %394 = vmatprep.subr.bf16.mxu0 0
    %395 = vmatpush1.bf16.msra.mxu0 0
    %396 = vmatprep.subr.bf16.mxu0 0
    %397 = vmatpush1.bf16.msra.mxu0 0
    %398 = vmatprep.subr.bf16.mxu0 0
    %399 = vmatpush1.bf16.msra.mxu0 0
    %400 = vmatprep.subr.bf16.mxu0 0
    %401 = vmatpush1.bf16.msra.mxu0 0
    %402 = vmatprep.mubr.bf16.mxu0 0
    %403 = vmatmul.mubr.bf16.gmra.mrb[0].mxu0 %v364
    %v404 = vpop.f32.mrb[0].mxu0
    %v405 = vadd.f32 %v352, %v404
    %v406 = vpop.f32.mrb[0].mxu0
    %v407 = vpop.f32.mrb[0].mxu0
    %v408 = vpop.f32.mrb[0].mxu0
    %409 = vdwg.mxu0
    %v410 = vld [vmem:[#allocation9] sm:$0x1]
    %v412 = vlaneseq
    %v413 = vshrl.u32 %v412, 7
    %v414 = vsub.s32 0, %v413
    %v415 = vrot.slane %v410, %v414
    %v417 = vadd.f32 %v405, %v415
    %vm418 = vcmp.gt.f32.partialorder %v417, 0.0
    %v419 = vmul.f32 %v417, 0.2
    %v420 = vsel %vm418, %v417, %v419
    %v421 = vpack.c.bf16 %v420, %v420
    %v422 = vld [vmem:[#allocation10] sm:$0xff]
    %v423 = vld [vmem:[#allocation10 + $0x8] sm:$0xff]
    %v424 = vld [vmem:[#allocation10 + $0x10] sm:$0xff]
    %v425 = vld [vmem:[#allocation10 + $0x18] sm:$0xff]
    %v426 = vld [vmem:[#allocation10 + $0x20] sm:$0xff]
    %v427 = vld [vmem:[#allocation10 + $0x28] sm:$0xff]
    %v428 = vld [vmem:[#allocation10 + $0x30] sm:$0xff]
    %v429 = vld [vmem:[#allocation10 + $0x38] sm:$0xff]
    %v430 = vld [vmem:[#allocation10 + $0x40] sm:$0xff]
    %v431 = vld [vmem:[#allocation10 + $0x48] sm:$0xff]
    %v432 = vld [vmem:[#allocation10 + $0x50] sm:$0xff]
    %v433 = vld [vmem:[#allocation10 + $0x58] sm:$0xff]
    %v434 = vld [vmem:[#allocation10 + $0x60] sm:$0xff]
    %v435 = vld [vmem:[#allocation10 + $0x68] sm:$0xff]
    %v436 = vld [vmem:[#allocation10 + $0x70] sm:$0xff]
    %v437 = vld [vmem:[#allocation10 + $0x78] sm:$0xff]
    %v454 = vunpack.c.l.b16 %v422
    %v455 = vunpack.c.h.b16 %v422
    %v456 = vunpack.c.l.b16 %v423
    %v457 = vunpack.c.h.b16 %v423
    %v458 = vunpack.c.l.b16 %v424
    %v459 = vunpack.c.h.b16 %v424
    %v460 = vunpack.c.l.b16 %v425
    %v461 = vunpack.c.h.b16 %v425
    %v462 = vunpack.c.l.b16 %v426
    %v463 = vunpack.c.h.b16 %v426
    %v464 = vunpack.c.l.b16 %v427
    %v465 = vunpack.c.h.b16 %v427
    %v466 = vunpack.c.l.b16 %v428
    %v467 = vunpack.c.h.b16 %v428
    %v468 = vunpack.c.l.b16 %v429
    %v469 = vunpack.c.h.b16 %v429
    %v470 = vunpack.c.l.b16 %v430
    %v471 = vunpack.c.h.b16 %v430
    %v472 = vunpack.c.l.b16 %v431
    %v473 = vunpack.c.h.b16 %v431
    %v474 = vunpack.c.l.b16 %v432
    %v475 = vunpack.c.h.b16 %v432
    %v476 = vunpack.c.l.b16 %v433
    %v477 = vunpack.c.h.b16 %v433
    %v478 = vunpack.c.l.b16 %v434
    %v479 = vunpack.c.h.b16 %v434
    %v480 = vunpack.c.l.b16 %v435
    %v481 = vunpack.c.h.b16 %v435
    %v482 = vunpack.c.l.b16 %v436
    %v483 = vunpack.c.h.b16 %v436
    %v484 = vunpack.c.l.b16 %v437
    %v485 = vunpack.c.h.b16 %v437
    %v486 = vpack.c.b16 %v456, %v454
    %v487 = vpack.c.b16 %v457, %v455
    %v488 = vpack.c.b16 %v460, %v458
    %v489 = vpack.c.b16 %v461, %v459
    %v490 = vpack.c.b16 %v464, %v462
    %v491 = vpack.c.b16 %v465, %v463
    %v492 = vpack.c.b16 %v468, %v466
    %v493 = vpack.c.b16 %v469, %v467
    %v494 = vpack.c.b16 %v472, %v470
    %v495 = vpack.c.b16 %v473, %v471
    %v496 = vpack.c.b16 %v476, %v474
    %v497 = vpack.c.b16 %v477, %v475
    %v498 = vpack.c.b16 %v480, %v478
    %v499 = vpack.c.b16 %v481, %v479
    %v500 = vpack.c.b16 %v484, %v482
    %v501 = vpack.c.b16 %v485, %v483
    %518 = vmatprep.subr.bf16.mxu0 %v487
    %519 = vmatpush1.bf16.msra.mxu0 %v486
    %520 = vmatprep.subr.bf16.mxu0 %v489
    %521 = vmatpush1.bf16.msra.mxu0 %v488
    %522 = vmatprep.subr.bf16.mxu0 %v491
    %523 = vmatpush1.bf16.msra.mxu0 %v490
    %524 = vmatprep.subr.bf16.mxu0 %v493
    %525 = vmatpush1.bf16.msra.mxu0 %v492
    %526 = vmatprep.subr.bf16.mxu0 %v495
    %527 = vmatpush1.bf16.msra.mxu0 %v494
    %528 = vmatprep.subr.bf16.mxu0 %v497
    %529 = vmatpush1.bf16.msra.mxu0 %v496
    %530 = vmatprep.subr.bf16.mxu0 %v499
    %531 = vmatpush1.bf16.msra.mxu0 %v498
    %532 = vmatprep.subr.bf16.mxu0 %v501
    %533 = vmatpush1.bf16.msra.mxu0 %v500
    %534 = vmatprep.subr.bf16.mxu0 0
    %535 = vmatpush1.bf16.msra.mxu0 0
    %536 = vmatprep.subr.bf16.mxu0 0
    %537 = vmatpush1.bf16.msra.mxu0 0
    %538 = vmatprep.subr.bf16.mxu0 0
    %539 = vmatpush1.bf16.msra.mxu0 0
    %540 = vmatprep.subr.bf16.mxu0 0
    %541 = vmatpush1.bf16.msra.mxu0 0
    %542 = vmatprep.subr.bf16.mxu0 0
    %543 = vmatpush1.bf16.msra.mxu0 0
    %544 = vmatprep.subr.bf16.mxu0 0
    %545 = vmatpush1.bf16.msra.mxu0 0
    %546 = vmatprep.subr.bf16.mxu0 0
    %547 = vmatpush1.bf16.msra.mxu0 0
    %548 = vmatprep.subr.bf16.mxu0 0
    %549 = vmatpush1.bf16.msra.mxu0 0
    %550 = vmatprep.mubr.bf16.mxu0 0
    %551 = vmatmul.mubr.bf16.gmra.mrb[0].mxu0 %v421
    %v552 = vpop.f32.mrb[0].mxu0
    %v553 = vadd.f32 0.0, %v552
    %v554 = vpop.f32.mrb[0].mxu0
    %v555 = vadd.f32 0.0, %v554
    %v556 = vpop.f32.mrb[0].mxu0
    %v557 = vpop.f32.mrb[0].mxu0
    %558 = vdwg.mxu0
    %v559 = vld [vmem:[#allocation12] sm:$0x3]
    %v560 = vld [vmem:[#allocation13] sm:$0x3]
    %v561 = vrot.slane %v553, 4
    %v562 = vadd.f32 %v553, %v561
    %v563 = vrot.slane %v562, 2
    %v564 = vadd.f32 %v562, %v563
    %v565 = vrot.slane %v564, 1
    %v566 = vadd.f32 %v564, %v565
    %v567 = vrot.slane %v555, 4
    %v568 = vadd.f32 %v555, %v567
    %v569 = vrot.slane %v568, 2
    %v570 = vadd.f32 %v568, %v569
    %v571 = vrot.slane %v570, 1
    %v572 = vadd.f32 %v570, %v571
    %v573 = vrcp.pop 8.0
    %v574 = vmul.f32 %v566, %v573
    %v575 = vmul.f32 %v572, %v573
    %v576 = vsub.f32 %v553, %v574
    %v577 = vsub.f32 %v555, %v575
    %v578 = vmul.f32 %v576, %v576
    %v579 = vmul.f32 %v577, %v577
    %v580 = vrot.slane %v578, 4
    %v581 = vadd.f32 %v578, %v580
    %v582 = vrot.slane %v581, 2
    %v583 = vadd.f32 %v581, %v582
    %v584 = vrot.slane %v583, 1
    %v585 = vadd.f32 %v583, %v584
    %v586 = vrot.slane %v579, 4
    %v587 = vadd.f32 %v579, %v586
    %v588 = vrot.slane %v587, 2
    %v589 = vadd.f32 %v587, %v588
    %v590 = vrot.slane %v589, 1
    %v591 = vadd.f32 %v589, %v590
    %v592 = vmul.f32 %v585, %v573
    %v593 = vmul.f32 %v591, %v573
    %v595 = vlaneseq
    %v596 = vshrl.u32 %v595, 7
    %v597 = vsub.s32 0, %v596
    %v598 = vrot.slane %v559, %v597
    %v599 = vlaneseq
    %v600 = vshrl.u32 %v599, 7
    %v601 = vsub.s32 1, %v600
    %v602 = vrot.slane %v559, %v601
    %v605 = vmul.f32 %v598, %v576
    %v606 = vmul.f32 %v602, %v577
    %v607 = vadd.f32 %v592, 1e-05
    %v608 = vadd.f32 %v593, 1e-05
    %v609 = vrsqrt.pop %v607
    %v610 = vrsqrt.pop %v608
    %v611 = vmul.f32 %v605, %v609
    %v612 = vmul.f32 %v606, %v610
    %v614 = vlaneseq
    %v615 = vshrl.u32 %v614, 7
    %v616 = vsub.s32 0, %v615
    %v617 = vrot.slane %v560, %v616
    %v618 = vlaneseq
    %v619 = vshrl.u32 %v618, 7
    %v620 = vsub.s32 1, %v619
    %v621 = vrot.slane %v560, %v620
    %v624 = vadd.f32 %v611, %v617
    %v625 = vadd.f32 %v612, %v621
    %vm626 = vcmp.gt.f32.partialorder %v624, 0.0
    %vm627 = vcmp.gt.f32.partialorder %v625, 0.0
    %v628 = vmul.f32 %v624, 0.2
    %v629 = vmul.f32 %v625, 0.2
    %v630 = vsel %vm626, %v624, %v628
    %v631 = vsel %vm627, %v625, %v629
    %v632 = vpack.c.bf16 %v630, %v630
    %v633 = vpack.c.bf16 %v631, %v631
    %v634 = vld [vmem:[#allocation15] sm:$0xff]
    %v635 = vld [vmem:[#allocation15 + $0x8] sm:$0xff]
    %v636 = vld [vmem:[#allocation15 + $0x10] sm:$0xff]
    %v637 = vld [vmem:[#allocation15 + $0x18] sm:$0xff]
    %v638 = vld [vmem:[#allocation15 + $0x20] sm:$0xff]
    %v639 = vld [vmem:[#allocation15 + $0x28] sm:$0xff]
    %v640 = vld [vmem:[#allocation15 + $0x30] sm:$0xff]
    %v641 = vld [vmem:[#allocation15 + $0x38] sm:$0xff]
    %v642 = vld [vmem:[#allocation15 + $0x40] sm:$0xff]
    %v643 = vld [vmem:[#allocation15 + $0x48] sm:$0xff]
    %v644 = vld [vmem:[#allocation15 + $0x50] sm:$0xff]
    %v645 = vld [vmem:[#allocation15 + $0x58] sm:$0xff]
    %v646 = vld [vmem:[#allocation15 + $0x60] sm:$0xff]
    %v647 = vld [vmem:[#allocation15 + $0x68] sm:$0xff]
    %v648 = vld [vmem:[#allocation15 + $0x70] sm:$0xff]
    %v649 = vld [vmem:[#allocation15 + $0x78] sm:$0xff]
    %v650 = vld [vmem:[#allocation15 + $0x80] sm:$0xff]
    %v651 = vld [vmem:[#allocation15 + $0x88] sm:$0xff]
    %v652 = vld [vmem:[#allocation15 + $0x90] sm:$0xff]
    %v653 = vld [vmem:[#allocation15 + $0x98] sm:$0xff]
    %v654 = vld [vmem:[#allocation15 + $0xa0] sm:$0xff]
    %v655 = vld [vmem:[#allocation15 + $0xa8] sm:$0xff]
    %v656 = vld [vmem:[#allocation15 + $0xb0] sm:$0xff]
    %v657 = vld [vmem:[#allocation15 + $0xb8] sm:$0xff]
    %v658 = vld [vmem:[#allocation15 + $0xc0] sm:$0xff]
    %v659 = vld [vmem:[#allocation15 + $0xc8] sm:$0xff]
    %v660 = vld [vmem:[#allocation15 + $0xd0] sm:$0xff]
    %v661 = vld [vmem:[#allocation15 + $0xd8] sm:$0xff]
    %v662 = vld [vmem:[#allocation15 + $0xe0] sm:$0xff]
    %v663 = vld [vmem:[#allocation15 + $0xe8] sm:$0xff]
    %v664 = vld [vmem:[#allocation15 + $0xf0] sm:$0xff]
    %v665 = vld [vmem:[#allocation15 + $0xf8] sm:$0xff]
    %v666 = vld [vmem:[#allocation15 + $0x100] sm:$0xff]
    %v667 = vld [vmem:[#allocation15 + $0x108] sm:$0xff]
    %v668 = vld [vmem:[#allocation15 + $0x110] sm:$0xff]
    %v669 = vld [vmem:[#allocation15 + $0x118] sm:$0xff]
    %v670 = vld [vmem:[#allocation15 + $0x120] sm:$0xff]
    %v671 = vld [vmem:[#allocation15 + $0x128] sm:$0xff]
    %v672 = vld [vmem:[#allocation15 + $0x130] sm:$0xff]
    %v673 = vld [vmem:[#allocation15 + $0x138] sm:$0xff]
    %v674 = vld [vmem:[#allocation15 + $0x140] sm:$0xff]
    %v675 = vld [vmem:[#allocation15 + $0x148] sm:$0xff]
    %v676 = vld [vmem:[#allocation15 + $0x150] sm:$0xff]
    %v677 = vld [vmem:[#allocation15 + $0x158] sm:$0xff]
    %v678 = vld [vmem:[#allocation15 + $0x160] sm:$0xff]
    %v679 = vld [vmem:[#allocation15 + $0x168] sm:$0xff]
    %v680 = vld [vmem:[#allocation15 + $0x170] sm:$0xff]
    %v681 = vld [vmem:[#allocation15 + $0x178] sm:$0xff]
    %v682 = vld [vmem:[#allocation15 + $0x180] sm:$0xff]
    %v683 = vld [vmem:[#allocation15 + $0x188] sm:$0xff]
    %v684 = vld [vmem:[#allocation15 + $0x190] sm:$0xff]
    %v685 = vld [vmem:[#allocation15 + $0x198] sm:$0xff]
    %v686 = vld [vmem:[#allocation15 + $0x1a0] sm:$0xff]
    %v687 = vld [vmem:[#allocation15 + $0x1a8] sm:$0xff]
    %v688 = vld [vmem:[#allocation15 + $0x1b0] sm:$0xff]
    %v689 = vld [vmem:[#allocation15 + $0x1b8] sm:$0xff]
    %v690 = vld [vmem:[#allocation15 + $0x1c0] sm:$0xff]
    %v691 = vld [vmem:[#allocation15 + $0x1c8] sm:$0xff]
    %v692 = vld [vmem:[#allocation15 + $0x1d0] sm:$0xff]
    %v693 = vld [vmem:[#allocation15 + $0x1d8] sm:$0xff]
    %v694 = vld [vmem:[#allocation15 + $0x1e0] sm:$0xff]
    %v695 = vld [vmem:[#allocation15 + $0x1e8] sm:$0xff]
    %v696 = vld [vmem:[#allocation15 + $0x1f0] sm:$0xff]
    %v697 = vld [vmem:[#allocation15 + $0x1f8] sm:$0xff]
    %v762 = vunpack.c.l.b16 %v634
    %v763 = vunpack.c.h.b16 %v634
    %v764 = vunpack.c.l.b16 %v635
    %v765 = vunpack.c.h.b16 %v635
    %v766 = vunpack.c.l.b16 %v636
    %v767 = vunpack.c.h.b16 %v636
    %v768 = vunpack.c.l.b16 %v637
    %v769 = vunpack.c.h.b16 %v637
    %v770 = vunpack.c.l.b16 %v638
    %v771 = vunpack.c.h.b16 %v638
    %v772 = vunpack.c.l.b16 %v639
    %v773 = vunpack.c.h.b16 %v639
    %v774 = vunpack.c.l.b16 %v640
    %v775 = vunpack.c.h.b16 %v640
    %v776 = vunpack.c.l.b16 %v641
    %v777 = vunpack.c.h.b16 %v641
    %v778 = vunpack.c.l.b16 %v642
    %v779 = vunpack.c.h.b16 %v642
    %v780 = vunpack.c.l.b16 %v643
    %v781 = vunpack.c.h.b16 %v643
    %v782 = vunpack.c.l.b16 %v644
    %v783 = vunpack.c.h.b16 %v644
    %v784 = vunpack.c.l.b16 %v645
    %v785 = vunpack.c.h.b16 %v645
    %v786 = vunpack.c.l.b16 %v646
    %v787 = vunpack.c.h.b16 %v646
    %v788 = vunpack.c.l.b16 %v647
    %v789 = vunpack.c.h.b16 %v647
    %v790 = vunpack.c.l.b16 %v648
    %v791 = vunpack.c.h.b16 %v648
    %v792 = vunpack.c.l.b16 %v649
    %v793 = vunpack.c.h.b16 %v649
    %v794 = vunpack.c.l.b16 %v650
    %v795 = vunpack.c.h.b16 %v650
    %v796 = vunpack.c.l.b16 %v651
    %v797 = vunpack.c.h.b16 %v651
    %v798 = vunpack.c.l.b16 %v652
    %v799 = vunpack.c.h.b16 %v652
    %v800 = vunpack.c.l.b16 %v653
    %v801 = vunpack.c.h.b16 %v653
    %v802 = vunpack.c.l.b16 %v654
    %v803 = vunpack.c.h.b16 %v654
    %v804 = vunpack.c.l.b16 %v655
    %v805 = vunpack.c.h.b16 %v655
    %v806 = vunpack.c.l.b16 %v656
    %v807 = vunpack.c.h.b16 %v656
    %v808 = vunpack.c.l.b16 %v657
    %v809 = vunpack.c.h.b16 %v657
    %v810 = vunpack.c.l.b16 %v658
    %v811 = vunpack.c.h.b16 %v658
    %v812 = vunpack.c.l.b16 %v659
    %v813 = vunpack.c.h.b16 %v659
    %v814 = vunpack.c.l.b16 %v660
    %v815 = vunpack.c.h.b16 %v660
    %v816 = vunpack.c.l.b16 %v661
    %v817 = vunpack.c.h.b16 %v661
    %v818 = vunpack.c.l.b16 %v662
    %v819 = vunpack.c.h.b16 %v662
    %v820 = vunpack.c.l.b16 %v663
    %v821 = vunpack.c.h.b16 %v663
    %v822 = vunpack.c.l.b16 %v664
    %v823 = vunpack.c.h.b16 %v664
    %v824 = vunpack.c.l.b16 %v665
    %v825 = vunpack.c.h.b16 %v665
    %v826 = vunpack.c.l.b16 %v666
    %v827 = vunpack.c.h.b16 %v666
    %v828 = vunpack.c.l.b16 %v667
    %v829 = vunpack.c.h.b16 %v667
    %v830 = vunpack.c.l.b16 %v668
    %v831 = vunpack.c.h.b16 %v668
    %v832 = vunpack.c.l.b16 %v669
    %v833 = vunpack.c.h.b16 %v669
    %v834 = vunpack.c.l.b16 %v670
    %v835 = vunpack.c.h.b16 %v670
    %v836 = vunpack.c.l.b16 %v671
    %v837 = vunpack.c.h.b16 %v671
    %v838 = vunpack.c.l.b16 %v672
    %v839 = vunpack.c.h.b16 %v672
    %v840 = vunpack.c.l.b16 %v673
    %v841 = vunpack.c.h.b16 %v673
    %v842 = vunpack.c.l.b16 %v674
    %v843 = vunpack.c.h.b16 %v674
    %v844 = vunpack.c.l.b16 %v675
    %v845 = vunpack.c.h.b16 %v675
    %v846 = vunpack.c.l.b16 %v676
    %v847 = vunpack.c.h.b16 %v676
    %v848 = vunpack.c.l.b16 %v677
    %v849 = vunpack.c.h.b16 %v677
    %v850 = vunpack.c.l.b16 %v678
    %v851 = vunpack.c.h.b16 %v678
    %v852 = vunpack.c.l.b16 %v679
    %v853 = vunpack.c.h.b16 %v679
    %v854 = vunpack.c.l.b16 %v680
    %v855 = vunpack.c.h.b16 %v680
    %v856 = vunpack.c.l.b16 %v681
    %v857 = vunpack.c.h.b16 %v681
    %v858 = vunpack.c.l.b16 %v682
    %v859 = vunpack.c.h.b16 %v682
    %v860 = vunpack.c.l.b16 %v683
    %v861 = vunpack.c.h.b16 %v683
    %v862 = vunpack.c.l.b16 %v684
    %v863 = vunpack.c.h.b16 %v684
    %v864 = vunpack.c.l.b16 %v685
    %v865 = vunpack.c.h.b16 %v685
    %v866 = vunpack.c.l.b16 %v686
    %v867 = vunpack.c.h.b16 %v686
    %v868 = vunpack.c.l.b16 %v687
    %v869 = vunpack.c.h.b16 %v687
    %v870 = vunpack.c.l.b16 %v688
    %v871 = vunpack.c.h.b16 %v688
    %v872 = vunpack.c.l.b16 %v689
    %v873 = vunpack.c.h.b16 %v689
    %v874 = vunpack.c.l.b16 %v690
    %v875 = vunpack.c.h.b16 %v690
    %v876 = vunpack.c.l.b16 %v691
    %v877 = vunpack.c.h.b16 %v691
    %v878 = vunpack.c.l.b16 %v692
    %v879 = vunpack.c.h.b16 %v692
    %v880 = vunpack.c.l.b16 %v693
    %v881 = vunpack.c.h.b16 %v693
    %v882 = vunpack.c.l.b16 %v694
    %v883 = vunpack.c.h.b16 %v694
    %v884 = vunpack.c.l.b16 %v695
    %v885 = vunpack.c.h.b16 %v695
    %v886 = vunpack.c.l.b16 %v696
    %v887 = vunpack.c.h.b16 %v696
    %v888 = vunpack.c.l.b16 %v697
    %v889 = vunpack.c.h.b16 %v697
    %v890 = vpack.c.b16 %v766, %v762
    %v891 = vpack.c.b16 %v767, %v763
    %v892 = vpack.c.b16 %v768, %v764
    %v893 = vpack.c.b16 %v769, %v765
    %v894 = vpack.c.b16 %v774, %v770
    %v895 = vpack.c.b16 %v775, %v771
    %v896 = vpack.c.b16 %v776, %v772
    %v897 = vpack.c.b16 %v777, %v773
    %v898 = vpack.c.b16 %v782, %v778
    %v899 = vpack.c.b16 %v783, %v779
    %v900 = vpack.c.b16 %v784, %v780
    %v901 = vpack.c.b16 %v785, %v781
    %v902 = vpack.c.b16 %v790, %v786
    %v903 = vpack.c.b16 %v791, %v787
    %v904 = vpack.c.b16 %v792, %v788
    %v905 = vpack.c.b16 %v793, %v789
    %v906 = vpack.c.b16 %v798, %v794
    %v907 = vpack.c.b16 %v799, %v795
    %v908 = vpack.c.b16 %v800, %v796
    %v909 = vpack.c.b16 %v801, %v797
    %v910 = vpack.c.b16 %v806, %v802
    %v911 = vpack.c.b16 %v807, %v803
    %v912 = vpack.c.b16 %v808, %v804
    %v913 = vpack.c.b16 %v809, %v805
    %v914 = vpack.c.b16 %v814, %v810
    %v915 = vpack.c.b16 %v815, %v811
    %v916 = vpack.c.b16 %v816, %v812
    %v917 = vpack.c.b16 %v817, %v813
    %v918 = vpack.c.b16 %v822, %v818
    %v919 = vpack.c.b16 %v823, %v819
    %v920 = vpack.c.b16 %v824, %v820
    %v921 = vpack.c.b16 %v825, %v821
    %v922 = vpack.c.b16 %v830, %v826
    %v923 = vpack.c.b16 %v831, %v827
    %v924 = vpack.c.b16 %v832, %v828
    %v925 = vpack.c.b16 %v833, %v829
    %v926 = vpack.c.b16 %v838, %v834
    %v927 = vpack.c.b16 %v839, %v835
    %v928 = vpack.c.b16 %v840, %v836
    %v929 = vpack.c.b16 %v841, %v837
    %v930 = vpack.c.b16 %v846, %v842
    %v931 = vpack.c.b16 %v847, %v843
    %v932 = vpack.c.b16 %v848, %v844
    %v933 = vpack.c.b16 %v849, %v845
    %v934 = vpack.c.b16 %v854, %v850
    %v935 = vpack.c.b16 %v855, %v851
    %v936 = vpack.c.b16 %v856, %v852
    %v937 = vpack.c.b16 %v857, %v853
    %v938 = vpack.c.b16 %v862, %v858
    %v939 = vpack.c.b16 %v863, %v859
    %v940 = vpack.c.b16 %v864, %v860
    %v941 = vpack.c.b16 %v865, %v861
    %v942 = vpack.c.b16 %v870, %v866
    %v943 = vpack.c.b16 %v871, %v867
    %v944 = vpack.c.b16 %v872, %v868
    %v945 = vpack.c.b16 %v873, %v869
    %v946 = vpack.c.b16 %v878, %v874
    %v947 = vpack.c.b16 %v879, %v875
    %v948 = vpack.c.b16 %v880, %v876
    %v949 = vpack.c.b16 %v881, %v877
    %v950 = vpack.c.b16 %v886, %v882
    %v951 = vpack.c.b16 %v887, %v883
    %v952 = vpack.c.b16 %v888, %v884
    %v953 = vpack.c.b16 %v889, %v885
    %1018 = vmatprep.subr.bf16.mxu0 %v891
    %1019 = vmatpush1.bf16.msra.mxu0 %v890
    %1020 = vmatprep.subr.bf16.mxu0 %v895
    %1021 = vmatpush1.bf16.msra.mxu0 %v894
    %1022 = vmatprep.subr.bf16.mxu0 %v899
    %1023 = vmatpush1.bf16.msra.mxu0 %v898
    %1024 = vmatprep.subr.bf16.mxu0 %v903
    %1025 = vmatpush1.bf16.msra.mxu0 %v902
    %1026 = vmatprep.subr.bf16.mxu0 %v907
    %1027 = vmatpush1.bf16.msra.mxu0 %v906
    %1028 = vmatprep.subr.bf16.mxu0 %v911
    %1029 = vmatpush1.bf16.msra.mxu0 %v910
    %1030 = vmatprep.subr.bf16.mxu0 %v915
    %1031 = vmatpush1.bf16.msra.mxu0 %v914
    %1032 = vmatprep.subr.bf16.mxu0 %v919
    %1033 = vmatpush1.bf16.msra.mxu0 %v918
    %1034 = vmatprep.subr.bf16.mxu0 %v923
    %1035 = vmatpush1.bf16.msra.mxu0 %v922
    %1036 = vmatprep.subr.bf16.mxu0 %v927
    %1037 = vmatpush1.bf16.msra.mxu0 %v926
    %1038 = vmatprep.subr.bf16.mxu0 %v931
    %1039 = vmatpush1.bf16.msra.mxu0 %v930
    %1040 = vmatprep.subr.bf16.mxu0 %v935
    %1041 = vmatpush1.bf16.msra.mxu0 %v934
    %1042 = vmatprep.subr.bf16.mxu0 %v939
    %1043 = vmatpush1.bf16.msra.mxu0 %v938
    %1044 = vmatprep.subr.bf16.mxu0 %v943
    %1045 = vmatpush1.bf16.msra.mxu0 %v942
    %1046 = vmatprep.subr.bf16.mxu0 %v947
    %1047 = vmatpush1.bf16.msra.mxu0 %v946
    %1048 = vmatprep.subr.bf16.mxu0 %v951
    %1049 = vmatpush1.bf16.msra.mxu0 %v950
    %1050 = vmatprep.mubr.bf16.mxu0 %v633
    %1051 = vmatmul.mubr.bf16.gmra.mrb[0].mxu0 %v632
    %v1052 = vpop.f32.mrb[0].mxu0
    %v1053 = vadd.f32 0.0, %v1052
    %v1054 = vpop.f32.mrb[0].mxu0
    %v1055 = vadd.f32 0.0, %v1054
    %v1056 = vpop.f32.mrb[0].mxu0
    %v1057 = vpop.f32.mrb[0].mxu0
    %1058 = vdwg.mxu0
    %1059 = vmatprep.subr.bf16.mxu0 %v893
    %1060 = vmatpush1.bf16.msra.mxu0 %v892
    %1061 = vmatprep.subr.bf16.mxu0 %v897
    %1062 = vmatpush1.bf16.msra.mxu0 %v896
    %1063 = vmatprep.subr.bf16.mxu0 %v901
    %1064 = vmatpush1.bf16.msra.mxu0 %v900
    %1065 = vmatprep.subr.bf16.mxu0 %v905
    %1066 = vmatpush1.bf16.msra.mxu0 %v904
    %1067 = vmatprep.subr.bf16.mxu0 %v909
    %1068 = vmatpush1.bf16.msra.mxu0 %v908
    %1069 = vmatprep.subr.bf16.mxu0 %v913
    %1070 = vmatpush1.bf16.msra.mxu0 %v912
    %1071 = vmatprep.subr.bf16.mxu0 %v917
    %1072 = vmatpush1.bf16.msra.mxu0 %v916
    %1073 = vmatprep.subr.bf16.mxu0 %v921
    %1074 = vmatpush1.bf16.msra.mxu0 %v920
    %1075 = vmatprep.subr.bf16.mxu0 %v925
    %1076 = vmatpush1.bf16.msra.mxu0 %v924
    %1077 = vmatprep.subr.bf16.mxu0 %v929
    %1078 = vmatpush1.bf16.msra.mxu0 %v928
    %1079 = vmatprep.subr.bf16.mxu0 %v933
    %1080 = vmatpush1.bf16.msra.mxu0 %v932
    %1081 = vmatprep.subr.bf16.mxu0 %v937
    %1082 = vmatpush1.bf16.msra.mxu0 %v936
    %1083 = vmatprep.subr.bf16.mxu0 %v941
    %1084 = vmatpush1.bf16.msra.mxu0 %v940
    %1085 = vmatprep.subr.bf16.mxu0 %v945
    %1086 = vmatpush1.bf16.msra.mxu0 %v944
    %1087 = vmatprep.subr.bf16.mxu0 %v949
    %1088 = vmatpush1.bf16.msra.mxu0 %v948
    %1089 = vmatprep.subr.bf16.mxu0 %v953
    %1090 = vmatpush1.bf16.msra.mxu0 %v952
    %1091 = vmatprep.mubr.bf16.mxu0 %v633
    %1092 = vmatmul.mubr.bf16.gmra.mrb[0].mxu0 %v632
    %v1093 = vpop.f32.mrb[0].mxu0
    %v1094 = vadd.f32 0.0, %v1093
    %v1095 = vpop.f32.mrb[0].mxu0
    %v1096 = vadd.f32 0.0, %v1095
    %v1097 = vpop.f32.mrb[0].mxu0
    %v1098 = vpop.f32.mrb[0].mxu0
    %1099 = vdwg.mxu0
    %v1100 = vld [vmem:[#allocation16] sm:$0xf]
    %v1101 = vld [vmem:[#allocation18] sm:$0xf]
    %v1102 = vrot.slane %v1053, 4
    %v1103 = vadd.f32 %v1053, %v1102
    %v1104 = vrot.slane %v1103, 2
    %v1105 = vadd.f32 %v1103, %v1104
    %v1106 = vrot.slane %v1105, 1
    %v1107 = vadd.f32 %v1105, %v1106
    %v1108 = vrot.slane %v1055, 4
    %v1109 = vadd.f32 %v1055, %v1108
    %v1110 = vrot.slane %v1109, 2
    %v1111 = vadd.f32 %v1109, %v1110
    %v1112 = vrot.slane %v1111, 1
    %v1113 = vadd.f32 %v1111, %v1112
    %v1114 = vrot.slane %v1094, 4
    %v1115 = vadd.f32 %v1094, %v1114
    %v1116 = vrot.slane %v1115, 2
    %v1117 = vadd.f32 %v1115, %v1116
    %v1118 = vrot.slane %v1117, 1
    %v1119 = vadd.f32 %v1117, %v1118
    %v1120 = vrot.slane %v1096, 4
    %v1121 = vadd.f32 %v1096, %v1120
    %v1122 = vrot.slane %v1121, 2
    %v1123 = vadd.f32 %v1121, %v1122
    %v1124 = vrot.slane %v1123, 1
    %v1125 = vadd.f32 %v1123, %v1124
    %v1126 = vmul.f32 %v1107, %v573
    %v1127 = vmul.f32 %v1113, %v573
    %v1128 = vmul.f32 %v1119, %v573
    %v1129 = vmul.f32 %v1125, %v573
    %v1130 = vsub.f32 %v1053, %v1126
    %v1131 = vsub.f32 %v1055, %v1127
    %v1132 = vsub.f32 %v1094, %v1128
    %v1133 = vsub.f32 %v1096, %v1129
    %v1134 = vmul.f32 %v1130, %v1130
    %v1135 = vmul.f32 %v1131, %v1131
    %v1136 = vmul.f32 %v1132, %v1132
    %v1137 = vmul.f32 %v1133, %v1133
    %v1138 = vrot.slane %v1134, 4
    %v1139 = vadd.f32 %v1134, %v1138
    %v1140 = vrot.slane %v1139, 2
    %v1141 = vadd.f32 %v1139, %v1140
    %v1142 = vrot.slane %v1141, 1
    %v1143 = vadd.f32 %v1141, %v1142
    %v1144 = vrot.slane %v1135, 4
    %v1145 = vadd.f32 %v1135, %v1144
    %v1146 = vrot.slane %v1145, 2
    %v1147 = vadd.f32 %v1145, %v1146
    %v1148 = vrot.slane %v1147, 1
    %v1149 = vadd.f32 %v1147, %v1148
    %v1150 = vrot.slane %v1136, 4
    %v1151 = vadd.f32 %v1136, %v1150
    %v1152 = vrot.slane %v1151, 2
    %v1153 = vadd.f32 %v1151, %v1152
    %v1154 = vrot.slane %v1153, 1
    %v1155 = vadd.f32 %v1153, %v1154
    %v1156 = vrot.slane %v1137, 4
    %v1157 = vadd.f32 %v1137, %v1156
    %v1158 = vrot.slane %v1157, 2
    %v1159 = vadd.f32 %v1157, %v1158
    %v1160 = vrot.slane %v1159, 1
    %v1161 = vadd.f32 %v1159, %v1160
    %v1162 = vmul.f32 %v1143, %v573
    %v1163 = vmul.f32 %v1149, %v573
    %v1164 = vmul.f32 %v1155, %v573
    %v1165 = vmul.f32 %v1161, %v573
    %v1167 = vlaneseq
    %v1168 = vshrl.u32 %v1167, 7
    %v1169 = vsub.s32 0, %v1168
    %v1170 = vrot.slane %v1100, %v1169
    %v1171 = vlaneseq
    %v1172 = vshrl.u32 %v1171, 7
    %v1173 = vsub.s32 1, %v1172
    %v1174 = vrot.slane %v1100, %v1173
    %v1175 = vlaneseq
    %v1176 = vshrl.u32 %v1175, 7
    %v1177 = vsub.s32 2, %v1176
    %v1178 = vrot.slane %v1100, %v1177
    %v1179 = vlaneseq
    %v1180 = vshrl.u32 %v1179, 7
    %v1181 = vsub.s32 3, %v1180
    %v1182 = vrot.slane %v1100, %v1181
    %v1187 = vmul.f32 %v1170, %v1130
    %v1188 = vmul.f32 %v1174, %v1131
    %v1189 = vmul.f32 %v1178, %v1132
    %v1190 = vmul.f32 %v1182, %v1133
    %v1191 = vadd.f32 %v1162, 1e-05
    %v1192 = vadd.f32 %v1163, 1e-05
    %v1193 = vadd.f32 %v1164, 1e-05
    %v1194 = vadd.f32 %v1165, 1e-05
    %v1195 = vrsqrt.pop %v1191
    %v1196 = vrsqrt.pop %v1192
    %v1197 = vrsqrt.pop %v1193
    %v1198 = vrsqrt.pop %v1194
    %v1199 = vmul.f32 %v1187, %v1195
    %v1200 = vmul.f32 %v1188, %v1196
    %v1201 = vmul.f32 %v1189, %v1197
    %v1202 = vmul.f32 %v1190, %v1198
    %v1204 = vlaneseq
    %v1205 = vshrl.u32 %v1204, 7
    %v1206 = vsub.s32 0, %v1205
    %v1207 = vrot.slane %v1101, %v1206
    %v1208 = vlaneseq
    %v1209 = vshrl.u32 %v1208, 7
    %v1210 = vsub.s32 1, %v1209
    %v1211 = vrot.slane %v1101, %v1210
    %v1212 = vlaneseq
    %v1213 = vshrl.u32 %v1212, 7
    %v1214 = vsub.s32 2, %v1213
    %v1215 = vrot.slane %v1101, %v1214
    %v1216 = vlaneseq
    %v1217 = vshrl.u32 %v1216, 7
    %v1218 = vsub.s32 3, %v1217
    %v1219 = vrot.slane %v1101, %v1218
    %v1224 = vadd.f32 %v1199, %v1207
    %v1225 = vadd.f32 %v1200, %v1211
    %v1226 = vadd.f32 %v1201, %v1215
    %v1227 = vadd.f32 %v1202, %v1219
    %vm1228 = vcmp.gt.f32.partialorder %v1224, 0.0
    %vm1229 = vcmp.gt.f32.partialorder %v1225, 0.0
    %vm1230 = vcmp.gt.f32.partialorder %v1226, 0.0
    %vm1231 = vcmp.gt.f32.partialorder %v1227, 0.0
    %v1232 = vmul.f32 %v1224, 0.2
    %v1233 = vmul.f32 %v1225, 0.2
    %v1234 = vmul.f32 %v1226, 0.2
    %v1235 = vmul.f32 %v1227, 0.2
    %v1236 = vsel %vm1228, %v1224, %v1232
    %v1237 = vsel %vm1229, %v1225, %v1233
    %v1238 = vsel %vm1230, %v1226, %v1234
    %v1239 = vsel %vm1231, %v1227, %v1235
    %v1240 = vpack.c.bf16 %v1236, %v1236
    %v1241 = vpack.c.bf16 %v1237, %v1237
    %v1242 = vpack.c.bf16 %v1238, %v1238
    %v1243 = vpack.c.bf16 %v1239, %v1239
    %v1244 = vld [vmem:[#allocation19] sm:$0xff]
    %v1245 = vld [vmem:[#allocation19 + $0x8] sm:$0xff]
    %v1246 = vld [vmem:[#allocation19 + $0x10] sm:$0xff]
    %v1247 = vld [vmem:[#allocation19 + $0x18] sm:$0xff]
    %v1248 = vld [vmem:[#allocation19 + $0x20] sm:$0xff]
    %v1249 = vld [vmem:[#allocation19 + $0x28] sm:$0xff]
    %v1250 = vld [vmem:[#allocation19 + $0x30] sm:$0xff]
    %v1251 = vld [vmem:[#allocation19 + $0x38] sm:$0xff]
    %v1252 = vld [vmem:[#allocation19 + $0x40] sm:$0xff]
    %v1253 = vld [vmem:[#allocation19 + $0x48] sm:$0xff]
    %v1254 = vld [vmem:[#allocation19 + $0x50] sm:$0xff]
    %v1255 = vld [vmem:[#allocation19 + $0x58] sm:$0xff]
    %v1256 = vld [vmem:[#allocation19 + $0x60] sm:$0xff]
    %v1257 = vld [vmem:[#allocation19 + $0x68] sm:$0xff]
    %v1258 = vld [vmem:[#allocation19 + $0x70] sm:$0xff]
    %v1259 = vld [vmem:[#allocation19 + $0x78] sm:$0xff]
    %v1260 = vld [vmem:[#allocation19 + $0x80] sm:$0xff]
    %v1261 = vld [vmem:[#allocation19 + $0x88] sm:$0xff]
    %v1262 = vld [vmem:[#allocation19 + $0x90] sm:$0xff]
    %v1263 = vld [vmem:[#allocation19 + $0x98] sm:$0xff]
    %v1264 = vld [vmem:[#allocation19 + $0xa0] sm:$0xff]
    %v1265 = vld [vmem:[#allocation19 + $0xa8] sm:$0xff]
    %v1266 = vld [vmem:[#allocation19 + $0xb0] sm:$0xff]
    %v1267 = vld [vmem:[#allocation19 + $0xb8] sm:$0xff]
    %v1268 = vld [vmem:[#allocation19 + $0xc0] sm:$0xff]
    %v1269 = vld [vmem:[#allocation19 + $0xc8] sm:$0xff]
    %v1270 = vld [vmem:[#allocation19 + $0xd0] sm:$0xff]
    %v1271 = vld [vmem:[#allocation19 + $0xd8] sm:$0xff]
    %v1272 = vld [vmem:[#allocation19 + $0xe0] sm:$0xff]
    %v1273 = vld [vmem:[#allocation19 + $0xe8] sm:$0xff]
    %v1274 = vld [vmem:[#allocation19 + $0xf0] sm:$0xff]
    %v1275 = vld [vmem:[#allocation19 + $0xf8] sm:$0xff]
    %v1276 = vld [vmem:[#allocation19 + $0x100] sm:$0xff]
    %v1277 = vld [vmem:[#allocation19 + $0x108] sm:$0xff]
    %v1278 = vld [vmem:[#allocation19 + $0x110] sm:$0xff]
    %v1279 = vld [vmem:[#allocation19 + $0x118] sm:$0xff]
    %v1280 = vld [vmem:[#allocation19 + $0x120] sm:$0xff]
    %v1281 = vld [vmem:[#allocation19 + $0x128] sm:$0xff]
    %v1282 = vld [vmem:[#allocation19 + $0x130] sm:$0xff]
    %v1283 = vld [vmem:[#allocation19 + $0x138] sm:$0xff]
    %v1284 = vld [vmem:[#allocation19 + $0x140] sm:$0xff]
    %v1285 = vld [vmem:[#allocation19 + $0x148] sm:$0xff]
    %v1286 = vld [vmem:[#allocation19 + $0x150] sm:$0xff]
    %v1287 = vld [vmem:[#allocation19 + $0x158] sm:$0xff]
    %v1288 = vld [vmem:[#allocation19 + $0x160] sm:$0xff]
    %v1289 = vld [vmem:[#allocation19 + $0x168] sm:$0xff]
    %v1290 = vld [vmem:[#allocation19 + $0x170] sm:$0xff]
    %v1291 = vld [vmem:[#allocation19 + $0x178] sm:$0xff]
    %v1292 = vld [vmem:[#allocation19 + $0x180] sm:$0xff]
    %v1293 = vld [vmem:[#allocation19 + $0x188] sm:$0xff]
    %v1294 = vld [vmem:[#allocation19 + $0x190] sm:$0xff]
    %v1295 = vld [vmem:[#allocation19 + $0x198] sm:$0xff]
    %v1296 = vld [vmem:[#allocation19 + $0x1a0] sm:$0xff]
    %v1297 = vld [vmem:[#allocation19 + $0x1a8] sm:$0xff]
    %v1298 = vld [vmem:[#allocation19 + $0x1b0] sm:$0xff]
    %v1299 = vld [vmem:[#allocation19 + $0x1b8] sm:$0xff]
    %v1300 = vld [vmem:[#allocation19 + $0x1c0] sm:$0xff]
    %v1301 = vld [vmem:[#allocation19 + $0x1c8] sm:$0xff]
    %v1302 = vld [vmem:[#allocation19 + $0x1d0] sm:$0xff]
    %v1303 = vld [vmem:[#allocation19 + $0x1d8] sm:$0xff]
    %v1304 = vld [vmem:[#allocation19 + $0x1e0] sm:$0xff]
    %v1305 = vld [vmem:[#allocation19 + $0x1e8] sm:$0xff]
    %v1306 = vld [vmem:[#allocation19 + $0x1f0] sm:$0xff]
    %v1307 = vld [vmem:[#allocation19 + $0x1f8] sm:$0xff]
    %v1308 = vld [vmem:[#allocation19 + $0x200] sm:$0xff]
    %v1309 = vld [vmem:[#allocation19 + $0x208] sm:$0xff]
    %v1310 = vld [vmem:[#allocation19 + $0x210] sm:$0xff]
    %v1311 = vld [vmem:[#allocation19 + $0x218] sm:$0xff]
    %v1312 = vld [vmem:[#allocation19 + $0x220] sm:$0xff]
    %v1313 = vld [vmem:[#allocation19 + $0x228] sm:$0xff]
    %v1314 = vld [vmem:[#allocation19 + $0x230] sm:$0xff]
    %v1315 = vld [vmem:[#allocation19 + $0x238] sm:$0xff]
    %v1316 = vld [vmem:[#allocation19 + $0x240] sm:$0xff]
    %v1317 = vld [vmem:[#allocation19 + $0x248] sm:$0xff]
    %v1318 = vld [vmem:[#allocation19 + $0x250] sm:$0xff]
    %v1319 = vld [vmem:[#allocation19 + $0x258] sm:$0xff]
    %v1320 = vld [vmem:[#allocation19 + $0x260] sm:$0xff]
    %v1321 = vld [vmem:[#allocation19 + $0x268] sm:$0xff]
    %v1322 = vld [vmem:[#allocation19 + $0x270] sm:$0xff]
    %v1323 = vld [vmem:[#allocation19 + $0x278] sm:$0xff]
    %v1324 = vld [vmem:[#allocation19 + $0x280] sm:$0xff]
    %v1325 = vld [vmem:[#allocation19 + $0x288] sm:$0xff]
    %v1326 = vld [vmem:[#allocation19 + $0x290] sm:$0xff]
    %v1327 = vld [vmem:[#allocation19 + $0x298] sm:$0xff]
    %v1328 = vld [vmem:[#allocation19 + $0x2a0] sm:$0xff]
    %v1329 = vld [vmem:[#allocation19 + $0x2a8] sm:$0xff]
    %v1330 = vld [vmem:[#allocation19 + $0x2b0] sm:$0xff]
    %v1331 = vld [vmem:[#allocation19 + $0x2b8] sm:$0xff]
    %v1332 = vld [vmem:[#allocation19 + $0x2c0] sm:$0xff]
    %v1333 = vld [vmem:[#allocation19 + $0x2c8] sm:$0xff]
    %v1334 = vld [vmem:[#allocation19 + $0x2d0] sm:$0xff]
    %v1335 = vld [vmem:[#allocation19 + $0x2d8] sm:$0xff]
    %v1336 = vld [vmem:[#allocation19 + $0x2e0] sm:$0xff]
    %v1337 = vld [vmem:[#allocation19 + $0x2e8] sm:$0xff]
    %v1338 = vld [vmem:[#allocation19 + $0x2f0] sm:$0xff]
    %v1339 = vld [vmem:[#allocation19 + $0x2f8] sm:$0xff]
    %v1340 = vld [vmem:[#allocation19 + $0x300] sm:$0xff]
    %v1341 = vld [vmem:[#allocation19 + $0x308] sm:$0xff]
    %v1342 = vld [vmem:[#allocation19 + $0x310] sm:$0xff]
    %v1343 = vld [vmem:[#allocation19 + $0x318] sm:$0xff]
    %v1344 = vld [vmem:[#allocation19 + $0x320] sm:$0xff]
    %v1345 = vld [vmem:[#allocation19 + $0x328] sm:$0xff]
    %v1346 = vld [vmem:[#allocation19 + $0x330] sm:$0xff]
    %v1347 = vld [vmem:[#allocation19 + $0x338] sm:$0xff]
    %v1348 = vld [vmem:[#allocation19 + $0x340] sm:$0xff]
    %v1349 = vld [vmem:[#allocation19 + $0x348] sm:$0xff]
    %v1350 = vld [vmem:[#allocation19 + $0x350] sm:$0xff]
    %v1351 = vld [vmem:[#allocation19 + $0x358] sm:$0xff]
    %v1352 = vld [vmem:[#allocation19 + $0x360] sm:$0xff]
    %v1353 = vld [vmem:[#allocation19 + $0x368] sm:$0xff]
    %v1354 = vld [vmem:[#allocation19 + $0x370] sm:$0xff]
    %v1355 = vld [vmem:[#allocation19 + $0x378] sm:$0xff]
    %v1356 = vld [vmem:[#allocation19 + $0x380] sm:$0xff]
    %v1357 = vld [vmem:[#allocation19 + $0x388] sm:$0xff]
    %v1358 = vld [vmem:[#allocation19 + $0x390] sm:$0xff]
    %v1359 = vld [vmem:[#allocation19 + $0x398] sm:$0xff]
    %v1360 = vld [vmem:[#allocation19 + $0x3a0] sm:$0xff]
    %v1361 = vld [vmem:[#allocation19 + $0x3a8] sm:$0xff]
    %v1362 = vld [vmem:[#allocation19 + $0x3b0] sm:$0xff]
    %v1363 = vld [vmem:[#allocation19 + $0x3b8] sm:$0xff]
    %v1364 = vld [vmem:[#allocation19 + $0x3c0] sm:$0xff]
    %v1365 = vld [vmem:[#allocation19 + $0x3c8] sm:$0xff]
    %v1366 = vld [vmem:[#allocation19 + $0x3d0] sm:$0xff]
    %v1367 = vld [vmem:[#allocation19 + $0x3d8] sm:$0xff]
    %v1368 = vld [vmem:[#allocation19 + $0x3e0] sm:$0xff]
    %v1369 = vld [vmem:[#allocation19 + $0x3e8] sm:$0xff]
    %v1370 = vld [vmem:[#allocation19 + $0x3f0] sm:$0xff]
    %v1371 = vld [vmem:[#allocation19 + $0x3f8] sm:$0xff]
    %v1372 = vld [vmem:[#allocation19 + $0x400] sm:$0xff]
    %v1373 = vld [vmem:[#allocation19 + $0x408] sm:$0xff]
    %v1374 = vld [vmem:[#allocation19 + $0x410] sm:$0xff]
    %v1375 = vld [vmem:[#allocation19 + $0x418] sm:$0xff]
    %v1376 = vld [vmem:[#allocation19 + $0x420] sm:$0xff]
    %v1377 = vld [vmem:[#allocation19 + $0x428] sm:$0xff]
    %v1378 = vld [vmem:[#allocation19 + $0x430] sm:$0xff]
    %v1379 = vld [vmem:[#allocation19 + $0x438] sm:$0xff]
    %v1380 = vld [vmem:[#allocation19 + $0x440] sm:$0xff]
    %v1381 = vld [vmem:[#allocation19 + $0x448] sm:$0xff]
    %v1382 = vld [vmem:[#allocation19 + $0x450] sm:$0xff]
    %v1383 = vld [vmem:[#allocation19 + $0x458] sm:$0xff]
    %v1384 = vld [vmem:[#allocation19 + $0x460] sm:$0xff]
    %v1385 = vld [vmem:[#allocation19 + $0x468] sm:$0xff]
    %v1386 = vld [vmem:[#allocation19 + $0x470] sm:$0xff]
    %v1387 = vld [vmem:[#allocation19 + $0x478] sm:$0xff]
    %v1388 = vld [vmem:[#allocation19 + $0x480] sm:$0xff]
    %v1389 = vld [vmem:[#allocation19 + $0x488] sm:$0xff]
    %v1390 = vld [vmem:[#allocation19 + $0x490] sm:$0xff]
    %v1391 = vld [vmem:[#allocation19 + $0x498] sm:$0xff]
    %v1392 = vld [vmem:[#allocation19 + $0x4a0] sm:$0xff]
    %v1393 = vld [vmem:[#allocation19 + $0x4a8] sm:$0xff]
    %v1394 = vld [vmem:[#allocation19 + $0x4b0] sm:$0xff]
    %v1395 = vld [vmem:[#allocation19 + $0x4b8] sm:$0xff]
    %v1396 = vld [vmem:[#allocation19 + $0x4c0] sm:$0xff]
    %v1397 = vld [vmem:[#allocation19 + $0x4c8] sm:$0xff]
    %v1398 = vld [vmem:[#allocation19 + $0x4d0] sm:$0xff]
    %v1399 = vld [vmem:[#allocation19 + $0x4d8] sm:$0xff]
    %v1400 = vld [vmem:[#allocation19 + $0x4e0] sm:$0xff]
    %v1401 = vld [vmem:[#allocation19 + $0x4e8] sm:$0xff]
    %v1402 = vld [vmem:[#allocation19 + $0x4f0] sm:$0xff]
    %v1403 = vld [vmem:[#allocation19 + $0x4f8] sm:$0xff]
    %v1404 = vld [vmem:[#allocation19 + $0x500] sm:$0xff]
    %v1405 = vld [vmem:[#allocation19 + $0x508] sm:$0xff]
    %v1406 = vld [vmem:[#allocation19 + $0x510] sm:$0xff]
    %v1407 = vld [vmem:[#allocation19 + $0x518] sm:$0xff]
    %v1408 = vld [vmem:[#allocation19 + $0x520] sm:$0xff]
    %v1409 = vld [vmem:[#allocation19 + $0x528] sm:$0xff]
    %v1410 = vld [vmem:[#allocation19 + $0x530] sm:$0xff]
    %v1411 = vld [vmem:[#allocation19 + $0x538] sm:$0xff]
    %v1412 = vld [vmem:[#allocation19 + $0x540] sm:$0xff]
    %v1413 = vld [vmem:[#allocation19 + $0x548] sm:$0xff]
    %v1414 = vld [vmem:[#allocation19 + $0x550] sm:$0xff]
    %v1415 = vld [vmem:[#allocation19 + $0x558] sm:$0xff]
    %v1416 = vld [vmem:[#allocation19 + $0x560] sm:$0xff]
    %v1417 = vld [vmem:[#allocation19 + $0x568] sm:$0xff]
    %v1418 = vld [vmem:[#allocation19 + $0x570] sm:$0xff]
    %v1419 = vld [vmem:[#allocation19 + $0x578] sm:$0xff]
    %v1420 = vld [vmem:[#allocation19 + $0x580] sm:$0xff]
    %v1421 = vld [vmem:[#allocation19 + $0x588] sm:$0xff]
    %v1422 = vld [vmem:[#allocation19 + $0x590] sm:$0xff]
    %v1423 = vld [vmem:[#allocation19 + $0x598] sm:$0xff]
    %v1424 = vld [vmem:[#allocation19 + $0x5a0] sm:$0xff]
    %v1425 = vld [vmem:[#allocation19 + $0x5a8] sm:$0xff]
    %v1426 = vld [vmem:[#allocation19 + $0x5b0] sm:$0xff]
    %v1427 = vld [vmem:[#allocation19 + $0x5b8] sm:$0xff]
    %v1428 = vld [vmem:[#allocation19 + $0x5c0] sm:$0xff]
    %v1429 = vld [vmem:[#allocation19 + $0x5c8] sm:$0xff]
    %v1430 = vld [vmem:[#allocation19 + $0x5d0] sm:$0xff]
    %v1431 = vld [vmem:[#allocation19 + $0x5d8] sm:$0xff]
    %v1432 = vld [vmem:[#allocation19 + $0x5e0] sm:$0xff]
    %v1433 = vld [vmem:[#allocation19 + $0x5e8] sm:$0xff]
    %v1434 = vld [vmem:[#allocation19 + $0x5f0] sm:$0xff]
    %v1435 = vld [vmem:[#allocation19 + $0x5f8] sm:$0xff]
    %v1436 = vld [vmem:[#allocation19 + $0x600] sm:$0xff]
    %v1437 = vld [vmem:[#allocation19 + $0x608] sm:$0xff]
    %v1438 = vld [vmem:[#allocation19 + $0x610] sm:$0xff]
    %v1439 = vld [vmem:[#allocation19 + $0x618] sm:$0xff]
    %v1440 = vld [vmem:[#allocation19 + $0x620] sm:$0xff]
    %v1441 = vld [vmem:[#allocation19 + $0x628] sm:$0xff]
    %v1442 = vld [vmem:[#allocation19 + $0x630] sm:$0xff]
    %v1443 = vld [vmem:[#allocation19 + $0x638] sm:$0xff]
    %v1444 = vld [vmem:[#allocation19 + $0x640] sm:$0xff]
    %v1445 = vld [vmem:[#allocation19 + $0x648] sm:$0xff]
    %v1446 = vld [vmem:[#allocation19 + $0x650] sm:$0xff]
    %v1447 = vld [vmem:[#allocation19 + $0x658] sm:$0xff]
    %v1448 = vld [vmem:[#allocation19 + $0x660] sm:$0xff]
    %v1449 = vld [vmem:[#allocation19 + $0x668] sm:$0xff]
    %v1450 = vld [vmem:[#allocation19 + $0x670] sm:$0xff]
    %v1451 = vld [vmem:[#allocation19 + $0x678] sm:$0xff]
    %v1452 = vld [vmem:[#allocation19 + $0x680] sm:$0xff]
    %v1453 = vld [vmem:[#allocation19 + $0x688] sm:$0xff]
    %v1454 = vld [vmem:[#allocation19 + $0x690] sm:$0xff]
    %v1455 = vld [vmem:[#allocation19 + $0x698] sm:$0xff]
    %v1456 = vld [vmem:[#allocation19 + $0x6a0] sm:$0xff]
    %v1457 = vld [vmem:[#allocation19 + $0x6a8] sm:$0xff]
    %v1458 = vld [vmem:[#allocation19 + $0x6b0] sm:$0xff]
    %v1459 = vld [vmem:[#allocation19 + $0x6b8] sm:$0xff]
    %v1460 = vld [vmem:[#allocation19 + $0x6c0] sm:$0xff]
    %v1461 = vld [vmem:[#allocation19 + $0x6c8] sm:$0xff]
    %v1462 = vld [vmem:[#allocation19 + $0x6d0] sm:$0xff]
    %v1463 = vld [vmem:[#allocation19 + $0x6d8] sm:$0xff]
    %v1464 = vld [vmem:[#allocation19 + $0x6e0] sm:$0xff]
    %v1465 = vld [vmem:[#allocation19 + $0x6e8] sm:$0xff]
    %v1466 = vld [vmem:[#allocation19 + $0x6f0] sm:$0xff]
    %v1467 = vld [vmem:[#allocation19 + $0x6f8] sm:$0xff]
    %v1468 = vld [vmem:[#allocation19 + $0x700] sm:$0xff]
    %v1469 = vld [vmem:[#allocation19 + $0x708] sm:$0xff]
    %v1470 = vld [vmem:[#allocation19 + $0x710] sm:$0xff]
    %v1471 = vld [vmem:[#allocation19 + $0x718] sm:$0xff]
    %v1472 = vld [vmem:[#allocation19 + $0x720] sm:$0xff]
    %v1473 = vld [vmem:[#allocation19 + $0x728] sm:$0xff]
    %v1474 = vld [vmem:[#allocation19 + $0x730] sm:$0xff]
    %v1475 = vld [vmem:[#allocation19 + $0x738] sm:$0xff]
    %v1476 = vld [vmem:[#allocation19 + $0x740] sm:$0xff]
    %v1477 = vld [vmem:[#allocation19 + $0x748] sm:$0xff]
    %v1478 = vld [vmem:[#allocation19 + $0x750] sm:$0xff]
    %v1479 = vld [vmem:[#allocation19 + $0x758] sm:$0xff]
    %v1480 = vld [vmem:[#allocation19 + $0x760] sm:$0xff]
    %v1481 = vld [vmem:[#allocation19 + $0x768] sm:$0xff]
    %v1482 = vld [vmem:[#allocation19 + $0x770] sm:$0xff]
    %v1483 = vld [vmem:[#allocation19 + $0x778] sm:$0xff]
    %v1484 = vld [vmem:[#allocation19 + $0x780] sm:$0xff]
    %v1485 = vld [vmem:[#allocation19 + $0x788] sm:$0xff]
    %v1486 = vld [vmem:[#allocation19 + $0x790] sm:$0xff]
    %v1487 = vld [vmem:[#allocation19 + $0x798] sm:$0xff]
    %v1488 = vld [vmem:[#allocation19 + $0x7a0] sm:$0xff]
    %v1489 = vld [vmem:[#allocation19 + $0x7a8] sm:$0xff]
    %v1490 = vld [vmem:[#allocation19 + $0x7b0] sm:$0xff]
    %v1491 = vld [vmem:[#allocation19 + $0x7b8] sm:$0xff]
    %v1492 = vld [vmem:[#allocation19 + $0x7c0] sm:$0xff]
    %v1493 = vld [vmem:[#allocation19 + $0x7c8] sm:$0xff]
    %v1494 = vld [vmem:[#allocation19 + $0x7d0] sm:$0xff]
    %v1495 = vld [vmem:[#allocation19 + $0x7d8] sm:$0xff]
    %v1496 = vld [vmem:[#allocation19 + $0x7e0] sm:$0xff]
    %v1497 = vld [vmem:[#allocation19 + $0x7e8] sm:$0xff]
    %v1498 = vld [vmem:[#allocation19 + $0x7f0] sm:$0xff]
    %v1499 = vld [vmem:[#allocation19 + $0x7f8] sm:$0xff]
    %v1756 = vunpack.c.l.b16 %v1244
    %v1757 = vunpack.c.h.b16 %v1244
    %v1758 = vunpack.c.l.b16 %v1245
    %v1759 = vunpack.c.h.b16 %v1245
    %v1760 = vunpack.c.l.b16 %v1246
    %v1761 = vunpack.c.h.b16 %v1246
    %v1762 = vunpack.c.l.b16 %v1247
    %v1763 = vunpack.c.h.b16 %v1247
    %v1764 = vunpack.c.l.b16 %v1248
    %v1765 = vunpack.c.h.b16 %v1248
    %v1766 = vunpack.c.l.b16 %v1249
    %v1767 = vunpack.c.h.b16 %v1249
    %v1768 = vunpack.c.l.b16 %v1250
    %v1769 = vunpack.c.h.b16 %v1250
    %v1770 = vunpack.c.l.b16 %v1251
    %v1771 = vunpack.c.h.b16 %v1251
    %v1772 = vunpack.c.l.b16 %v1252
    %v1773 = vunpack.c.h.b16 %v1252
    %v1774 = vunpack.c.l.b16 %v1253
    %v1775 = vunpack.c.h.b16 %v1253
    %v1776 = vunpack.c.l.b16 %v1254
    %v1777 = vunpack.c.h.b16 %v1254
    %v1778 = vunpack.c.l.b16 %v1255
    %v1779 = vunpack.c.h.b16 %v1255
    %v1780 = vunpack.c.l.b16 %v1256
    %v1781 = vunpack.c.h.b16 %v1256
    %v1782 = vunpack.c.l.b16 %v1257
    %v1783 = vunpack.c.h.b16 %v1257
    %v1784 = vunpack.c.l.b16 %v1258
    %v1785 = vunpack.c.h.b16 %v1258
    %v1786 = vunpack.c.l.b16 %v1259
    %v1787 = vunpack.c.h.b16 %v1259
    %v1788 = vunpack.c.l.b16 %v1260
    %v1789 = vunpack.c.h.b16 %v1260
    %v1790 = vunpack.c.l.b16 %v1261
    %v1791 = vunpack.c.h.b16 %v1261
    %v1792 = vunpack.c.l.b16 %v1262
    %v1793 = vunpack.c.h.b16 %v1262
    %v1794 = vunpack.c.l.b16 %v1263
    %v1795 = vunpack.c.h.b16 %v1263
    %v1796 = vunpack.c.l.b16 %v1264
    %v1797 = vunpack.c.h.b16 %v1264
    %v1798 = vunpack.c.l.b16 %v1265
    %v1799 = vunpack.c.h.b16 %v1265
    %v1800 = vunpack.c.l.b16 %v1266
    %v1801 = vunpack.c.h.b16 %v1266
    %v1802 = vunpack.c.l.b16 %v1267
    %v1803 = vunpack.c.h.b16 %v1267
    %v1804 = vunpack.c.l.b16 %v1268
    %v1805 = vunpack.c.h.b16 %v1268
    %v1806 = vunpack.c.l.b16 %v1269
    %v1807 = vunpack.c.h.b16 %v1269
    %v1808 = vunpack.c.l.b16 %v1270
    %v1809 = vunpack.c.h.b16 %v1270
    %v1810 = vunpack.c.l.b16 %v1271
    %v1811 = vunpack.c.h.b16 %v1271
    %v1812 = vunpack.c.l.b16 %v1272
    %v1813 = vunpack.c.h.b16 %v1272
    %v1814 = vunpack.c.l.b16 %v1273
    %v1815 = vunpack.c.h.b16 %v1273
    %v1816 = vunpack.c.l.b16 %v1274
    %v1817 = vunpack.c.h.b16 %v1274
    %v1818 = vunpack.c.l.b16 %v1275
    %v1819 = vunpack.c.h.b16 %v1275
    %v1820 = vunpack.c.l.b16 %v1276
    %v1821 = vunpack.c.h.b16 %v1276
    %v1822 = vunpack.c.l.b16 %v1277
    %v1823 = vunpack.c.h.b16 %v1277
    %v1824 = vunpack.c.l.b16 %v1278
    %v1825 = vunpack.c.h.b16 %v1278
    %v1826 = vunpack.c.l.b16 %v1279
    %v1827 = vunpack.c.h.b16 %v1279
    %v1828 = vunpack.c.l.b16 %v1280
    %v1829 = vunpack.c.h.b16 %v1280
    %v1830 = vunpack.c.l.b16 %v1281
    %v1831 = vunpack.c.h.b16 %v1281
    %v1832 = vunpack.c.l.b16 %v1282
    %v1833 = vunpack.c.h.b16 %v1282
    %v1834 = vunpack.c.l.b16 %v1283
    %v1835 = vunpack.c.h.b16 %v1283
    %v1836 = vunpack.c.l.b16 %v1284
    %v1837 = vunpack.c.h.b16 %v1284
    %v1838 = vunpack.c.l.b16 %v1285
    %v1839 = vunpack.c.h.b16 %v1285
    %v1840 = vunpack.c.l.b16 %v1286
    %v1841 = vunpack.c.h.b16 %v1286
    %v1842 = vunpack.c.l.b16 %v1287
    %v1843 = vunpack.c.h.b16 %v1287
    %v1844 = vunpack.c.l.b16 %v1288
    %v1845 = vunpack.c.h.b16 %v1288
    %v1846 = vunpack.c.l.b16 %v1289
    %v1847 = vunpack.c.h.b16 %v1289
    %v1848 = vunpack.c.l.b16 %v1290
    %v1849 = vunpack.c.h.b16 %v1290
    %v1850 = vunpack.c.l.b16 %v1291
    %v1851 = vunpack.c.h.b16 %v1291
    %v1852 = vunpack.c.l.b16 %v1292
    %v1853 = vunpack.c.h.b16 %v1292
    %v1854 = vunpack.c.l.b16 %v1293
    %v1855 = vunpack.c.h.b16 %v1293
    %v1856 = vunpack.c.l.b16 %v1294
    %v1857 = vunpack.c.h.b16 %v1294
    %v1858 = vunpack.c.l.b16 %v1295
    %v1859 = vunpack.c.h.b16 %v1295
    %v1860 = vunpack.c.l.b16 %v1296
    %v1861 = vunpack.c.h.b16 %v1296
    %v1862 = vunpack.c.l.b16 %v1297
    %v1863 = vunpack.c.h.b16 %v1297
    %v1864 = vunpack.c.l.b16 %v1298
    %v1865 = vunpack.c.h.b16 %v1298
    %v1866 = vunpack.c.l.b16 %v1299
    %v1867 = vunpack.c.h.b16 %v1299
    %v1868 = vunpack.c.l.b16 %v1300
    %v1869 = vunpack.c.h.b16 %v1300
    %v1870 = vunpack.c.l.b16 %v1301
    %v1871 = vunpack.c.h.b16 %v1301
    %v1872 = vunpack.c.l.b16 %v1302
    %v1873 = vunpack.c.h.b16 %v1302
    %v1874 = vunpack.c.l.b16 %v1303
    %v1875 = vunpack.c.h.b16 %v1303
    %v1876 = vunpack.c.l.b16 %v1304
    %v1877 = vunpack.c.h.b16 %v1304
    %v1878 = vunpack.c.l.b16 %v1305
    %v1879 = vunpack.c.h.b16 %v1305
    %v1880 = vunpack.c.l.b16 %v1306
    %v1881 = vunpack.c.h.b16 %v1306
    %v1882 = vunpack.c.l.b16 %v1307
    %v1883 = vunpack.c.h.b16 %v1307
    %v1884 = vunpack.c.l.b16 %v1308
    %v1885 = vunpack.c.h.b16 %v1308
    %v1886 = vunpack.c.l.b16 %v1309
    %v1887 = vunpack.c.h.b16 %v1309
    %v1888 = vunpack.c.l.b16 %v1310
    %v1889 = vunpack.c.h.b16 %v1310
    %v1890 = vunpack.c.l.b16 %v1311
    %v1891 = vunpack.c.h.b16 %v1311
    %v1892 = vunpack.c.l.b16 %v1312
    %v1893 = vunpack.c.h.b16 %v1312
    %v1894 = vunpack.c.l.b16 %v1313
    %v1895 = vunpack.c.h.b16 %v1313
    %v1896 = vunpack.c.l.b16 %v1314
    %v1897 = vunpack.c.h.b16 %v1314
    %v1898 = vunpack.c.l.b16 %v1315
    %v1899 = vunpack.c.h.b16 %v1315
    %v1900 = vunpack.c.l.b16 %v1316
    %v1901 = vunpack.c.h.b16 %v1316
    %v1902 = vunpack.c.l.b16 %v1317
    %v1903 = vunpack.c.h.b16 %v1317
    %v1904 = vunpack.c.l.b16 %v1318
    %v1905 = vunpack.c.h.b16 %v1318
    %v1906 = vunpack.c.l.b16 %v1319
    %v1907 = vunpack.c.h.b16 %v1319
    %v1908 = vunpack.c.l.b16 %v1320
    %v1909 = vunpack.c.h.b16 %v1320
    %v1910 = vunpack.c.l.b16 %v1321
    %v1911 = vunpack.c.h.b16 %v1321
    %v1912 = vunpack.c.l.b16 %v1322
    %v1913 = vunpack.c.h.b16 %v1322
    %v1914 = vunpack.c.l.b16 %v1323
    %v1915 = vunpack.c.h.b16 %v1323
    %v1916 = vunpack.c.l.b16 %v1324
    %v1917 = vunpack.c.h.b16 %v1324
    %v1918 = vunpack.c.l.b16 %v1325
    %v1919 = vunpack.c.h.b16 %v1325
    %v1920 = vunpack.c.l.b16 %v1326
    %v1921 = vunpack.c.h.b16 %v1326
    %v1922 = vunpack.c.l.b16 %v1327
    %v1923 = vunpack.c.h.b16 %v1327
    %v1924 = vunpack.c.l.b16 %v1328
    %v1925 = vunpack.c.h.b16 %v1328
    %v1926 = vunpack.c.l.b16 %v1329
    %v1927 = vunpack.c.h.b16 %v1329
    %v1928 = vunpack.c.l.b16 %v1330
    %v1929 = vunpack.c.h.b16 %v1330
    %v1930 = vunpack.c.l.b16 %v1331
    %v1931 = vunpack.c.h.b16 %v1331
    %v1932 = vunpack.c.l.b16 %v1332
    %v1933 = vunpack.c.h.b16 %v1332
    %v1934 = vunpack.c.l.b16 %v1333
    %v1935 = vunpack.c.h.b16 %v1333
    %v1936 = vunpack.c.l.b16 %v1334
    %v1937 = vunpack.c.h.b16 %v1334
    %v1938 = vunpack.c.l.b16 %v1335
    %v1939 = vunpack.c.h.b16 %v1335
    %v1940 = vunpack.c.l.b16 %v1336
    %v1941 = vunpack.c.h.b16 %v1336
    %v1942 = vunpack.c.l.b16 %v1337
    %v1943 = vunpack.c.h.b16 %v1337
    %v1944 = vunpack.c.l.b16 %v1338
    %v1945 = vunpack.c.h.b16 %v1338
    %v1946 = vunpack.c.l.b16 %v1339
    %v1947 = vunpack.c.h.b16 %v1339
    %v1948 = vunpack.c.l.b16 %v1340
    %v1949 = vunpack.c.h.b16 %v1340
    %v1950 = vunpack.c.l.b16 %v1341
    %v1951 = vunpack.c.h.b16 %v1341
    %v1952 = vunpack.c.l.b16 %v1342
    %v1953 = vunpack.c.h.b16 %v1342
    %v1954 = vunpack.c.l.b16 %v1343
    %v1955 = vunpack.c.h.b16 %v1343
    %v1956 = vunpack.c.l.b16 %v1344
    %v1957 = vunpack.c.h.b16 %v1344
    %v1958 = vunpack.c.l.b16 %v1345
    %v1959 = vunpack.c.h.b16 %v1345
    %v1960 = vunpack.c.l.b16 %v1346
    %v1961 = vunpack.c.h.b16 %v1346
    %v1962 = vunpack.c.l.b16 %v1347
    %v1963 = vunpack.c.h.b16 %v1347
    %v1964 = vunpack.c.l.b16 %v1348
    %v1965 = vunpack.c.h.b16 %v1348
    %v1966 = vunpack.c.l.b16 %v1349
    %v1967 = vunpack.c.h.b16 %v1349
    %v1968 = vunpack.c.l.b16 %v1350
    %v1969 = vunpack.c.h.b16 %v1350
    %v1970 = vunpack.c.l.b16 %v1351
    %v1971 = vunpack.c.h.b16 %v1351
    %v1972 = vunpack.c.l.b16 %v1352
    %v1973 = vunpack.c.h.b16 %v1352
    %v1974 = vunpack.c.l.b16 %v1353
    %v1975 = vunpack.c.h.b16 %v1353
    %v1976 = vunpack.c.l.b16 %v1354
    %v1977 = vunpack.c.h.b16 %v1354
    %v1978 = vunpack.c.l.b16 %v1355
    %v1979 = vunpack.c.h.b16 %v1355
    %v1980 = vunpack.c.l.b16 %v1356
    %v1981 = vunpack.c.h.b16 %v1356
    %v1982 = vunpack.c.l.b16 %v1357
    %v1983 = vunpack.c.h.b16 %v1357
    %v1984 = vunpack.c.l.b16 %v1358
    %v1985 = vunpack.c.h.b16 %v1358
    %v1986 = vunpack.c.l.b16 %v1359
    %v1987 = vunpack.c.h.b16 %v1359
    %v1988 = vunpack.c.l.b16 %v1360
    %v1989 = vunpack.c.h.b16 %v1360
    %v1990 = vunpack.c.l.b16 %v1361
    %v1991 = vunpack.c.h.b16 %v1361
    %v1992 = vunpack.c.l.b16 %v1362
    %v1993 = vunpack.c.h.b16 %v1362
    %v1994 = vunpack.c.l.b16 %v1363
    %v1995 = vunpack.c.h.b16 %v1363
    %v1996 = vunpack.c.l.b16 %v1364
    %v1997 = vunpack.c.h.b16 %v1364
    %v1998 = vunpack.c.l.b16 %v1365
    %v1999 = vunpack.c.h.b16 %v1365
    %v2000 = vunpack.c.l.b16 %v1366
    %v2001 = vunpack.c.h.b16 %v1366
    %v2002 = vunpack.c.l.b16 %v1367
    %v2003 = vunpack.c.h.b16 %v1367
    %v2004 = vunpack.c.l.b16 %v1368
    %v2005 = vunpack.c.h.b16 %v1368
    %v2006 = vunpack.c.l.b16 %v1369
    %v2007 = vunpack.c.h.b16 %v1369
    %v2008 = vunpack.c.l.b16 %v1370
    %v2009 = vunpack.c.h.b16 %v1370
    %v2010 = vunpack.c.l.b16 %v1371
    %v2011 = vunpack.c.h.b16 %v1371
    %v2012 = vunpack.c.l.b16 %v1372
    %v2013 = vunpack.c.h.b16 %v1372
    %v2014 = vunpack.c.l.b16 %v1373
    %v2015 = vunpack.c.h.b16 %v1373
    %v2016 = vunpack.c.l.b16 %v1374
    %v2017 = vunpack.c.h.b16 %v1374
    %v2018 = vunpack.c.l.b16 %v1375
    %v2019 = vunpack.c.h.b16 %v1375
    %v2020 = vunpack.c.l.b16 %v1376
    %v2021 = vunpack.c.h.b16 %v1376
    %v2022 = vunpack.c.l.b16 %v1377
    %v2023 = vunpack.c.h.b16 %v1377
    %v2024 = vunpack.c.l.b16 %v1378
    %v2025 = vunpack.c.h.b16 %v1378
    %v2026 = vunpack.c.l.b16 %v1379
    %v2027 = vunpack.c.h.b16 %v1379
    %v2028 = vunpack.c.l.b16 %v1380
    %v2029 = vunpack.c.h.b16 %v1380
    %v2030 = vunpack.c.l.b16 %v1381
    %v2031 = vunpack.c.h.b16 %v1381
    %v2032 = vunpack.c.l.b16 %v1382
    %v2033 = vunpack.c.h.b16 %v1382
    %v2034 = vunpack.c.l.b16 %v1383
    %v2035 = vunpack.c.h.b16 %v1383
    %v2036 = vunpack.c.l.b16 %v1384
    %v2037 = vunpack.c.h.b16 %v1384
    %v2038 = vunpack.c.l.b16 %v1385
    %v2039 = vunpack.c.h.b16 %v1385
    %v2040 = vunpack.c.l.b16 %v1386
    %v2041 = vunpack.c.h.b16 %v1386
    %v2042 = vunpack.c.l.b16 %v1387
    %v2043 = vunpack.c.h.b16 %v1387
    %v2044 = vunpack.c.l.b16 %v1388
    %v2045 = vunpack.c.h.b16 %v1388
    %v2046 = vunpack.c.l.b16 %v1389
    %v2047 = vunpack.c.h.b16 %v1389
    %v2048 = vunpack.c.l.b16 %v1390
    %v2049 = vunpack.c.h.b16 %v1390
    %v2050 = vunpack.c.l.b16 %v1391
    %v2051 = vunpack.c.h.b16 %v1391
    %v2052 = vunpack.c.l.b16 %v1392
    %v2053 = vunpack.c.h.b16 %v1392
    %v2054 = vunpack.c.l.b16 %v1393
    %v2055 = vunpack.c.h.b16 %v1393
    %v2056 = vunpack.c.l.b16 %v1394
    %v2057 = vunpack.c.h.b16 %v1394
    %v2058 = vunpack.c.l.b16 %v1395
    %v2059 = vunpack.c.h.b16 %v1395
    %v2060 = vunpack.c.l.b16 %v1396
    %v2061 = vunpack.c.h.b16 %v1396
    %v2062 = vunpack.c.l.b16 %v1397
    %v2063 = vunpack.c.h.b16 %v1397
    %v2064 = vunpack.c.l.b16 %v1398
    %v2065 = vunpack.c.h.b16 %v1398
    %v2066 = vunpack.c.l.b16 %v1399
    %v2067 = vunpack.c.h.b16 %v1399
    %v2068 = vunpack.c.l.b16 %v1400
    %v2069 = vunpack.c.h.b16 %v1400
    %v2070 = vunpack.c.l.b16 %v1401
    %v2071 = vunpack.c.h.b16 %v1401
    %v2072 = vunpack.c.l.b16 %v1402
    %v2073 = vunpack.c.h.b16 %v1402
    %v2074 = vunpack.c.l.b16 %v1403
    %v2075 = vunpack.c.h.b16 %v1403
    %v2076 = vunpack.c.l.b16 %v1404
    %v2077 = vunpack.c.h.b16 %v1404
    %v2078 = vunpack.c.l.b16 %v1405
    %v2079 = vunpack.c.h.b16 %v1405
    %v2080 = vunpack.c.l.b16 %v1406
    %v2081 = vunpack.c.h.b16 %v1406
    %v2082 = vunpack.c.l.b16 %v1407
    %v2083 = vunpack.c.h.b16 %v1407
    %v2084 = vunpack.c.l.b16 %v1408
    %v2085 = vunpack.c.h.b16 %v1408
    %v2086 = vunpack.c.l.b16 %v1409
    %v2087 = vunpack.c.h.b16 %v1409
    %v2088 = vunpack.c.l.b16 %v1410
    %v2089 = vunpack.c.h.b16 %v1410
    %v2090 = vunpack.c.l.b16 %v1411
    %v2091 = vunpack.c.h.b16 %v1411
    %v2092 = vunpack.c.l.b16 %v1412
    %v2093 = vunpack.c.h.b16 %v1412
    %v2094 = vunpack.c.l.b16 %v1413
    %v2095 = vunpack.c.h.b16 %v1413
    %v2096 = vunpack.c.l.b16 %v1414
    %v2097 = vunpack.c.h.b16 %v1414
    %v2098 = vunpack.c.l.b16 %v1415
    %v2099 = vunpack.c.h.b16 %v1415
    %v2100 = vunpack.c.l.b16 %v1416
    %v2101 = vunpack.c.h.b16 %v1416
    %v2102 = vunpack.c.l.b16 %v1417
    %v2103 = vunpack.c.h.b16 %v1417
    %v2104 = vunpack.c.l.b16 %v1418
    %v2105 = vunpack.c.h.b16 %v1418
    %v2106 = vunpack.c.l.b16 %v1419
    %v2107 = vunpack.c.h.b16 %v1419
    %v2108 = vunpack.c.l.b16 %v1420
    %v2109 = vunpack.c.h.b16 %v1420
    %v2110 = vunpack.c.l.b16 %v1421
    %v2111 = vunpack.c.h.b16 %v1421
    %v2112 = vunpack.c.l.b16 %v1422
    %v2113 = vunpack.c.h.b16 %v1422
    %v2114 = vunpack.c.l.b16 %v1423
    %v2115 = vunpack.c.h.b16 %v1423
    %v2116 = vunpack.c.l.b16 %v1424
    %v2117 = vunpack.c.h.b16 %v1424
    %v2118 = vunpack.c.l.b16 %v1425
    %v2119 = vunpack.c.h.b16 %v1425
    %v2120 = vunpack.c.l.b16 %v1426
    %v2121 = vunpack.c.h.b16 %v1426
    %v2122 = vunpack.c.l.b16 %v1427
    %v2123 = vunpack.c.h.b16 %v1427
    %v2124 = vunpack.c.l.b16 %v1428
    %v2125 = vunpack.c.h.b16 %v1428
    %v2126 = vunpack.c.l.b16 %v1429
    %v2127 = vunpack.c.h.b16 %v1429
    %v2128 = vunpack.c.l.b16 %v1430
    %v2129 = vunpack.c.h.b16 %v1430
    %v2130 = vunpack.c.l.b16 %v1431
    %v2131 = vunpack.c.h.b16 %v1431
    %v2132 = vunpack.c.l.b16 %v1432
    %v2133 = vunpack.c.h.b16 %v1432
    %v2134 = vunpack.c.l.b16 %v1433
    %v2135 = vunpack.c.h.b16 %v1433
    %v2136 = vunpack.c.l.b16 %v1434
    %v2137 = vunpack.c.h.b16 %v1434
    %v2138 = vunpack.c.l.b16 %v1435
    %v2139 = vunpack.c.h.b16 %v1435
    %v2140 = vunpack.c.l.b16 %v1436
    %v2141 = vunpack.c.h.b16 %v1436
    %v2142 = vunpack.c.l.b16 %v1437
    %v2143 = vunpack.c.h.b16 %v1437
    %v2144 = vunpack.c.l.b16 %v1438
    %v2145 = vunpack.c.h.b16 %v1438
    %v2146 = vunpack.c.l.b16 %v1439
    %v2147 = vunpack.c.h.b16 %v1439
    %v2148 = vunpack.c.l.b16 %v1440
    %v2149 = vunpack.c.h.b16 %v1440
    %v2150 = vunpack.c.l.b16 %v1441
    %v2151 = vunpack.c.h.b16 %v1441
    %v2152 = vunpack.c.l.b16 %v1442
    %v2153 = vunpack.c.h.b16 %v1442
    %v2154 = vunpack.c.l.b16 %v1443
    %v2155 = vunpack.c.h.b16 %v1443
    %v2156 = vunpack.c.l.b16 %v1444
    %v2157 = vunpack.c.h.b16 %v1444
    %v2158 = vunpack.c.l.b16 %v1445
    %v2159 = vunpack.c.h.b16 %v1445
    %v2160 = vunpack.c.l.b16 %v1446
    %v2161 = vunpack.c.h.b16 %v1446
    %v2162 = vunpack.c.l.b16 %v1447
    %v2163 = vunpack.c.h.b16 %v1447
    %v2164 = vunpack.c.l.b16 %v1448
    %v2165 = vunpack.c.h.b16 %v1448
    %v2166 = vunpack.c.l.b16 %v1449
    %v2167 = vunpack.c.h.b16 %v1449
    %v2168 = vunpack.c.l.b16 %v1450
    %v2169 = vunpack.c.h.b16 %v1450
    %v2170 = vunpack.c.l.b16 %v1451
    %v2171 = vunpack.c.h.b16 %v1451
    %v2172 = vunpack.c.l.b16 %v1452
    %v2173 = vunpack.c.h.b16 %v1452
    %v2174 = vunpack.c.l.b16 %v1453
    %v2175 = vunpack.c.h.b16 %v1453
    %v2176 = vunpack.c.l.b16 %v1454
    %v2177 = vunpack.c.h.b16 %v1454
    %v2178 = vunpack.c.l.b16 %v1455
    %v2179 = vunpack.c.h.b16 %v1455
    %v2180 = vunpack.c.l.b16 %v1456
    %v2181 = vunpack.c.h.b16 %v1456
    %v2182 = vunpack.c.l.b16 %v1457
    %v2183 = vunpack.c.h.b16 %v1457
    %v2184 = vunpack.c.l.b16 %v1458
    %v2185 = vunpack.c.h.b16 %v1458
    %v2186 = vunpack.c.l.b16 %v1459
    %v2187 = vunpack.c.h.b16 %v1459
    %v2188 = vunpack.c.l.b16 %v1460
    %v2189 = vunpack.c.h.b16 %v1460
    %v2190 = vunpack.c.l.b16 %v1461
    %v2191 = vunpack.c.h.b16 %v1461
    %v2192 = vunpack.c.l.b16 %v1462
    %v2193 = vunpack.c.h.b16 %v1462
    %v2194 = vunpack.c.l.b16 %v1463
    %v2195 = vunpack.c.h.b16 %v1463
    %v2196 = vunpack.c.l.b16 %v1464
    %v2197 = vunpack.c.h.b16 %v1464
    %v2198 = vunpack.c.l.b16 %v1465
    %v2199 = vunpack.c.h.b16 %v1465
    %v2200 = vunpack.c.l.b16 %v1466
    %v2201 = vunpack.c.h.b16 %v1466
    %v2202 = vunpack.c.l.b16 %v1467
    %v2203 = vunpack.c.h.b16 %v1467
    %v2204 = vunpack.c.l.b16 %v1468
    %v2205 = vunpack.c.h.b16 %v1468
    %v2206 = vunpack.c.l.b16 %v1469
    %v2207 = vunpack.c.h.b16 %v1469
    %v2208 = vunpack.c.l.b16 %v1470
    %v2209 = vunpack.c.h.b16 %v1470
    %v2210 = vunpack.c.l.b16 %v1471
    %v2211 = vunpack.c.h.b16 %v1471
    %v2212 = vunpack.c.l.b16 %v1472
    %v2213 = vunpack.c.h.b16 %v1472
    %v2214 = vunpack.c.l.b16 %v1473
    %v2215 = vunpack.c.h.b16 %v1473
    %v2216 = vunpack.c.l.b16 %v1474
    %v2217 = vunpack.c.h.b16 %v1474
    %v2218 = vunpack.c.l.b16 %v1475
    %v2219 = vunpack.c.h.b16 %v1475
    %v2220 = vunpack.c.l.b16 %v1476
    %v2221 = vunpack.c.h.b16 %v1476
    %v2222 = vunpack.c.l.b16 %v1477
    %v2223 = vunpack.c.h.b16 %v1477
    %v2224 = vunpack.c.l.b16 %v1478
    %v2225 = vunpack.c.h.b16 %v1478
    %v2226 = vunpack.c.l.b16 %v1479
    %v2227 = vunpack.c.h.b16 %v1479
    %v2228 = vunpack.c.l.b16 %v1480
    %v2229 = vunpack.c.h.b16 %v1480
    %v2230 = vunpack.c.l.b16 %v1481
    %v2231 = vunpack.c.h.b16 %v1481
    %v2232 = vunpack.c.l.b16 %v1482
    %v2233 = vunpack.c.h.b16 %v1482
    %v2234 = vunpack.c.l.b16 %v1483
    %v2235 = vunpack.c.h.b16 %v1483
    %v2236 = vunpack.c.l.b16 %v1484
    %v2237 = vunpack.c.h.b16 %v1484
    %v2238 = vunpack.c.l.b16 %v1485
    %v2239 = vunpack.c.h.b16 %v1485
    %v2240 = vunpack.c.l.b16 %v1486
    %v2241 = vunpack.c.h.b16 %v1486
    %v2242 = vunpack.c.l.b16 %v1487
    %v2243 = vunpack.c.h.b16 %v1487
    %v2244 = vunpack.c.l.b16 %v1488
    %v2245 = vunpack.c.h.b16 %v1488
    %v2246 = vunpack.c.l.b16 %v1489
    %v2247 = vunpack.c.h.b16 %v1489
    %v2248 = vunpack.c.l.b16 %v1490
    %v2249 = vunpack.c.h.b16 %v1490
    %v2250 = vunpack.c.l.b16 %v1491
    %v2251 = vunpack.c.h.b16 %v1491
    %v2252 = vunpack.c.l.b16 %v1492
    %v2253 = vunpack.c.h.b16 %v1492
    %v2254 = vunpack.c.l.b16 %v1493
    %v2255 = vunpack.c.h.b16 %v1493
    %v2256 = vunpack.c.l.b16 %v1494
    %v2257 = vunpack.c.h.b16 %v1494
    %v2258 = vunpack.c.l.b16 %v1495
    %v2259 = vunpack.c.h.b16 %v1495
    %v2260 = vunpack.c.l.b16 %v1496
    %v2261 = vunpack.c.h.b16 %v1496
    %v2262 = vunpack.c.l.b16 %v1497
    %v2263 = vunpack.c.h.b16 %v1497
    %v2264 = vunpack.c.l.b16 %v1498
    %v2265 = vunpack.c.h.b16 %v1498
    %v2266 = vunpack.c.l.b16 %v1499
    %v2267 = vunpack.c.h.b16 %v1499
    %v2268 = vpack.c.b16 %v1764, %v1756
    %v2269 = vpack.c.b16 %v1765, %v1757
    %v2270 = vpack.c.b16 %v1766, %v1758
    %v2271 = vpack.c.b16 %v1767, %v1759
    %v2272 = vpack.c.b16 %v1768, %v1760
    %v2273 = vpack.c.b16 %v1769, %v1761
    %v2274 = vpack.c.b16 %v1770, %v1762
    %v2275 = vpack.c.b16 %v1771, %v1763
    %v2276 = vpack.c.b16 %v1780, %v1772
    %v2277 = vpack.c.b16 %v1781, %v1773
    %v2278 = vpack.c.b16 %v1782, %v1774
    %v2279 = vpack.c.b16 %v1783, %v1775
    %v2280 = vpack.c.b16 %v1784, %v1776
    %v2281 = vpack.c.b16 %v1785, %v1777
    %v2282 = vpack.c.b16 %v1786, %v1778
    %v2283 = vpack.c.b16 %v1787, %v1779
    %v2284 = vpack.c.b16 %v1796, %v1788
    %v2285 = vpack.c.b16 %v1797, %v1789
    %v2286 = vpack.c.b16 %v1798, %v1790
    %v2287 = vpack.c.b16 %v1799, %v1791
    %v2288 = vpack.c.b16 %v1800, %v1792
    %v2289 = vpack.c.b16 %v1801, %v1793
    %v2290 = vpack.c.b16 %v1802, %v1794
    %v2291 = vpack.c.b16 %v1803, %v1795
    %v2292 = vpack.c.b16 %v1812, %v1804
    %v2293 = vpack.c.b16 %v1813, %v1805
    %v2294 = vpack.c.b16 %v1814, %v1806
    %v2295 = vpack.c.b16 %v1815, %v1807
    %v2296 = vpack.c.b16 %v1816, %v1808
    %v2297 = vpack.c.b16 %v1817, %v1809
    %v2298 = vpack.c.b16 %v1818, %v1810
    %v2299 = vpack.c.b16 %v1819, %v1811
    %v2300 = vpack.c.b16 %v1828, %v1820
    %v2301 = vpack.c.b16 %v1829, %v1821
    %v2302 = vpack.c.b16 %v1830, %v1822
    %v2303 = vpack.c.b16 %v1831, %v1823
    %v2304 = vpack.c.b16 %v1832, %v1824
    %v2305 = vpack.c.b16 %v1833, %v1825
    %v2306 = vpack.c.b16 %v1834, %v1826
    %v2307 = vpack.c.b16 %v1835, %v1827
    %v2308 = vpack.c.b16 %v1844, %v1836
    %v2309 = vpack.c.b16 %v1845, %v1837
    %v2310 = vpack.c.b16 %v1846, %v1838
    %v2311 = vpack.c.b16 %v1847, %v1839
    %v2312 = vpack.c.b16 %v1848, %v1840
    %v2313 = vpack.c.b16 %v1849, %v1841
    %v2314 = vpack.c.b16 %v1850, %v1842
    %v2315 = vpack.c.b16 %v1851, %v1843
    %v2316 = vpack.c.b16 %v1860, %v1852
    %v2317 = vpack.c.b16 %v1861, %v1853
    %v2318 = vpack.c.b16 %v1862, %v1854
    %v2319 = vpack.c.b16 %v1863, %v1855
    %v2320 = vpack.c.b16 %v1864, %v1856
    %v2321 = vpack.c.b16 %v1865, %v1857
    %v2322 = vpack.c.b16 %v1866, %v1858
    %v2323 = vpack.c.b16 %v1867, %v1859
    %v2324 = vpack.c.b16 %v1876, %v1868
    %v2325 = vpack.c.b16 %v1877, %v1869
    %v2326 = vpack.c.b16 %v1878, %v1870
    %v2327 = vpack.c.b16 %v1879, %v1871
    %v2328 = vpack.c.b16 %v1880, %v1872
    %v2329 = vpack.c.b16 %v1881, %v1873
    %v2330 = vpack.c.b16 %v1882, %v1874
    %v2331 = vpack.c.b16 %v1883, %v1875
    %v2332 = vpack.c.b16 %v1892, %v1884
    %v2333 = vpack.c.b16 %v1893, %v1885
    %v2334 = vpack.c.b16 %v1894, %v1886
    %v2335 = vpack.c.b16 %v1895, %v1887
    %v2336 = vpack.c.b16 %v1896, %v1888
    %v2337 = vpack.c.b16 %v1897, %v1889
    %v2338 = vpack.c.b16 %v1898, %v1890
    %v2339 = vpack.c.b16 %v1899, %v1891
    %v2340 = vpack.c.b16 %v1908, %v1900
    %v2341 = vpack.c.b16 %v1909, %v1901
    %v2342 = vpack.c.b16 %v1910, %v1902
    %v2343 = vpack.c.b16 %v1911, %v1903
    %v2344 = vpack.c.b16 %v1912, %v1904
    %v2345 = vpack.c.b16 %v1913, %v1905
    %v2346 = vpack.c.b16 %v1914, %v1906
    %v2347 = vpack.c.b16 %v1915, %v1907
    %v2348 = vpack.c.b16 %v1924, %v1916
    %v2349 = vpack.c.b16 %v1925, %v1917
    %v2350 = vpack.c.b16 %v1926, %v1918
    %v2351 = vpack.c.b16 %v1927, %v1919
    %v2352 = vpack.c.b16 %v1928, %v1920
    %v2353 = vpack.c.b16 %v1929, %v1921
    %v2354 = vpack.c.b16 %v1930, %v1922
    %v2355 = vpack.c.b16 %v1931, %v1923
    %v2356 = vpack.c.b16 %v1940, %v1932
    %v2357 = vpack.c.b16 %v1941, %v1933
    %v2358 = vpack.c.b16 %v1942, %v1934
    %v2359 = vpack.c.b16 %v1943, %v1935
    %v2360 = vpack.c.b16 %v1944, %v1936
    %v2361 = vpack.c.b16 %v1945, %v1937
    %v2362 = vpack.c.b16 %v1946, %v1938
    %v2363 = vpack.c.b16 %v1947, %v1939
    %v2364 = vpack.c.b16 %v1956, %v1948
    %v2365 = vpack.c.b16 %v1957, %v1949
    %v2366 = vpack.c.b16 %v1958, %v1950
    %v2367 = vpack.c.b16 %v1959, %v1951
    %v2368 = vpack.c.b16 %v1960, %v1952
    %v2369 = vpack.c.b16 %v1961, %v1953
    %v2370 = vpack.c.b16 %v1962, %v1954
    %v2371 = vpack.c.b16 %v1963, %v1955
    %v2372 = vpack.c.b16 %v1972, %v1964
    %v2373 = vpack.c.b16 %v1973, %v1965
    %v2374 = vpack.c.b16 %v1974, %v1966
    %v2375 = vpack.c.b16 %v1975, %v1967
    %v2376 = vpack.c.b16 %v1976, %v1968
    %v2377 = vpack.c.b16 %v1977, %v1969
    %v2378 = vpack.c.b16 %v1978, %v1970
    %v2379 = vpack.c.b16 %v1979, %v1971
    %v2380 = vpack.c.b16 %v1988, %v1980
    %v2381 = vpack.c.b16 %v1989, %v1981
    %v2382 = vpack.c.b16 %v1990, %v1982
    %v2383 = vpack.c.b16 %v1991, %v1983
    %v2384 = vpack.c.b16 %v1992, %v1984
    %v2385 = vpack.c.b16 %v1993, %v1985
    %v2386 = vpack.c.b16 %v1994, %v1986
    %v2387 = vpack.c.b16 %v1995, %v1987
    %v2388 = vpack.c.b16 %v2004, %v1996
    %v2389 = vpack.c.b16 %v2005, %v1997
    %v2390 = vpack.c.b16 %v2006, %v1998
    %v2391 = vpack.c.b16 %v2007, %v1999
    %v2392 = vpack.c.b16 %v2008, %v2000
    %v2393 = vpack.c.b16 %v2009, %v2001
    %v2394 = vpack.c.b16 %v2010, %v2002
    %v2395 = vpack.c.b16 %v2011, %v2003
    %v2396 = vpack.c.b16 %v2020, %v2012
    %v2397 = vpack.c.b16 %v2021, %v2013
    %v2398 = vpack.c.b16 %v2022, %v2014
    %v2399 = vpack.c.b16 %v2023, %v2015
    %v2400 = vpack.c.b16 %v2024, %v2016
    %v2401 = vpack.c.b16 %v2025, %v2017
    %v2402 = vpack.c.b16 %v2026, %v2018
    %v2403 = vpack.c.b16 %v2027, %v2019
    %v2404 = vpack.c.b16 %v2036, %v2028
    %v2405 = vpack.c.b16 %v2037, %v2029
    %v2406 = vpack.c.b16 %v2038, %v2030
    %v2407 = vpack.c.b16 %v2039, %v2031
    %v2408 = vpack.c.b16 %v2040, %v2032
    %v2409 = vpack.c.b16 %v2041, %v2033
    %v2410 = vpack.c.b16 %v2042, %v2034
    %v2411 = vpack.c.b16 %v2043, %v2035
    %v2412 = vpack.c.b16 %v2052, %v2044
    %v2413 = vpack.c.b16 %v2053, %v2045
    %v2414 = vpack.c.b16 %v2054, %v2046
    %v2415 = vpack.c.b16 %v2055, %v2047
    %v2416 = vpack.c.b16 %v2056, %v2048
    %v2417 = vpack.c.b16 %v2057, %v2049
    %v2418 = vpack.c.b16 %v2058, %v2050
    %v2419 = vpack.c.b16 %v2059, %v2051
    %v2420 = vpack.c.b16 %v2068, %v2060
    %v2421 = vpack.c.b16 %v2069, %v2061
    %v2422 = vpack.c.b16 %v2070, %v2062
    %v2423 = vpack.c.b16 %v2071, %v2063
    %v2424 = vpack.c.b16 %v2072, %v2064
    %v2425 = vpack.c.b16 %v2073, %v2065
    %v2426 = vpack.c.b16 %v2074, %v2066
    %v2427 = vpack.c.b16 %v2075, %v2067
    %v2428 = vpack.c.b16 %v2084, %v2076
    %v2429 = vpack.c.b16 %v2085, %v2077
    %v2430 = vpack.c.b16 %v2086, %v2078
    %v2431 = vpack.c.b16 %v2087, %v2079
    %v2432 = vpack.c.b16 %v2088, %v2080
    %v2433 = vpack.c.b16 %v2089, %v2081
    %v2434 = vpack.c.b16 %v2090, %v2082
    %v2435 = vpack.c.b16 %v2091, %v2083
    %v2436 = vpack.c.b16 %v2100, %v2092
    %v2437 = vpack.c.b16 %v2101, %v2093
    %v2438 = vpack.c.b16 %v2102, %v2094
    %v2439 = vpack.c.b16 %v2103, %v2095
    %v2440 = vpack.c.b16 %v2104, %v2096
    %v2441 = vpack.c.b16 %v2105, %v2097
    %v2442 = vpack.c.b16 %v2106, %v2098
    %v2443 = vpack.c.b16 %v2107, %v2099
    %v2444 = vpack.c.b16 %v2116, %v2108
    %v2445 = vpack.c.b16 %v2117, %v2109
    %v2446 = vpack.c.b16 %v2118, %v2110
    %v2447 = vpack.c.b16 %v2119, %v2111
    %v2448 = vpack.c.b16 %v2120, %v2112
    %v2449 = vpack.c.b16 %v2121, %v2113
    %v2450 = vpack.c.b16 %v2122, %v2114
    %v2451 = vpack.c.b16 %v2123, %v2115
    %v2452 = vpack.c.b16 %v2132, %v2124
    %v2453 = vpack.c.b16 %v2133, %v2125
    %v2454 = vpack.c.b16 %v2134, %v2126
    %v2455 = vpack.c.b16 %v2135, %v2127
    %v2456 = vpack.c.b16 %v2136, %v2128
    %v2457 = vpack.c.b16 %v2137, %v2129
    %v2458 = vpack.c.b16 %v2138, %v2130
    %v2459 = vpack.c.b16 %v2139, %v2131
    %v2460 = vpack.c.b16 %v2148, %v2140
    %v2461 = vpack.c.b16 %v2149, %v2141
    %v2462 = vpack.c.b16 %v2150, %v2142
    %v2463 = vpack.c.b16 %v2151, %v2143
    %v2464 = vpack.c.b16 %v2152, %v2144
    %v2465 = vpack.c.b16 %v2153, %v2145
    %v2466 = vpack.c.b16 %v2154, %v2146
    %v2467 = vpack.c.b16 %v2155, %v2147
    %v2468 = vpack.c.b16 %v2164, %v2156
    %v2469 = vpack.c.b16 %v2165, %v2157
    %v2470 = vpack.c.b16 %v2166, %v2158
    %v2471 = vpack.c.b16 %v2167, %v2159
    %v2472 = vpack.c.b16 %v2168, %v2160
    %v2473 = vpack.c.b16 %v2169, %v2161
    %v2474 = vpack.c.b16 %v2170, %v2162
    %v2475 = vpack.c.b16 %v2171, %v2163
    %v2476 = vpack.c.b16 %v2180, %v2172
    %v2477 = vpack.c.b16 %v2181, %v2173
    %v2478 = vpack.c.b16 %v2182, %v2174
    %v2479 = vpack.c.b16 %v2183, %v2175
    %v2480 = vpack.c.b16 %v2184, %v2176
    %v2481 = vpack.c.b16 %v2185, %v2177
    %v2482 = vpack.c.b16 %v2186, %v2178
    %v2483 = vpack.c.b16 %v2187, %v2179
    %v2484 = vpack.c.b16 %v2196, %v2188
    %v2485 = vpack.c.b16 %v2197, %v2189
    %v2486 = vpack.c.b16 %v2198, %v2190
    %v2487 = vpack.c.b16 %v2199, %v2191
    %v2488 = vpack.c.b16 %v2200, %v2192
    %v2489 = vpack.c.b16 %v2201, %v2193
    %v2490 = vpack.c.b16 %v2202, %v2194
    %v2491 = vpack.c.b16 %v2203, %v2195
    %v2492 = vpack.c.b16 %v2212, %v2204
    %v2493 = vpack.c.b16 %v2213, %v2205
    %v2494 = vpack.c.b16 %v2214, %v2206
    %v2495 = vpack.c.b16 %v2215, %v2207
    %v2496 = vpack.c.b16 %v2216, %v2208
    %v2497 = vpack.c.b16 %v2217, %v2209
    %v2498 = vpack.c.b16 %v2218, %v2210
    %v2499 = vpack.c.b16 %v2219, %v2211
    %v2500 = vpack.c.b16 %v2228, %v2220
    %v2501 = vpack.c.b16 %v2229, %v2221
    %v2502 = vpack.c.b16 %v2230, %v2222
    %v2503 = vpack.c.b16 %v2231, %v2223
    %v2504 = vpack.c.b16 %v2232, %v2224
    %v2505 = vpack.c.b16 %v2233, %v2225
    %v2506 = vpack.c.b16 %v2234, %v2226
    %v2507 = vpack.c.b16 %v2235, %v2227
    %v2508 = vpack.c.b16 %v2244, %v2236
    %v2509 = vpack.c.b16 %v2245, %v2237
    %v2510 = vpack.c.b16 %v2246, %v2238
    %v2511 = vpack.c.b16 %v2247, %v2239
    %v2512 = vpack.c.b16 %v2248, %v2240
    %v2513 = vpack.c.b16 %v2249, %v2241
    %v2514 = vpack.c.b16 %v2250, %v2242
    %v2515 = vpack.c.b16 %v2251, %v2243
    %v2516 = vpack.c.b16 %v2260, %v2252
    %v2517 = vpack.c.b16 %v2261, %v2253
    %v2518 = vpack.c.b16 %v2262, %v2254
    %v2519 = vpack.c.b16 %v2263, %v2255
    %v2520 = vpack.c.b16 %v2264, %v2256
    %v2521 = vpack.c.b16 %v2265, %v2257
    %v2522 = vpack.c.b16 %v2266, %v2258
    %v2523 = vpack.c.b16 %v2267, %v2259
    %2780 = vmatprep.subr.bf16.mxu0 %v2269
    %2781 = vmatpush1.bf16.msra.mxu0 %v2268
    %2782 = vmatprep.subr.bf16.mxu0 %v2277
    %2783 = vmatpush1.bf16.msra.mxu0 %v2276
    %2784 = vmatprep.subr.bf16.mxu0 %v2285
    %2785 = vmatpush1.bf16.msra.mxu0 %v2284
    %2786 = vmatprep.subr.bf16.mxu0 %v2293
    %2787 = vmatpush1.bf16.msra.mxu0 %v2292
    %2788 = vmatprep.subr.bf16.mxu0 %v2301
    %2789 = vmatpush1.bf16.msra.mxu0 %v2300
    %2790 = vmatprep.subr.bf16.mxu0 %v2309
    %2791 = vmatpush1.bf16.msra.mxu0 %v2308
    %2792 = vmatprep.subr.bf16.mxu0 %v2317
    %2793 = vmatpush1.bf16.msra.mxu0 %v2316
    %2794 = vmatprep.subr.bf16.mxu0 %v2325
    %2795 = vmatpush1.bf16.msra.mxu0 %v2324
    %2796 = vmatprep.subr.bf16.mxu0 %v2333
    %2797 = vmatpush1.bf16.msra.mxu0 %v2332
    %2798 = vmatprep.subr.bf16.mxu0 %v2341
    %2799 = vmatpush1.bf16.msra.mxu0 %v2340
    %2800 = vmatprep.subr.bf16.mxu0 %v2349
    %2801 = vmatpush1.bf16.msra.mxu0 %v2348
    %2802 = vmatprep.subr.bf16.mxu0 %v2357
    %2803 = vmatpush1.bf16.msra.mxu0 %v2356
    %2804 = vmatprep.subr.bf16.mxu0 %v2365
    %2805 = vmatpush1.bf16.msra.mxu0 %v2364
    %2806 = vmatprep.subr.bf16.mxu0 %v2373
    %2807 = vmatpush1.bf16.msra.mxu0 %v2372
    %2808 = vmatprep.subr.bf16.mxu0 %v2381
    %2809 = vmatpush1.bf16.msra.mxu0 %v2380
    %2810 = vmatprep.subr.bf16.mxu0 %v2389
    %2811 = vmatpush1.bf16.msra.mxu0 %v2388
    %2812 = vmatprep.mubr.bf16.mxu0 %v1241
    %2813 = vmatmul.mubr.bf16.gmra.mrb[0].mxu0 %v1240
    %v2814 = vpop.f32.mrb[0].mxu0
    %v2815 = vadd.f32 0.0, %v2814
    %v2816 = vpop.f32.mrb[0].mxu0
    %v2817 = vadd.f32 0.0, %v2816
    %v2818 = vpop.f32.mrb[0].mxu0
    %v2819 = vpop.f32.mrb[0].mxu0
    %2820 = vdwg.mxu0
    %2821 = vmatprep.subr.bf16.mxu0 %v2397
    %2822 = vmatpush1.bf16.msra.mxu0 %v2396
    %2823 = vmatprep.subr.bf16.mxu0 %v2405
    %2824 = vmatpush1.bf16.msra.mxu0 %v2404
    %2825 = vmatprep.subr.bf16.mxu0 %v2413
    %2826 = vmatpush1.bf16.msra.mxu0 %v2412
    %2827 = vmatprep.subr.bf16.mxu0 %v2421
    %2828 = vmatpush1.bf16.msra.mxu0 %v2420
    %2829 = vmatprep.subr.bf16.mxu0 %v2429
    %2830 = vmatpush1.bf16.msra.mxu0 %v2428
    %2831 = vmatprep.subr.bf16.mxu0 %v2437
    %2832 = vmatpush1.bf16.msra.mxu0 %v2436
    %2833 = vmatprep.subr.bf16.mxu0 %v2445
    %2834 = vmatpush1.bf16.msra.mxu0 %v2444
    %2835 = vmatprep.subr.bf16.mxu0 %v2453
    %2836 = vmatpush1.bf16.msra.mxu0 %v2452
    %2837 = vmatprep.subr.bf16.mxu0 %v2461
    %2838 = vmatpush1.bf16.msra.mxu0 %v2460
    %2839 = vmatprep.subr.bf16.mxu0 %v2469
    %2840 = vmatpush1.bf16.msra.mxu0 %v2468
    %2841 = vmatprep.subr.bf16.mxu0 %v2477
    %2842 = vmatpush1.bf16.msra.mxu0 %v2476
    %2843 = vmatprep.subr.bf16.mxu0 %v2485
    %2844 = vmatpush1.bf16.msra.mxu0 %v2484
    %2845 = vmatprep.subr.bf16.mxu0 %v2493
    %2846 = vmatpush1.bf16.msra.mxu0 %v2492
    %2847 = vmatprep.subr.bf16.mxu0 %v2501
    %2848 = vmatpush1.bf16.msra.mxu0 %v2500
    %2849 = vmatprep.subr.bf16.mxu0 %v2509
    %2850 = vmatpush1.bf16.msra.mxu0 %v2508
    %2851 = vmatprep.subr.bf16.mxu0 %v2517
    %2852 = vmatpush1.bf16.msra.mxu0 %v2516
    %2853 = vmatprep.mubr.bf16.mxu0 %v1243
    %2854 = vmatmul.mubr.bf16.gmra.mrb[0].mxu0 %v1242
    %v2855 = vpop.f32.mrb[0].mxu0
    %v2856 = vadd.f32 %v2815, %v2855
    %v2857 = vpop.f32.mrb[0].mxu0
    %v2858 = vadd.f32 %v2817, %v2857
    %v2859 = vpop.f32.mrb[0].mxu0
    %v2860 = vpop.f32.mrb[0].mxu0
    %2861 = vdwg.mxu0
    %2862 = vmatprep.subr.bf16.mxu0 %v2271
    %2863 = vmatpush1.bf16.msra.mxu0 %v2270
    %2864 = vmatprep.subr.bf16.mxu0 %v2279
    %2865 = vmatpush1.bf16.msra.mxu0 %v2278
    %2866 = vmatprep.subr.bf16.mxu0 %v2287
    %2867 = vmatpush1.bf16.msra.mxu0 %v2286
    %2868 = vmatprep.subr.bf16.mxu0 %v2295
    %2869 = vmatpush1.bf16.msra.mxu0 %v2294
    %2870 = vmatprep.subr.bf16.mxu0 %v2303
    %2871 = vmatpush1.bf16.msra.mxu0 %v2302
    %2872 = vmatprep.subr.bf16.mxu0 %v2311
    %2873 = vmatpush1.bf16.msra.mxu0 %v2310
    %2874 = vmatprep.subr.bf16.mxu0 %v2319
    %2875 = vmatpush1.bf16.msra.mxu0 %v2318
    %2876 = vmatprep.subr.bf16.mxu0 %v2327
    %2877 = vmatpush1.bf16.msra.mxu0 %v2326
    %2878 = vmatprep.subr.bf16.mxu0 %v2335
    %2879 = vmatpush1.bf16.msra.mxu0 %v2334
    %2880 = vmatprep.subr.bf16.mxu0 %v2343
    %2881 = vmatpush1.bf16.msra.mxu0 %v2342
    %2882 = vmatprep.subr.bf16.mxu0 %v2351
    %2883 = vmatpush1.bf16.msra.mxu0 %v2350
    %2884 = vmatprep.subr.bf16.mxu0 %v2359
    %2885 = vmatpush1.bf16.msra.mxu0 %v2358
    %2886 = vmatprep.subr.bf16.mxu0 %v2367
    %2887 = vmatpush1.bf16.msra.mxu0 %v2366
    %2888 = vmatprep.subr.bf16.mxu0 %v2375
    %2889 = vmatpush1.bf16.msra.mxu0 %v2374
    %2890 = vmatprep.subr.bf16.mxu0 %v2383
    %2891 = vmatpush1.bf16.msra.mxu0 %v2382
    %2892 = vmatprep.subr.bf16.mxu0 %v2391
    %2893 = vmatpush1.bf16.msra.mxu0 %v2390
    %2894 = vmatprep.mubr.bf16.mxu0 %v1241
    %2895 = vmatmul.mubr.bf16.gmra.mrb[0].mxu0 %v1240
    %v2896 = vpop.f32.mrb[0].mxu0
    %v2897 = vadd.f32 0.0, %v2896
    %v2898 = vpop.f32.mrb[0].mxu0
    %v2899 = vadd.f32 0.0, %v2898
    %v2900 = vpop.f32.mrb[0].mxu0
    %v2901 = vpop.f32.mrb[0].mxu0
    %2902 = vdwg.mxu0
    %2903 = vmatprep.subr.bf16.mxu0 %v2399
    %2904 = vmatpush1.bf16.msra.mxu0 %v2398
    %2905 = vmatprep.subr.bf16.mxu0 %v2407
    %2906 = vmatpush1.bf16.msra.mxu0 %v2406
    %2907 = vmatprep.subr.bf16.mxu0 %v2415
    %2908 = vmatpush1.bf16.msra.mxu0 %v2414
    %2909 = vmatprep.subr.bf16.mxu0 %v2423
    %2910 = vmatpush1.bf16.msra.mxu0 %v2422
    %2911 = vmatprep.subr.bf16.mxu0 %v2431
    %2912 = vmatpush1.bf16.msra.mxu0 %v2430
    %2913 = vmatprep.subr.bf16.mxu0 %v2439
    %2914 = vmatpush1.bf16.msra.mxu0 %v2438
    %2915 = vmatprep.subr.bf16.mxu0 %v2447
    %2916 = vmatpush1.bf16.msra.mxu0 %v2446
    %2917 = vmatprep.subr.bf16.mxu0 %v2455
    %2918 = vmatpush1.bf16.msra.mxu0 %v2454
    %2919 = vmatprep.subr.bf16.mxu0 %v2463
    %2920 = vmatpush1.bf16.msra.mxu0 %v2462
    %2921 = vmatprep.subr.bf16.mxu0 %v2471
    %2922 = vmatpush1.bf16.msra.mxu0 %v2470
    %2923 = vmatprep.subr.bf16.mxu0 %v2479
    %2924 = vmatpush1.bf16.msra.mxu0 %v2478
    %2925 = vmatprep.subr.bf16.mxu0 %v2487
    %2926 = vmatpush1.bf16.msra.mxu0 %v2486
    %2927 = vmatprep.subr.bf16.mxu0 %v2495
    %2928 = vmatpush1.bf16.msra.mxu0 %v2494
    %2929 = vmatprep.subr.bf16.mxu0 %v2503
    %2930 = vmatpush1.bf16.msra.mxu0 %v2502
    %2931 = vmatprep.subr.bf16.mxu0 %v2511
    %2932 = vmatpush1.bf16.msra.mxu0 %v2510
    %2933 = vmatprep.subr.bf16.mxu0 %v2519
    %2934 = vmatpush1.bf16.msra.mxu0 %v2518
    %2935 = vmatprep.mubr.bf16.mxu0 %v1243
    %2936 = vmatmul.mubr.bf16.gmra.mrb[0].mxu0 %v1242
    %v2937 = vpop.f32.mrb[0].mxu0
    %v2938 = vadd.f32 %v2897, %v2937
    %v2939 = vpop.f32.mrb[0].mxu0
    %v2940 = vadd.f32 %v2899, %v2939
    %v2941 = vpop.f32.mrb[0].mxu0
    %v2942 = vpop.f32.mrb[0].mxu0
    %2943 = vdwg.mxu0
    %2944 = vmatprep.subr.bf16.mxu0 %v2273
    %2945 = vmatpush1.bf16.msra.mxu0 %v2272
    %2946 = vmatprep.subr.bf16.mxu0 %v2281
    %2947 = vmatpush1.bf16.msra.mxu0 %v2280
    %2948 = vmatprep.subr.bf16.mxu0 %v2289
    %2949 = vmatpush1.bf16.msra.mxu0 %v2288
    %2950 = vmatprep.subr.bf16.mxu0 %v2297
    %2951 = vmatpush1.bf16.msra.mxu0 %v2296
    %2952 = vmatprep.subr.bf16.mxu0 %v2305
    %2953 = vmatpush1.bf16.msra.mxu0 %v2304
    %2954 = vmatprep.subr.bf16.mxu0 %v2313
    %2955 = vmatpush1.bf16.msra.mxu0 %v2312
    %2956 = vmatprep.subr.bf16.mxu0 %v2321
    %2957 = vmatpush1.bf16.msra.mxu0 %v2320
    %2958 = vmatprep.subr.bf16.mxu0 %v2329
    %2959 = vmatpush1.bf16.msra.mxu0 %v2328
    %2960 = vmatprep.subr.bf16.mxu0 %v2337
    %2961 = vmatpush1.bf16.msra.mxu0 %v2336
    %2962 = vmatprep.subr.bf16.mxu0 %v2345
    %2963 = vmatpush1.bf16.msra.mxu0 %v2344
    %2964 = vmatprep.subr.bf16.mxu0 %v2353
    %2965 = vmatpush1.bf16.msra.mxu0 %v2352
    %2966 = vmatprep.subr.bf16.mxu0 %v2361
    %2967 = vmatpush1.bf16.msra.mxu0 %v2360
    %2968 = vmatprep.subr.bf16.mxu0 %v2369
    %2969 = vmatpush1.bf16.msra.mxu0 %v2368
    %2970 = vmatprep.subr.bf16.mxu0 %v2377
    %2971 = vmatpush1.bf16.msra.mxu0 %v2376
    %2972 = vmatprep.subr.bf16.mxu0 %v2385
    %2973 = vmatpush1.bf16.msra.mxu0 %v2384
    %2974 = vmatprep.subr.bf16.mxu0 %v2393
    %2975 = vmatpush1.bf16.msra.mxu0 %v2392
    %2976 = vmatprep.mubr.bf16.mxu0 %v1241
    %2977 = vmatmul.mubr.bf16.gmra.mrb[0].mxu0 %v1240
    %v2978 = vpop.f32.mrb[0].mxu0
    %v2979 = vadd.f32 0.0, %v2978
    %v2980 = vpop.f32.mrb[0].mxu0
    %v2981 = vadd.f32 0.0, %v2980
    %v2982 = vpop.f32.mrb[0].mxu0
    %v2983 = vpop.f32.mrb[0].mxu0
    %2984 = vdwg.mxu0
    %2985 = vmatprep.subr.bf16.mxu0 %v2401
    %2986 = vmatpush1.bf16.msra.mxu0 %v2400
    %2987 = vmatprep.subr.bf16.mxu0 %v2409
    %2988 = vmatpush1.bf16.msra.mxu0 %v2408
    %2989 = vmatprep.subr.bf16.mxu0 %v2417
    %2990 = vmatpush1.bf16.msra.mxu0 %v2416
    %2991 = vmatprep.subr.bf16.mxu0 %v2425
    %2992 = vmatpush1.bf16.msra.mxu0 %v2424
    %2993 = vmatprep.subr.bf16.mxu0 %v2433
    %2994 = vmatpush1.bf16.msra.mxu0 %v2432
    %2995 = vmatprep.subr.bf16.mxu0 %v2441
    %2996 = vmatpush1.bf16.msra.mxu0 %v2440
    %2997 = vmatprep.subr.bf16.mxu0 %v2449
    %2998 = vmatpush1.bf16.msra.mxu0 %v2448
    %2999 = vmatprep.subr.bf16.mxu0 %v2457
    %3000 = vmatpush1.bf16.msra.mxu0 %v2456
    %3001 = vmatprep.subr.bf16.mxu0 %v2465
    %3002 = vmatpush1.bf16.msra.mxu0 %v2464
    %3003 = vmatprep.subr.bf16.mxu0 %v2473
    %3004 = vmatpush1.bf16.msra.mxu0 %v2472
    %3005 = vmatprep.subr.bf16.mxu0 %v2481
    %3006 = vmatpush1.bf16.msra.mxu0 %v2480
    %3007 = vmatprep.subr.bf16.mxu0 %v2489
    %3008 = vmatpush1.bf16.msra.mxu0 %v2488
    %3009 = vmatprep.subr.bf16.mxu0 %v2497
    %3010 = vmatpush1.bf16.msra.mxu0 %v2496
    %3011 = vmatprep.subr.bf16.mxu0 %v2505
    %3012 = vmatpush1.bf16.msra.mxu0 %v2504
    %3013 = vmatprep.subr.bf16.mxu0 %v2513
    %3014 = vmatpush1.bf16.msra.mxu0 %v2512
    %3015 = vmatprep.subr.bf16.mxu0 %v2521
    %3016 = vmatpush1.bf16.msra.mxu0 %v2520
    %3017 = vmatprep.mubr.bf16.mxu0 %v1243
    %3018 = vmatmul.mubr.bf16.gmra.mrb[0].mxu0 %v1242
    %v3019 = vpop.f32.mrb[0].mxu0
    %v3020 = vadd.f32 %v2979, %v3019
    %v3021 = vpop.f32.mrb[0].mxu0
    %v3022 = vadd.f32 %v2981, %v3021
    %v3023 = vpop.f32.mrb[0].mxu0
    %v3024 = vpop.f32.mrb[0].mxu0
    %3025 = vdwg.mxu0
    %3026 = vmatprep.subr.bf16.mxu0 %v2275
    %3027 = vmatpush1.bf16.msra.mxu0 %v2274
    %3028 = vmatprep.subr.bf16.mxu0 %v2283
    %3029 = vmatpush1.bf16.msra.mxu0 %v2282
    %3030 = vmatprep.subr.bf16.mxu0 %v2291
    %3031 = vmatpush1.bf16.msra.mxu0 %v2290
    %3032 = vmatprep.subr.bf16.mxu0 %v2299
    %3033 = vmatpush1.bf16.msra.mxu0 %v2298
    %3034 = vmatprep.subr.bf16.mxu0 %v2307
    %3035 = vmatpush1.bf16.msra.mxu0 %v2306
    %3036 = vmatprep.subr.bf16.mxu0 %v2315
    %3037 = vmatpush1.bf16.msra.mxu0 %v2314
    %3038 = vmatprep.subr.bf16.mxu0 %v2323
    %3039 = vmatpush1.bf16.msra.mxu0 %v2322
    %3040 = vmatprep.subr.bf16.mxu0 %v2331
    %3041 = vmatpush1.bf16.msra.mxu0 %v2330
    %3042 = vmatprep.subr.bf16.mxu0 %v2339
    %3043 = vmatpush1.bf16.msra.mxu0 %v2338
    %3044 = vmatprep.subr.bf16.mxu0 %v2347
    %3045 = vmatpush1.bf16.msra.mxu0 %v2346
    %3046 = vmatprep.subr.bf16.mxu0 %v2355
    %3047 = vmatpush1.bf16.msra.mxu0 %v2354
    %3048 = vmatprep.subr.bf16.mxu0 %v2363
    %3049 = vmatpush1.bf16.msra.mxu0 %v2362
    %3050 = vmatprep.subr.bf16.mxu0 %v2371
    %3051 = vmatpush1.bf16.msra.mxu0 %v2370
    %3052 = vmatprep.subr.bf16.mxu0 %v2379
    %3053 = vmatpush1.bf16.msra.mxu0 %v2378
    %3054 = vmatprep.subr.bf16.mxu0 %v2387
    %3055 = vmatpush1.bf16.msra.mxu0 %v2386
    %3056 = vmatprep.subr.bf16.mxu0 %v2395
    %3057 = vmatpush1.bf16.msra.mxu0 %v2394
    %3058 = vmatprep.mubr.bf16.mxu0 %v1241
    %3059 = vmatmul.mubr.bf16.gmra.mrb[0].mxu0 %v1240
    %v3060 = vpop.f32.mrb[0].mxu0
    %v3061 = vadd.f32 0.0, %v3060
    %v3062 = vpop.f32.mrb[0].mxu0
    %v3063 = vadd.f32 0.0, %v3062
    %v3064 = vpop.f32.mrb[0].mxu0
    %v3065 = vpop.f32.mrb[0].mxu0
    %3066 = vdwg.mxu0
    %3067 = vmatprep.subr.bf16.mxu0 %v2403
    %3068 = vmatpush1.bf16.msra.mxu0 %v2402
    %3069 = vmatprep.subr.bf16.mxu0 %v2411
    %3070 = vmatpush1.bf16.msra.mxu0 %v2410
    %3071 = vmatprep.subr.bf16.mxu0 %v2419
    %3072 = vmatpush1.bf16.msra.mxu0 %v2418
    %3073 = vmatprep.subr.bf16.mxu0 %v2427
    %3074 = vmatpush1.bf16.msra.mxu0 %v2426
    %3075 = vmatprep.subr.bf16.mxu0 %v2435
    %3076 = vmatpush1.bf16.msra.mxu0 %v2434
    %3077 = vmatprep.subr.bf16.mxu0 %v2443
    %3078 = vmatpush1.bf16.msra.mxu0 %v2442
    %3079 = vmatprep.subr.bf16.mxu0 %v2451
    %3080 = vmatpush1.bf16.msra.mxu0 %v2450
    %3081 = vmatprep.subr.bf16.mxu0 %v2459
    %3082 = vmatpush1.bf16.msra.mxu0 %v2458
    %3083 = vmatprep.subr.bf16.mxu0 %v2467
    %3084 = vmatpush1.bf16.msra.mxu0 %v2466
    %3085 = vmatprep.subr.bf16.mxu0 %v2475
    %3086 = vmatpush1.bf16.msra.mxu0 %v2474
    %3087 = vmatprep.subr.bf16.mxu0 %v2483
    %3088 = vmatpush1.bf16.msra.mxu0 %v2482
    %3089 = vmatprep.subr.bf16.mxu0 %v2491
    %3090 = vmatpush1.bf16.msra.mxu0 %v2490
    %3091 = vmatprep.subr.bf16.mxu0 %v2499
    %3092 = vmatpush1.bf16.msra.mxu0 %v2498
    %3093 = vmatprep.subr.bf16.mxu0 %v2507
    %3094 = vmatpush1.bf16.msra.mxu0 %v2506
    %3095 = vmatprep.subr.bf16.mxu0 %v2515
    %3096 = vmatpush1.bf16.msra.mxu0 %v2514
    %3097 = vmatprep.subr.bf16.mxu0 %v2523
    %3098 = vmatpush1.bf16.msra.mxu0 %v2522
    %3099 = vmatprep.mubr.bf16.mxu0 %v1243
    %3100 = vmatmul.mubr.bf16.gmra.mrb[0].mxu0 %v1242
    %v3101 = vpop.f32.mrb[0].mxu0
    %v3102 = vadd.f32 %v3061, %v3101
    %v3103 = vpop.f32.mrb[0].mxu0
    %v3104 = vadd.f32 %v3063, %v3103
    %v3105 = vpop.f32.mrb[0].mxu0
    %v3106 = vpop.f32.mrb[0].mxu0
    %3107 = vdwg.mxu0
    %v3108 = vld [vmem:[#allocation21] sm:$0xff]
    %v3109 = vld [vmem:[#allocation22] sm:$0xff]
    %v3110 = vrot.slane %v2856, 4
    %v3111 = vadd.f32 %v2856, %v3110
    %v3112 = vrot.slane %v3111, 2
    %v3113 = vadd.f32 %v3111, %v3112
    %v3114 = vrot.slane %v3113, 1
    %v3115 = vadd.f32 %v3113, %v3114
    %v3116 = vrot.slane %v2858, 4
    %v3117 = vadd.f32 %v2858, %v3116
    %v3118 = vrot.slane %v3117, 2
    %v3119 = vadd.f32 %v3117, %v3118
    %v3120 = vrot.slane %v3119, 1
    %v3121 = vadd.f32 %v3119, %v3120
    %v3122 = vrot.slane %v2938, 4
    %v3123 = vadd.f32 %v2938, %v3122
    %v3124 = vrot.slane %v3123, 2
    %v3125 = vadd.f32 %v3123, %v3124
    %v3126 = vrot.slane %v3125, 1
    %v3127 = vadd.f32 %v3125, %v3126
    %v3128 = vrot.slane %v2940, 4
    %v3129 = vadd.f32 %v2940, %v3128
    %v3130 = vrot.slane %v3129, 2
    %v3131 = vadd.f32 %v3129, %v3130
    %v3132 = vrot.slane %v3131, 1
    %v3133 = vadd.f32 %v3131, %v3132
    %v3134 = vrot.slane %v3020, 4
    %v3135 = vadd.f32 %v3020, %v3134
    %v3136 = vrot.slane %v3135, 2
    %v3137 = vadd.f32 %v3135, %v3136
    %v3138 = vrot.slane %v3137, 1
    %v3139 = vadd.f32 %v3137, %v3138
    %v3140 = vrot.slane %v3022, 4
    %v3141 = vadd.f32 %v3022, %v3140
    %v3142 = vrot.slane %v3141, 2
    %v3143 = vadd.f32 %v3141, %v3142
    %v3144 = vrot.slane %v3143, 1
    %v3145 = vadd.f32 %v3143, %v3144
    %v3146 = vrot.slane %v3102, 4
    %v3147 = vadd.f32 %v3102, %v3146
    %v3148 = vrot.slane %v3147, 2
    %v3149 = vadd.f32 %v3147, %v3148
    %v3150 = vrot.slane %v3149, 1
    %v3151 = vadd.f32 %v3149, %v3150
    %v3152 = vrot.slane %v3104, 4
    %v3153 = vadd.f32 %v3104, %v3152
    %v3154 = vrot.slane %v3153, 2
    %v3155 = vadd.f32 %v3153, %v3154
    %v3156 = vrot.slane %v3155, 1
    %v3157 = vadd.f32 %v3155, %v3156
    %v3158 = vmul.f32 %v3115, %v573
    %v3159 = vmul.f32 %v3121, %v573
    %v3160 = vmul.f32 %v3127, %v573
    %v3161 = vmul.f32 %v3133, %v573
    %v3162 = vmul.f32 %v3139, %v573
    %v3163 = vmul.f32 %v3145, %v573
    %v3164 = vmul.f32 %v3151, %v573
    %v3165 = vmul.f32 %v3157, %v573
    %v3166 = vsub.f32 %v2856, %v3158
    %v3167 = vsub.f32 %v2858, %v3159
    %v3168 = vsub.f32 %v2938, %v3160
    %v3169 = vsub.f32 %v2940, %v3161
    %v3170 = vsub.f32 %v3020, %v3162
    %v3171 = vsub.f32 %v3022, %v3163
    %v3172 = vsub.f32 %v3102, %v3164
    %v3173 = vsub.f32 %v3104, %v3165
    %v3174 = vmul.f32 %v3166, %v3166
    %v3175 = vmul.f32 %v3167, %v3167
    %v3176 = vmul.f32 %v3168, %v3168
    %v3177 = vmul.f32 %v3169, %v3169
    %v3178 = vmul.f32 %v3170, %v3170
    %v3179 = vmul.f32 %v3171, %v3171
    %v3180 = vmul.f32 %v3172, %v3172
    %v3181 = vmul.f32 %v3173, %v3173
    %v3182 = vrot.slane %v3174, 4
    %v3183 = vadd.f32 %v3174, %v3182
    %v3184 = vrot.slane %v3183, 2
    %v3185 = vadd.f32 %v3183, %v3184
    %v3186 = vrot.slane %v3185, 1
    %v3187 = vadd.f32 %v3185, %v3186
    %v3188 = vrot.slane %v3175, 4
    %v3189 = vadd.f32 %v3175, %v3188
    %v3190 = vrot.slane %v3189, 2
    %v3191 = vadd.f32 %v3189, %v3190
    %v3192 = vrot.slane %v3191, 1
    %v3193 = vadd.f32 %v3191, %v3192
    %v3194 = vrot.slane %v3176, 4
    %v3195 = vadd.f32 %v3176, %v3194
    %v3196 = vrot.slane %v3195, 2
    %v3197 = vadd.f32 %v3195, %v3196
    %v3198 = vrot.slane %v3197, 1
    %v3199 = vadd.f32 %v3197, %v3198
    %v3200 = vrot.slane %v3177, 4
    %v3201 = vadd.f32 %v3177, %v3200
    %v3202 = vrot.slane %v3201, 2
    %v3203 = vadd.f32 %v3201, %v3202
    %v3204 = vrot.slane %v3203, 1
    %v3205 = vadd.f32 %v3203, %v3204
    %v3206 = vrot.slane %v3178, 4
    %v3207 = vadd.f32 %v3178, %v3206
    %v3208 = vrot.slane %v3207, 2
    %v3209 = vadd.f32 %v3207, %v3208
    %v3210 = vrot.slane %v3209, 1
    %v3211 = vadd.f32 %v3209, %v3210
    %v3212 = vrot.slane %v3179, 4
    %v3213 = vadd.f32 %v3179, %v3212
    %v3214 = vrot.slane %v3213, 2
    %v3215 = vadd.f32 %v3213, %v3214
    %v3216 = vrot.slane %v3215, 1
    %v3217 = vadd.f32 %v3215, %v3216
    %v3218 = vrot.slane %v3180, 4
    %v3219 = vadd.f32 %v3180, %v3218
    %v3220 = vrot.slane %v3219, 2
    %v3221 = vadd.f32 %v3219, %v3220
    %v3222 = vrot.slane %v3221, 1
    %v3223 = vadd.f32 %v3221, %v3222
    %v3224 = vrot.slane %v3181, 4
    %v3225 = vadd.f32 %v3181, %v3224
    %v3226 = vrot.slane %v3225, 2
    %v3227 = vadd.f32 %v3225, %v3226
    %v3228 = vrot.slane %v3227, 1
    %v3229 = vadd.f32 %v3227, %v3228
    %v3230 = vmul.f32 %v3187, %v573
    %v3231 = vmul.f32 %v3193, %v573
    %v3232 = vmul.f32 %v3199, %v573
    %v3233 = vmul.f32 %v3205, %v573
    %v3234 = vmul.f32 %v3211, %v573
    %v3235 = vmul.f32 %v3217, %v573
    %v3236 = vmul.f32 %v3223, %v573
    %v3237 = vmul.f32 %v3229, %v573
    %v3239 = vlaneseq
    %v3240 = vshrl.u32 %v3239, 7
    %v3241 = vsub.s32 0, %v3240
    %v3242 = vrot.slane %v3108, %v3241
    %v3243 = vlaneseq
    %v3244 = vshrl.u32 %v3243, 7
    %v3245 = vsub.s32 1, %v3244
    %v3246 = vrot.slane %v3108, %v3245
    %v3247 = vlaneseq
    %v3248 = vshrl.u32 %v3247, 7
    %v3249 = vsub.s32 2, %v3248
    %v3250 = vrot.slane %v3108, %v3249
    %v3251 = vlaneseq
    %v3252 = vshrl.u32 %v3251, 7
    %v3253 = vsub.s32 3, %v3252
    %v3254 = vrot.slane %v3108, %v3253
    %v3255 = vlaneseq
    %v3256 = vshrl.u32 %v3255, 7
    %v3257 = vsub.s32 4, %v3256
    %v3258 = vrot.slane %v3108, %v3257
    %v3259 = vlaneseq
    %v3260 = vshrl.u32 %v3259, 7
    %v3261 = vsub.s32 5, %v3260
    %v3262 = vrot.slane %v3108, %v3261
    %v3263 = vlaneseq
    %v3264 = vshrl.u32 %v3263, 7
    %v3265 = vsub.s32 6, %v3264
    %v3266 = vrot.slane %v3108, %v3265
    %v3267 = vlaneseq
    %v3268 = vshrl.u32 %v3267, 7
    %v3269 = vsub.s32 7, %v3268
    %v3270 = vrot.slane %v3108, %v3269
    %v3279 = vmul.f32 %v3242, %v3166
    %v3280 = vmul.f32 %v3246, %v3167
    %v3281 = vmul.f32 %v3250, %v3168
    %v3282 = vmul.f32 %v3254, %v3169
    %v3283 = vmul.f32 %v3258, %v3170
    %v3284 = vmul.f32 %v3262, %v3171
    %v3285 = vmul.f32 %v3266, %v3172
    %v3286 = vmul.f32 %v3270, %v3173
    %v3287 = vadd.f32 %v3230, 1e-05
    %v3288 = vadd.f32 %v3231, 1e-05
    %v3289 = vadd.f32 %v3232, 1e-05
    %v3290 = vadd.f32 %v3233, 1e-05
    %v3291 = vadd.f32 %v3234, 1e-05
    %v3292 = vadd.f32 %v3235, 1e-05
    %v3293 = vadd.f32 %v3236, 1e-05
    %v3294 = vadd.f32 %v3237, 1e-05
    %v3295 = vrsqrt.pop %v3287
    %v3296 = vrsqrt.pop %v3288
    %v3297 = vrsqrt.pop %v3289
    %v3298 = vrsqrt.pop %v3290
    %v3299 = vrsqrt.pop %v3291
    %v3300 = vrsqrt.pop %v3292
    %v3301 = vrsqrt.pop %v3293
    %v3302 = vrsqrt.pop %v3294
    %v3303 = vmul.f32 %v3279, %v3295
    %v3304 = vmul.f32 %v3280, %v3296
    %v3305 = vmul.f32 %v3281, %v3297
    %v3306 = vmul.f32 %v3282, %v3298
    %v3307 = vmul.f32 %v3283, %v3299
    %v3308 = vmul.f32 %v3284, %v3300
    %v3309 = vmul.f32 %v3285, %v3301
    %v3310 = vmul.f32 %v3286, %v3302
    %v3312 = vlaneseq
    %v3313 = vshrl.u32 %v3312, 7
    %v3314 = vsub.s32 0, %v3313
    %v3315 = vrot.slane %v3109, %v3314
    %v3316 = vlaneseq
    %v3317 = vshrl.u32 %v3316, 7
    %v3318 = vsub.s32 1, %v3317
    %v3319 = vrot.slane %v3109, %v3318
    %v3320 = vlaneseq
    %v3321 = vshrl.u32 %v3320, 7
    %v3322 = vsub.s32 2, %v3321
    %v3323 = vrot.slane %v3109, %v3322
    %v3324 = vlaneseq
    %v3325 = vshrl.u32 %v3324, 7
    %v3326 = vsub.s32 3, %v3325
    %v3327 = vrot.slane %v3109, %v3326
    %v3328 = vlaneseq
    %v3329 = vshrl.u32 %v3328, 7
    %v3330 = vsub.s32 4, %v3329
    %v3331 = vrot.slane %v3109, %v3330
    %v3332 = vlaneseq
    %v3333 = vshrl.u32 %v3332, 7
    %v3334 = vsub.s32 5, %v3333
    %v3335 = vrot.slane %v3109, %v3334
    %v3336 = vlaneseq
    %v3337 = vshrl.u32 %v3336, 7
    %v3338 = vsub.s32 6, %v3337
    %v3339 = vrot.slane %v3109, %v3338
    %v3340 = vlaneseq
    %v3341 = vshrl.u32 %v3340, 7
    %v3342 = vsub.s32 7, %v3341
    %v3343 = vrot.slane %v3109, %v3342
    %v3352 = vadd.f32 %v3303, %v3315
    %v3353 = vadd.f32 %v3304, %v3319
    %v3354 = vadd.f32 %v3305, %v3323
    %v3355 = vadd.f32 %v3306, %v3327
    %v3356 = vadd.f32 %v3307, %v3331
    %v3357 = vadd.f32 %v3308, %v3335
    %v3358 = vadd.f32 %v3309, %v3339
    %v3359 = vadd.f32 %v3310, %v3343
    %vm3360 = vcmp.gt.f32.partialorder %v3352, 0.0
    %vm3361 = vcmp.gt.f32.partialorder %v3353, 0.0
    %vm3362 = vcmp.gt.f32.partialorder %v3354, 0.0
    %vm3363 = vcmp.gt.f32.partialorder %v3355, 0.0
    %vm3364 = vcmp.gt.f32.partialorder %v3356, 0.0
    %vm3365 = vcmp.gt.f32.partialorder %v3357, 0.0
    %vm3366 = vcmp.gt.f32.partialorder %v3358, 0.0
    %vm3367 = vcmp.gt.f32.partialorder %v3359, 0.0
    %v3368 = vmul.f32 %v3352, 0.2
    %v3369 = vmul.f32 %v3353, 0.2
    %v3370 = vmul.f32 %v3354, 0.2
    %v3371 = vmul.f32 %v3355, 0.2
    %v3372 = vmul.f32 %v3356, 0.2
    %v3373 = vmul.f32 %v3357, 0.2
    %v3374 = vmul.f32 %v3358, 0.2
    %v3375 = vmul.f32 %v3359, 0.2
    %v3376 = vsel %vm3360, %v3352, %v3368
    %v3377 = vsel %vm3361, %v3353, %v3369
    %v3378 = vsel %vm3362, %v3354, %v3370
    %v3379 = vsel %vm3363, %v3355, %v3371
    %v3380 = vsel %vm3364, %v3356, %v3372
    %v3381 = vsel %vm3365, %v3357, %v3373
    %v3382 = vsel %vm3366, %v3358, %v3374
    %v3383 = vsel %vm3367, %v3359, %v3375
    %v3384 = vpack.c.bf16 %v3376, %v3376
    %v3385 = vpack.c.bf16 %v3377, %v3377
    %v3386 = vpack.c.bf16 %v3378, %v3378
    %v3387 = vpack.c.bf16 %v3379, %v3379
    %v3388 = vpack.c.bf16 %v3380, %v3380
    %v3389 = vpack.c.bf16 %v3381, %v3381
    %v3390 = vpack.c.bf16 %v3382, %v3382
    %v3391 = vpack.c.bf16 %v3383, %v3383
    %v3392 = vld [vmem:[#allocation24] sm:$0xff]
    %v3393 = vld [vmem:[#allocation24 + $0x8] sm:$0xff]
    %v3394 = vld [vmem:[#allocation24 + $0x10] sm:$0xff]
    %v3395 = vld [vmem:[#allocation24 + $0x18] sm:$0xf]
    %v3396 = vld [vmem:[#allocation24 + $0x1c] sm:$0xff]
    %v3397 = vld [vmem:[#allocation24 + $0x24] sm:$0xff]
    %v3398 = vld [vmem:[#allocation24 + $0x2c] sm:$0xff]
    %v3399 = vld [vmem:[#allocation24 + $0x34] sm:$0xf]
    %v3400 = vld [vmem:[#allocation24 + $0x38] sm:$0xff]
    %v3401 = vld [vmem:[#allocation24 + $0x40] sm:$0xff]
    %v3402 = vld [vmem:[#allocation24 + $0x48] sm:$0xff]
    %v3403 = vld [vmem:[#allocation24 + $0x50] sm:$0xf]
    %v3404 = vld [vmem:[#allocation24 + $0x54] sm:$0xff]
    %v3405 = vld [vmem:[#allocation24 + $0x5c] sm:$0xff]
    %v3406 = vld [vmem:[#allocation24 + $0x64] sm:$0xff]
    %v3407 = vld [vmem:[#allocation24 + $0x6c] sm:$0xf]
    %v3408 = vld [vmem:[#allocation24 + $0x70] sm:$0xff]
    %v3409 = vld [vmem:[#allocation24 + $0x78] sm:$0xff]
    %v3410 = vld [vmem:[#allocation24 + $0x80] sm:$0xff]
    %v3411 = vld [vmem:[#allocation24 + $0x88] sm:$0xf]
    %v3412 = vld [vmem:[#allocation24 + $0x8c] sm:$0xff]
    %v3413 = vld [vmem:[#allocation24 + $0x94] sm:$0xff]
    %v3414 = vld [vmem:[#allocation24 + $0x9c] sm:$0xff]
    %v3415 = vld [vmem:[#allocation24 + $0xa4] sm:$0xf]
    %v3416 = vld [vmem:[#allocation24 + $0xa8] sm:$0xff]
    %v3417 = vld [vmem:[#allocation24 + $0xb0] sm:$0xff]
    %v3418 = vld [vmem:[#allocation24 + $0xb8] sm:$0xff]
    %v3419 = vld [vmem:[#allocation24 + $0xc0] sm:$0xf]
    %v3420 = vld [vmem:[#allocation24 + $0xc4] sm:$0xff]
    %v3421 = vld [vmem:[#allocation24 + $0xcc] sm:$0xff]
    %v3422 = vld [vmem:[#allocation24 + $0xd4] sm:$0xff]
    %v3423 = vld [vmem:[#allocation24 + $0xdc] sm:$0xf]
    %v3424 = vld [vmem:[#allocation24 + $0xe0] sm:$0xff]
    %v3425 = vld [vmem:[#allocation24 + $0xe8] sm:$0xff]
    %v3426 = vld [vmem:[#allocation24 + $0xf0] sm:$0xff]
    %v3427 = vld [vmem:[#allocation24 + $0xf8] sm:$0xf]
    %v3428 = vld [vmem:[#allocation24 + $0xfc] sm:$0xff]
    %v3429 = vld [vmem:[#allocation24 + $0x104] sm:$0xff]
    %v3430 = vld [vmem:[#allocation24 + $0x10c] sm:$0xff]
    %v3431 = vld [vmem:[#allocation24 + $0x114] sm:$0xf]
    %v3432 = vld [vmem:[#allocation24 + $0x118] sm:$0xff]
    %v3433 = vld [vmem:[#allocation24 + $0x120] sm:$0xff]
    %v3434 = vld [vmem:[#allocation24 + $0x128] sm:$0xff]
    %v3435 = vld [vmem:[#allocation24 + $0x130] sm:$0xf]
    %v3436 = vld [vmem:[#allocation24 + $0x134] sm:$0xff]
    %v3437 = vld [vmem:[#allocation24 + $0x13c] sm:$0xff]
    %v3438 = vld [vmem:[#allocation24 + $0x144] sm:$0xff]
    %v3439 = vld [vmem:[#allocation24 + $0x14c] sm:$0xf]
    %v3440 = vld [vmem:[#allocation24 + $0x150] sm:$0xff]
    %v3441 = vld [vmem:[#allocation24 + $0x158] sm:$0xff]
    %v3442 = vld [vmem:[#allocation24 + $0x160] sm:$0xff]
    %v3443 = vld [vmem:[#allocation24 + $0x168] sm:$0xf]
    %v3444 = vld [vmem:[#allocation24 + $0x16c] sm:$0xff]
    %v3445 = vld [vmem:[#allocation24 + $0x174] sm:$0xff]
    %v3446 = vld [vmem:[#allocation24 + $0x17c] sm:$0xff]
    %v3447 = vld [vmem:[#allocation24 + $0x184] sm:$0xf]
    %v3448 = vld [vmem:[#allocation24 + $0x188] sm:$0xff]
    %v3449 = vld [vmem:[#allocation24 + $0x190] sm:$0xff]
    %v3450 = vld [vmem:[#allocation24 + $0x198] sm:$0xff]
    %v3451 = vld [vmem:[#allocation24 + $0x1a0] sm:$0xf]
    %v3452 = vld [vmem:[#allocation24 + $0x1a4] sm:$0xff]
    %v3453 = vld [vmem:[#allocation24 + $0x1ac] sm:$0xff]
    %v3454 = vld [vmem:[#allocation24 + $0x1b4] sm:$0xff]
    %v3455 = vld [vmem:[#allocation24 + $0x1bc] sm:$0xf]
    %v3456 = vld [vmem:[#allocation24 + $0x1c0] sm:$0xff]
    %v3457 = vld [vmem:[#allocation24 + $0x1c8] sm:$0xff]
    %v3458 = vld [vmem:[#allocation24 + $0x1d0] sm:$0xff]
    %v3459 = vld [vmem:[#allocation24 + $0x1d8] sm:$0xf]
    %v3460 = vld [vmem:[#allocation24 + $0x1dc] sm:$0xff]
    %v3461 = vld [vmem:[#allocation24 + $0x1e4] sm:$0xff]
    %v3462 = vld [vmem:[#allocation24 + $0x1ec] sm:$0xff]
    %v3463 = vld [vmem:[#allocation24 + $0x1f4] sm:$0xf]
    %v3464 = vld [vmem:[#allocation24 + $0x1f8] sm:$0xff]
    %v3465 = vld [vmem:[#allocation24 + $0x200] sm:$0xff]
    %v3466 = vld [vmem:[#allocation24 + $0x208] sm:$0xff]
    %v3467 = vld [vmem:[#allocation24 + $0x210] sm:$0xf]
    %v3468 = vld [vmem:[#allocation24 + $0x214] sm:$0xff]
    %v3469 = vld [vmem:[#allocation24 + $0x21c] sm:$0xff]
    %v3470 = vld [vmem:[#allocation24 + $0x224] sm:$0xff]
    %v3471 = vld [vmem:[#allocation24 + $0x22c] sm:$0xf]
    %v3472 = vld [vmem:[#allocation24 + $0x230] sm:$0xff]
    %v3473 = vld [vmem:[#allocation24 + $0x238] sm:$0xff]
    %v3474 = vld [vmem:[#allocation24 + $0x240] sm:$0xff]
    %v3475 = vld [vmem:[#allocation24 + $0x248] sm:$0xf]
    %v3476 = vld [vmem:[#allocation24 + $0x24c] sm:$0xff]
    %v3477 = vld [vmem:[#allocation24 + $0x254] sm:$0xff]
    %v3478 = vld [vmem:[#allocation24 + $0x25c] sm:$0xff]
    %v3479 = vld [vmem:[#allocation24 + $0x264] sm:$0xf]
    %v3480 = vld [vmem:[#allocation24 + $0x268] sm:$0xff]
    %v3481 = vld [vmem:[#allocation24 + $0x270] sm:$0xff]
    %v3482 = vld [vmem:[#allocation24 + $0x278] sm:$0xff]
    %v3483 = vld [vmem:[#allocation24 + $0x280] sm:$0xf]
    %v3484 = vld [vmem:[#allocation24 + $0x284] sm:$0xff]
    %v3485 = vld [vmem:[#allocation24 + $0x28c] sm:$0xff]
    %v3486 = vld [vmem:[#allocation24 + $0x294] sm:$0xff]
    %v3487 = vld [vmem:[#allocation24 + $0x29c] sm:$0xf]
    %v3488 = vld [vmem:[#allocation24 + $0x2a0] sm:$0xff]
    %v3489 = vld [vmem:[#allocation24 + $0x2a8] sm:$0xff]
    %v3490 = vld [vmem:[#allocation24 + $0x2b0] sm:$0xff]
    %v3491 = vld [vmem:[#allocation24 + $0x2b8] sm:$0xf]
    %v3492 = vld [vmem:[#allocation24 + $0x2bc] sm:$0xff]
    %v3493 = vld [vmem:[#allocation24 + $0x2c4] sm:$0xff]
    %v3494 = vld [vmem:[#allocation24 + $0x2cc] sm:$0xff]
    %v3495 = vld [vmem:[#allocation24 + $0x2d4] sm:$0xf]
    %v3496 = vld [vmem:[#allocation24 + $0x2d8] sm:$0xff]
    %v3497 = vld [vmem:[#allocation24 + $0x2e0] sm:$0xff]
    %v3498 = vld [vmem:[#allocation24 + $0x2e8] sm:$0xff]
    %v3499 = vld [vmem:[#allocation24 + $0x2f0] sm:$0xf]
    %v3500 = vld [vmem:[#allocation24 + $0x2f4] sm:$0xff]
    %v3501 = vld [vmem:[#allocation24 + $0x2fc] sm:$0xff]
    %v3502 = vld [vmem:[#allocation24 + $0x304] sm:$0xff]
    %v3503 = vld [vmem:[#allocation24 + $0x30c] sm:$0xf]
    %v3504 = vld [vmem:[#allocation24 + $0x310] sm:$0xff]
    %v3505 = vld [vmem:[#allocation24 + $0x318] sm:$0xff]
    %v3506 = vld [vmem:[#allocation24 + $0x320] sm:$0xff]
    %v3507 = vld [vmem:[#allocation24 + $0x328] sm:$0xf]
    %v3508 = vld [vmem:[#allocation24 + $0x32c] sm:$0xff]
    %v3509 = vld [vmem:[#allocation24 + $0x334] sm:$0xff]
    %v3510 = vld [vmem:[#allocation24 + $0x33c] sm:$0xff]
    %v3511 = vld [vmem:[#allocation24 + $0x344] sm:$0xf]
    %v3512 = vld [vmem:[#allocation24 + $0x348] sm:$0xff]
    %v3513 = vld [vmem:[#allocation24 + $0x350] sm:$0xff]
    %v3514 = vld [vmem:[#allocation24 + $0x358] sm:$0xff]
    %v3515 = vld [vmem:[#allocation24 + $0x360] sm:$0xf]
    %v3516 = vld [vmem:[#allocation24 + $0x364] sm:$0xff]
    %v3517 = vld [vmem:[#allocation24 + $0x36c] sm:$0xff]
    %v3518 = vld [vmem:[#allocation24 + $0x374] sm:$0xff]
    %v3519 = vld [vmem:[#allocation24 + $0x37c] sm:$0xf]
    %v3520 = vld [vmem:[#allocation24 + $0x380] sm:$0xff]
    %v3521 = vld [vmem:[#allocation24 + $0x388] sm:$0xff]
    %v3522 = vld [vmem:[#allocation24 + $0x390] sm:$0xff]
    %v3523 = vld [vmem:[#allocation24 + $0x398] sm:$0xf]
    %v3524 = vld [vmem:[#allocation24 + $0x39c] sm:$0xff]
    %v3525 = vld [vmem:[#allocation24 + $0x3a4] sm:$0xff]
    %v3526 = vld [vmem:[#allocation24 + $0x3ac] sm:$0xff]
    %v3527 = vld [vmem:[#allocation24 + $0x3b4] sm:$0xf]
    %v3528 = vld [vmem:[#allocation24 + $0x3b8] sm:$0xff]
    %v3529 = vld [vmem:[#allocation24 + $0x3c0] sm:$0xff]
    %v3530 = vld [vmem:[#allocation24 + $0x3c8] sm:$0xff]
    %v3531 = vld [vmem:[#allocation24 + $0x3d0] sm:$0xf]
    %v3532 = vld [vmem:[#allocation24 + $0x3d4] sm:$0xff]
    %v3533 = vld [vmem:[#allocation24 + $0x3dc] sm:$0xff]
    %v3534 = vld [vmem:[#allocation24 + $0x3e4] sm:$0xff]
    %v3535 = vld [vmem:[#allocation24 + $0x3ec] sm:$0xf]
    %v3536 = vld [vmem:[#allocation24 + $0x3f0] sm:$0xff]
    %v3537 = vld [vmem:[#allocation24 + $0x3f8] sm:$0xff]
    %v3538 = vld [vmem:[#allocation24 + $0x400] sm:$0xff]
    %v3539 = vld [vmem:[#allocation24 + $0x408] sm:$0xf]
    %v3540 = vld [vmem:[#allocation24 + $0x40c] sm:$0xff]
    %v3541 = vld [vmem:[#allocation24 + $0x414] sm:$0xff]
    %v3542 = vld [vmem:[#allocation24 + $0x41c] sm:$0xff]
    %v3543 = vld [vmem:[#allocation24 + $0x424] sm:$0xf]
    %v3544 = vld [vmem:[#allocation24 + $0x428] sm:$0xff]
    %v3545 = vld [vmem:[#allocation24 + $0x430] sm:$0xff]
    %v3546 = vld [vmem:[#allocation24 + $0x438] sm:$0xff]
    %v3547 = vld [vmem:[#allocation24 + $0x440] sm:$0xf]
    %v3548 = vld [vmem:[#allocation24 + $0x444] sm:$0xff]
    %v3549 = vld [vmem:[#allocation24 + $0x44c] sm:$0xff]
    %v3550 = vld [vmem:[#allocation24 + $0x454] sm:$0xff]
    %v3551 = vld [vmem:[#allocation24 + $0x45c] sm:$0xf]
    %v3552 = vld [vmem:[#allocation24 + $0x460] sm:$0xff]
    %v3553 = vld [vmem:[#allocation24 + $0x468] sm:$0xff]
    %v3554 = vld [vmem:[#allocation24 + $0x470] sm:$0xff]
    %v3555 = vld [vmem:[#allocation24 + $0x478] sm:$0xf]
    %v3556 = vld [vmem:[#allocation24 + $0x47c] sm:$0xff]
    %v3557 = vld [vmem:[#allocation24 + $0x484] sm:$0xff]
    %v3558 = vld [vmem:[#allocation24 + $0x48c] sm:$0xff]
    %v3559 = vld [vmem:[#allocation24 + $0x494] sm:$0xf]
    %v3560 = vld [vmem:[#allocation24 + $0x498] sm:$0xff]
    %v3561 = vld [vmem:[#allocation24 + $0x4a0] sm:$0xff]
    %v3562 = vld [vmem:[#allocation24 + $0x4a8] sm:$0xff]
    %v3563 = vld [vmem:[#allocation24 + $0x4b0] sm:$0xf]
    %v3564 = vld [vmem:[#allocation24 + $0x4b4] sm:$0xff]
    %v3565 = vld [vmem:[#allocation24 + $0x4bc] sm:$0xff]
    %v3566 = vld [vmem:[#allocation24 + $0x4c4] sm:$0xff]
    %v3567 = vld [vmem:[#allocation24 + $0x4cc] sm:$0xf]
    %v3568 = vld [vmem:[#allocation24 + $0x4d0] sm:$0xff]
    %v3569 = vld [vmem:[#allocation24 + $0x4d8] sm:$0xff]
    %v3570 = vld [vmem:[#allocation24 + $0x4e0] sm:$0xff]
    %v3571 = vld [vmem:[#allocation24 + $0x4e8] sm:$0xf]
    %v3572 = vld [vmem:[#allocation24 + $0x4ec] sm:$0xff]
    %v3573 = vld [vmem:[#allocation24 + $0x4f4] sm:$0xff]
    %v3574 = vld [vmem:[#allocation24 + $0x4fc] sm:$0xff]
    %v3575 = vld [vmem:[#allocation24 + $0x504] sm:$0xf]
    %v3576 = vld [vmem:[#allocation24 + $0x508] sm:$0xff]
    %v3577 = vld [vmem:[#allocation24 + $0x510] sm:$0xff]
    %v3578 = vld [vmem:[#allocation24 + $0x518] sm:$0xff]
    %v3579 = vld [vmem:[#allocation24 + $0x520] sm:$0xf]
    %v3580 = vld [vmem:[#allocation24 + $0x524] sm:$0xff]
    %v3581 = vld [vmem:[#allocation24 + $0x52c] sm:$0xff]
    %v3582 = vld [vmem:[#allocation24 + $0x534] sm:$0xff]
    %v3583 = vld [vmem:[#allocation24 + $0x53c] sm:$0xf]
    %v3584 = vld [vmem:[#allocation24 + $0x540] sm:$0xff]
    %v3585 = vld [vmem:[#allocation24 + $0x548] sm:$0xff]
    %v3586 = vld [vmem:[#allocation24 + $0x550] sm:$0xff]
    %v3587 = vld [vmem:[#allocation24 + $0x558] sm:$0xf]
    %v3588 = vld [vmem:[#allocation24 + $0x55c] sm:$0xff]
    %v3589 = vld [vmem:[#allocation24 + $0x564] sm:$0xff]
    %v3590 = vld [vmem:[#allocation24 + $0x56c] sm:$0xff]
    %v3591 = vld [vmem:[#allocation24 + $0x574] sm:$0xf]
    %v3592 = vld [vmem:[#allocation24 + $0x578] sm:$0xff]
    %v3593 = vld [vmem:[#allocation24 + $0x580] sm:$0xff]
    %v3594 = vld [vmem:[#allocation24 + $0x588] sm:$0xff]
    %v3595 = vld [vmem:[#allocation24 + $0x590] sm:$0xf]
    %v3596 = vld [vmem:[#allocation24 + $0x594] sm:$0xff]
    %v3597 = vld [vmem:[#allocation24 + $0x59c] sm:$0xff]
    %v3598 = vld [vmem:[#allocation24 + $0x5a4] sm:$0xff]
    %v3599 = vld [vmem:[#allocation24 + $0x5ac] sm:$0xf]
    %v3600 = vld [vmem:[#allocation24 + $0x5b0] sm:$0xff]
    %v3601 = vld [vmem:[#allocation24 + $0x5b8] sm:$0xff]
    %v3602 = vld [vmem:[#allocation24 + $0x5c0] sm:$0xff]
    %v3603 = vld [vmem:[#allocation24 + $0x5c8] sm:$0xf]
    %v3604 = vld [vmem:[#allocation24 + $0x5cc] sm:$0xff]
    %v3605 = vld [vmem:[#allocation24 + $0x5d4] sm:$0xff]
    %v3606 = vld [vmem:[#allocation24 + $0x5dc] sm:$0xff]
    %v3607 = vld [vmem:[#allocation24 + $0x5e4] sm:$0xf]
    %v3608 = vld [vmem:[#allocation24 + $0x5e8] sm:$0xff]
    %v3609 = vld [vmem:[#allocation24 + $0x5f0] sm:$0xff]
    %v3610 = vld [vmem:[#allocation24 + $0x5f8] sm:$0xff]
    %v3611 = vld [vmem:[#allocation24 + $0x600] sm:$0xf]
    %v3612 = vld [vmem:[#allocation24 + $0x604] sm:$0xff]
    %v3613 = vld [vmem:[#allocation24 + $0x60c] sm:$0xff]
    %v3614 = vld [vmem:[#allocation24 + $0x614] sm:$0xff]
    %v3615 = vld [vmem:[#allocation24 + $0x61c] sm:$0xf]
    %v3616 = vld [vmem:[#allocation24 + $0x620] sm:$0xff]
    %v3617 = vld [vmem:[#allocation24 + $0x628] sm:$0xff]
    %v3618 = vld [vmem:[#allocation24 + $0x630] sm:$0xff]
    %v3619 = vld [vmem:[#allocation24 + $0x638] sm:$0xf]
    %v3620 = vld [vmem:[#allocation24 + $0x63c] sm:$0xff]
    %v3621 = vld [vmem:[#allocation24 + $0x644] sm:$0xff]
    %v3622 = vld [vmem:[#allocation24 + $0x64c] sm:$0xff]
    %v3623 = vld [vmem:[#allocation24 + $0x654] sm:$0xf]
    %v3624 = vld [vmem:[#allocation24 + $0x658] sm:$0xff]
    %v3625 = vld [vmem:[#allocation24 + $0x660] sm:$0xff]
    %v3626 = vld [vmem:[#allocation24 + $0x668] sm:$0xff]
    %v3627 = vld [vmem:[#allocation24 + $0x670] sm:$0xf]
    %v3628 = vld [vmem:[#allocation24 + $0x674] sm:$0xff]
    %v3629 = vld [vmem:[#allocation24 + $0x67c] sm:$0xff]
    %v3630 = vld [vmem:[#allocation24 + $0x684] sm:$0xff]
    %v3631 = vld [vmem:[#allocation24 + $0x68c] sm:$0xf]
    %v3632 = vld [vmem:[#allocation24 + $0x690] sm:$0xff]
    %v3633 = vld [vmem:[#allocation24 + $0x698] sm:$0xff]
    %v3634 = vld [vmem:[#allocation24 + $0x6a0] sm:$0xff]
    %v3635 = vld [vmem:[#allocation24 + $0x6a8] sm:$0xf]
    %v3636 = vld [vmem:[#allocation24 + $0x6ac] sm:$0xff]
    %v3637 = vld [vmem:[#allocation24 + $0x6b4] sm:$0xff]
    %v3638 = vld [vmem:[#allocation24 + $0x6bc] sm:$0xff]
    %v3639 = vld [vmem:[#allocation24 + $0x6c4] sm:$0xf]
    %v3640 = vld [vmem:[#allocation24 + $0x6c8] sm:$0xff]
    %v3641 = vld [vmem:[#allocation24 + $0x6d0] sm:$0xff]
    %v3642 = vld [vmem:[#allocation24 + $0x6d8] sm:$0xff]
    %v3643 = vld [vmem:[#allocation24 + $0x6e0] sm:$0xf]
    %v3644 = vld [vmem:[#allocation24 + $0x6e4] sm:$0xff]
    %v3645 = vld [vmem:[#allocation24 + $0x6ec] sm:$0xff]
    %v3646 = vld [vmem:[#allocation24 + $0x6f4] sm:$0xff]
    %v3647 = vld [vmem:[#allocation24 + $0x6fc] sm:$0xf]
    %v3648 = vld [vmem:[#allocation24 + $0x700] sm:$0xff]
    %v3649 = vld [vmem:[#allocation24 + $0x708] sm:$0xff]
    %v3650 = vld [vmem:[#allocation24 + $0x710] sm:$0xff]
    %v3651 = vld [vmem:[#allocation24 + $0x718] sm:$0xf]
    %v3652 = vld [vmem:[#allocation24 + $0x71c] sm:$0xff]
    %v3653 = vld [vmem:[#allocation24 + $0x724] sm:$0xff]
    %v3654 = vld [vmem:[#allocation24 + $0x72c] sm:$0xff]
    %v3655 = vld [vmem:[#allocation24 + $0x734] sm:$0xf]
    %v3656 = vld [vmem:[#allocation24 + $0x738] sm:$0xff]
    %v3657 = vld [vmem:[#allocation24 + $0x740] sm:$0xff]
    %v3658 = vld [vmem:[#allocation24 + $0x748] sm:$0xff]
    %v3659 = vld [vmem:[#allocation24 + $0x750] sm:$0xf]
    %v3660 = vld [vmem:[#allocation24 + $0x754] sm:$0xff]
    %v3661 = vld [vmem:[#allocation24 + $0x75c] sm:$0xff]
    %v3662 = vld [vmem:[#allocation24 + $0x764] sm:$0xff]
    %v3663 = vld [vmem:[#allocation24 + $0x76c] sm:$0xf]
    %v3664 = vld [vmem:[#allocation24 + $0x770] sm:$0xff]
    %v3665 = vld [vmem:[#allocation24 + $0x778] sm:$0xff]
    %v3666 = vld [vmem:[#allocation24 + $0x780] sm:$0xff]
    %v3667 = vld [vmem:[#allocation24 + $0x788] sm:$0xf]
    %v3668 = vld [vmem:[#allocation24 + $0x78c] sm:$0xff]
    %v3669 = vld [vmem:[#allocation24 + $0x794] sm:$0xff]
    %v3670 = vld [vmem:[#allocation24 + $0x79c] sm:$0xff]
    %v3671 = vld [vmem:[#allocation24 + $0x7a4] sm:$0xf]
    %v3672 = vld [vmem:[#allocation24 + $0x7a8] sm:$0xff]
    %v3673 = vld [vmem:[#allocation24 + $0x7b0] sm:$0xff]
    %v3674 = vld [vmem:[#allocation24 + $0x7b8] sm:$0xff]
    %v3675 = vld [vmem:[#allocation24 + $0x7c0] sm:$0xf]
    %v3676 = vld [vmem:[#allocation24 + $0x7c4] sm:$0xff]
    %v3677 = vld [vmem:[#allocation24 + $0x7cc] sm:$0xff]
    %v3678 = vld [vmem:[#allocation24 + $0x7d4] sm:$0xff]
    %v3679 = vld [vmem:[#allocation24 + $0x7dc] sm:$0xf]
    %v3680 = vld [vmem:[#allocation24 + $0x7e0] sm:$0xff]
    %v3681 = vld [vmem:[#allocation24 + $0x7e8] sm:$0xff]
    %v3682 = vld [vmem:[#allocation24 + $0x7f0] sm:$0xff]
    %v3683 = vld [vmem:[#allocation24 + $0x7f8] sm:$0xf]
    %v3684 = vld [vmem:[#allocation24 + $0x7fc] sm:$0xff]
    %v3685 = vld [vmem:[#allocation24 + $0x804] sm:$0xff]
    %v3686 = vld [vmem:[#allocation24 + $0x80c] sm:$0xff]
    %v3687 = vld [vmem:[#allocation24 + $0x814] sm:$0xf]
    %v3688 = vld [vmem:[#allocation24 + $0x818] sm:$0xff]
    %v3689 = vld [vmem:[#allocation24 + $0x820] sm:$0xff]
    %v3690 = vld [vmem:[#allocation24 + $0x828] sm:$0xff]
    %v3691 = vld [vmem:[#allocation24 + $0x830] sm:$0xf]
    %v3692 = vld [vmem:[#allocation24 + $0x834] sm:$0xff]
    %v3693 = vld [vmem:[#allocation24 + $0x83c] sm:$0xff]
    %v3694 = vld [vmem:[#allocation24 + $0x844] sm:$0xff]
    %v3695 = vld [vmem:[#allocation24 + $0x84c] sm:$0xf]
    %v3696 = vld [vmem:[#allocation24 + $0x850] sm:$0xff]
    %v3697 = vld [vmem:[#allocation24 + $0x858] sm:$0xff]
    %v3698 = vld [vmem:[#allocation24 + $0x860] sm:$0xff]
    %v3699 = vld [vmem:[#allocation24 + $0x868] sm:$0xf]
    %v3700 = vld [vmem:[#allocation24 + $0x86c] sm:$0xff]
    %v3701 = vld [vmem:[#allocation24 + $0x874] sm:$0xff]
    %v3702 = vld [vmem:[#allocation24 + $0x87c] sm:$0xff]
    %v3703 = vld [vmem:[#allocation24 + $0x884] sm:$0xf]
    %v3704 = vld [vmem:[#allocation24 + $0x888] sm:$0xff]
    %v3705 = vld [vmem:[#allocation24 + $0x890] sm:$0xff]
    %v3706 = vld [vmem:[#allocation24 + $0x898] sm:$0xff]
    %v3707 = vld [vmem:[#allocation24 + $0x8a0] sm:$0xf]
    %v3708 = vld [vmem:[#allocation24 + $0x8a4] sm:$0xff]
    %v3709 = vld [vmem:[#allocation24 + $0x8ac] sm:$0xff]
    %v3710 = vld [vmem:[#allocation24 + $0x8b4] sm:$0xff]
    %v3711 = vld [vmem:[#allocation24 + $0x8bc] sm:$0xf]
    %v3712 = vld [vmem:[#allocation24 + $0x8c0] sm:$0xff]
    %v3713 = vld [vmem:[#allocation24 + $0x8c8] sm:$0xff]
    %v3714 = vld [vmem:[#allocation24 + $0x8d0] sm:$0xff]
    %v3715 = vld [vmem:[#allocation24 + $0x8d8] sm:$0xf]
    %v3716 = vld [vmem:[#allocation24 + $0x8dc] sm:$0xff]
    %v3717 = vld [vmem:[#allocation24 + $0x8e4] sm:$0xff]
    %v3718 = vld [vmem:[#allocation24 + $0x8ec] sm:$0xff]
    %v3719 = vld [vmem:[#allocation24 + $0x8f4] sm:$0xf]
    %v3720 = vld [vmem:[#allocation24 + $0x8f8] sm:$0xff]
    %v3721 = vld [vmem:[#allocation24 + $0x900] sm:$0xff]
    %v3722 = vld [vmem:[#allocation24 + $0x908] sm:$0xff]
    %v3723 = vld [vmem:[#allocation24 + $0x910] sm:$0xf]
    %v3724 = vld [vmem:[#allocation24 + $0x914] sm:$0xff]
    %v3725 = vld [vmem:[#allocation24 + $0x91c] sm:$0xff]
    %v3726 = vld [vmem:[#allocation24 + $0x924] sm:$0xff]
    %v3727 = vld [vmem:[#allocation24 + $0x92c] sm:$0xf]
    %v3728 = vld [vmem:[#allocation24 + $0x930] sm:$0xff]
    %v3729 = vld [vmem:[#allocation24 + $0x938] sm:$0xff]
    %v3730 = vld [vmem:[#allocation24 + $0x940] sm:$0xff]
    %v3731 = vld [vmem:[#allocation24 + $0x948] sm:$0xf]
    %v3732 = vld [vmem:[#allocation24 + $0x94c] sm:$0xff]
    %v3733 = vld [vmem:[#allocation24 + $0x954] sm:$0xff]
    %v3734 = vld [vmem:[#allocation24 + $0x95c] sm:$0xff]
    %v3735 = vld [vmem:[#allocation24 + $0x964] sm:$0xf]
    %v3736 = vld [vmem:[#allocation24 + $0x968] sm:$0xff]
    %v3737 = vld [vmem:[#allocation24 + $0x970] sm:$0xff]
    %v3738 = vld [vmem:[#allocation24 + $0x978] sm:$0xff]
    %v3739 = vld [vmem:[#allocation24 + $0x980] sm:$0xf]
    %v3740 = vld [vmem:[#allocation24 + $0x984] sm:$0xff]
    %v3741 = vld [vmem:[#allocation24 + $0x98c] sm:$0xff]
    %v3742 = vld [vmem:[#allocation24 + $0x994] sm:$0xff]
    %v3743 = vld [vmem:[#allocation24 + $0x99c] sm:$0xf]
    %v3744 = vld [vmem:[#allocation24 + $0x9a0] sm:$0xff]
    %v3745 = vld [vmem:[#allocation24 + $0x9a8] sm:$0xff]
    %v3746 = vld [vmem:[#allocation24 + $0x9b0] sm:$0xff]
    %v3747 = vld [vmem:[#allocation24 + $0x9b8] sm:$0xf]
    %v3748 = vld [vmem:[#allocation24 + $0x9bc] sm:$0xff]
    %v3749 = vld [vmem:[#allocation24 + $0x9c4] sm:$0xff]
    %v3750 = vld [vmem:[#allocation24 + $0x9cc] sm:$0xff]
    %v3751 = vld [vmem:[#allocation24 + $0x9d4] sm:$0xf]
    %v3752 = vld [vmem:[#allocation24 + $0x9d8] sm:$0xff]
    %v3753 = vld [vmem:[#allocation24 + $0x9e0] sm:$0xff]
    %v3754 = vld [vmem:[#allocation24 + $0x9e8] sm:$0xff]
    %v3755 = vld [vmem:[#allocation24 + $0x9f0] sm:$0xf]
    %v3756 = vld [vmem:[#allocation24 + $0x9f4] sm:$0xff]
    %v3757 = vld [vmem:[#allocation24 + $0x9fc] sm:$0xff]
    %v3758 = vld [vmem:[#allocation24 + $0xa04] sm:$0xff]
    %v3759 = vld [vmem:[#allocation24 + $0xa0c] sm:$0xf]
    %v3760 = vld [vmem:[#allocation24 + $0xa10] sm:$0xff]
    %v3761 = vld [vmem:[#allocation24 + $0xa18] sm:$0xff]
    %v3762 = vld [vmem:[#allocation24 + $0xa20] sm:$0xff]
    %v3763 = vld [vmem:[#allocation24 + $0xa28] sm:$0xf]
    %v3764 = vld [vmem:[#allocation24 + $0xa2c] sm:$0xff]
    %v3765 = vld [vmem:[#allocation24 + $0xa34] sm:$0xff]
    %v3766 = vld [vmem:[#allocation24 + $0xa3c] sm:$0xff]
    %v3767 = vld [vmem:[#allocation24 + $0xa44] sm:$0xf]
    %v3768 = vld [vmem:[#allocation24 + $0xa48] sm:$0xff]
    %v3769 = vld [vmem:[#allocation24 + $0xa50] sm:$0xff]
    %v3770 = vld [vmem:[#allocation24 + $0xa58] sm:$0xff]
    %v3771 = vld [vmem:[#allocation24 + $0xa60] sm:$0xf]
    %v3772 = vld [vmem:[#allocation24 + $0xa64] sm:$0xff]
    %v3773 = vld [vmem:[#allocation24 + $0xa6c] sm:$0xff]
    %v3774 = vld [vmem:[#allocation24 + $0xa74] sm:$0xff]
    %v3775 = vld [vmem:[#allocation24 + $0xa7c] sm:$0xf]
    %v3776 = vld [vmem:[#allocation24 + $0xa80] sm:$0xff]
    %v3777 = vld [vmem:[#allocation24 + $0xa88] sm:$0xff]
    %v3778 = vld [vmem:[#allocation24 + $0xa90] sm:$0xff]
    %v3779 = vld [vmem:[#allocation24 + $0xa98] sm:$0xf]
    %v3780 = vld [vmem:[#allocation24 + $0xa9c] sm:$0xff]
    %v3781 = vld [vmem:[#allocation24 + $0xaa4] sm:$0xff]
    %v3782 = vld [vmem:[#allocation24 + $0xaac] sm:$0xff]
    %v3783 = vld [vmem:[#allocation24 + $0xab4] sm:$0xf]
    %v3784 = vld [vmem:[#allocation24 + $0xab8] sm:$0xff]
    %v3785 = vld [vmem:[#allocation24 + $0xac0] sm:$0xff]
    %v3786 = vld [vmem:[#allocation24 + $0xac8] sm:$0xff]
    %v3787 = vld [vmem:[#allocation24 + $0xad0] sm:$0xf]
    %v3788 = vld [vmem:[#allocation24 + $0xad4] sm:$0xff]
    %v3789 = vld [vmem:[#allocation24 + $0xadc] sm:$0xff]
    %v3790 = vld [vmem:[#allocation24 + $0xae4] sm:$0xff]
    %v3791 = vld [vmem:[#allocation24 + $0xaec] sm:$0xf]
    %v3792 = vld [vmem:[#allocation24 + $0xaf0] sm:$0xff]
    %v3793 = vld [vmem:[#allocation24 + $0xaf8] sm:$0xff]
    %v3794 = vld [vmem:[#allocation24 + $0xb00] sm:$0xff]
    %v3795 = vld [vmem:[#allocation24 + $0xb08] sm:$0xf]
    %v3796 = vld [vmem:[#allocation24 + $0xb0c] sm:$0xff]
    %v3797 = vld [vmem:[#allocation24 + $0xb14] sm:$0xff]
    %v3798 = vld [vmem:[#allocation24 + $0xb1c] sm:$0xff]
    %v3799 = vld [vmem:[#allocation24 + $0xb24] sm:$0xf]
    %v3800 = vld [vmem:[#allocation24 + $0xb28] sm:$0xff]
    %v3801 = vld [vmem:[#allocation24 + $0xb30] sm:$0xff]
    %v3802 = vld [vmem:[#allocation24 + $0xb38] sm:$0xff]
    %v3803 = vld [vmem:[#allocation24 + $0xb40] sm:$0xf]
    %v3804 = vld [vmem:[#allocation24 + $0xb44] sm:$0xff]
    %v3805 = vld [vmem:[#allocation24 + $0xb4c] sm:$0xff]
    %v3806 = vld [vmem:[#allocation24 + $0xb54] sm:$0xff]
    %v3807 = vld [vmem:[#allocation24 + $0xb5c] sm:$0xf]
    %v3808 = vld [vmem:[#allocation24 + $0xb60] sm:$0xff]
    %v3809 = vld [vmem:[#allocation24 + $0xb68] sm:$0xff]
    %v3810 = vld [vmem:[#allocation24 + $0xb70] sm:$0xff]
    %v3811 = vld [vmem:[#allocation24 + $0xb78] sm:$0xf]
    %v3812 = vld [vmem:[#allocation24 + $0xb7c] sm:$0xff]
    %v3813 = vld [vmem:[#allocation24 + $0xb84] sm:$0xff]
    %v3814 = vld [vmem:[#allocation24 + $0xb8c] sm:$0xff]
    %v3815 = vld [vmem:[#allocation24 + $0xb94] sm:$0xf]
    %v3816 = vld [vmem:[#allocation24 + $0xb98] sm:$0xff]
    %v3817 = vld [vmem:[#allocation24 + $0xba0] sm:$0xff]
    %v3818 = vld [vmem:[#allocation24 + $0xba8] sm:$0xff]
    %v3819 = vld [vmem:[#allocation24 + $0xbb0] sm:$0xf]
    %v3820 = vld [vmem:[#allocation24 + $0xbb4] sm:$0xff]
    %v3821 = vld [vmem:[#allocation24 + $0xbbc] sm:$0xff]
    %v3822 = vld [vmem:[#allocation24 + $0xbc4] sm:$0xff]
    %v3823 = vld [vmem:[#allocation24 + $0xbcc] sm:$0xf]
    %v3824 = vld [vmem:[#allocation24 + $0xbd0] sm:$0xff]
    %v3825 = vld [vmem:[#allocation24 + $0xbd8] sm:$0xff]
    %v3826 = vld [vmem:[#allocation24 + $0xbe0] sm:$0xff]
    %v3827 = vld [vmem:[#allocation24 + $0xbe8] sm:$0xf]
    %v3828 = vld [vmem:[#allocation24 + $0xbec] sm:$0xff]
    %v3829 = vld [vmem:[#allocation24 + $0xbf4] sm:$0xff]
    %v3830 = vld [vmem:[#allocation24 + $0xbfc] sm:$0xff]
    %v3831 = vld [vmem:[#allocation24 + $0xc04] sm:$0xf]
    %v3832 = vld [vmem:[#allocation24 + $0xc08] sm:$0xff]
    %v3833 = vld [vmem:[#allocation24 + $0xc10] sm:$0xff]
    %v3834 = vld [vmem:[#allocation24 + $0xc18] sm:$0xff]
    %v3835 = vld [vmem:[#allocation24 + $0xc20] sm:$0xf]
    %v3836 = vld [vmem:[#allocation24 + $0xc24] sm:$0xff]
    %v3837 = vld [vmem:[#allocation24 + $0xc2c] sm:$0xff]
    %v3838 = vld [vmem:[#allocation24 + $0xc34] sm:$0xff]
    %v3839 = vld [vmem:[#allocation24 + $0xc3c] sm:$0xf]
    %v3840 = vld [vmem:[#allocation24 + $0xc40] sm:$0xff]
    %v3841 = vld [vmem:[#allocation24 + $0xc48] sm:$0xff]
    %v3842 = vld [vmem:[#allocation24 + $0xc50] sm:$0xff]
    %v3843 = vld [vmem:[#allocation24 + $0xc58] sm:$0xf]
    %v3844 = vld [vmem:[#allocation24 + $0xc5c] sm:$0xff]
    %v3845 = vld [vmem:[#allocation24 + $0xc64] sm:$0xff]
    %v3846 = vld [vmem:[#allocation24 + $0xc6c] sm:$0xff]
    %v3847 = vld [vmem:[#allocation24 + $0xc74] sm:$0xf]
    %v3848 = vld [vmem:[#allocation24 + $0xc78] sm:$0xff]
    %v3849 = vld [vmem:[#allocation24 + $0xc80] sm:$0xff]
    %v3850 = vld [vmem:[#allocation24 + $0xc88] sm:$0xff]
    %v3851 = vld [vmem:[#allocation24 + $0xc90] sm:$0xf]
    %v3852 = vld [vmem:[#allocation24 + $0xc94] sm:$0xff]
    %v3853 = vld [vmem:[#allocation24 + $0xc9c] sm:$0xff]
    %v3854 = vld [vmem:[#allocation24 + $0xca4] sm:$0xff]
    %v3855 = vld [vmem:[#allocation24 + $0xcac] sm:$0xf]
    %v3856 = vld [vmem:[#allocation24 + $0xcb0] sm:$0xff]
    %v3857 = vld [vmem:[#allocation24 + $0xcb8] sm:$0xff]
    %v3858 = vld [vmem:[#allocation24 + $0xcc0] sm:$0xff]
    %v3859 = vld [vmem:[#allocation24 + $0xcc8] sm:$0xf]
    %v3860 = vld [vmem:[#allocation24 + $0xccc] sm:$0xff]
    %v3861 = vld [vmem:[#allocation24 + $0xcd4] sm:$0xff]
    %v3862 = vld [vmem:[#allocation24 + $0xcdc] sm:$0xff]
    %v3863 = vld [vmem:[#allocation24 + $0xce4] sm:$0xf]
    %v3864 = vld [vmem:[#allocation24 + $0xce8] sm:$0xff]
    %v3865 = vld [vmem:[#allocation24 + $0xcf0] sm:$0xff]
    %v3866 = vld [vmem:[#allocation24 + $0xcf8] sm:$0xff]
    %v3867 = vld [vmem:[#allocation24 + $0xd00] sm:$0xf]
    %v3868 = vld [vmem:[#allocation24 + $0xd04] sm:$0xff]
    %v3869 = vld [vmem:[#allocation24 + $0xd0c] sm:$0xff]
    %v3870 = vld [vmem:[#allocation24 + $0xd14] sm:$0xff]
    %v3871 = vld [vmem:[#allocation24 + $0xd1c] sm:$0xf]
    %v3872 = vld [vmem:[#allocation24 + $0xd20] sm:$0xff]
    %v3873 = vld [vmem:[#allocation24 + $0xd28] sm:$0xff]
    %v3874 = vld [vmem:[#allocation24 + $0xd30] sm:$0xff]
    %v3875 = vld [vmem:[#allocation24 + $0xd38] sm:$0xf]
    %v3876 = vld [vmem:[#allocation24 + $0xd3c] sm:$0xff]
    %v3877 = vld [vmem:[#allocation24 + $0xd44] sm:$0xff]
    %v3878 = vld [vmem:[#allocation24 + $0xd4c] sm:$0xff]
    %v3879 = vld [vmem:[#allocation24 + $0xd54] sm:$0xf]
    %v3880 = vld [vmem:[#allocation24 + $0xd58] sm:$0xff]
    %v3881 = vld [vmem:[#allocation24 + $0xd60] sm:$0xff]
    %v3882 = vld [vmem:[#allocation24 + $0xd68] sm:$0xff]
    %v3883 = vld [vmem:[#allocation24 + $0xd70] sm:$0xf]
    %v3884 = vld [vmem:[#allocation24 + $0xd74] sm:$0xff]
    %v3885 = vld [vmem:[#allocation24 + $0xd7c] sm:$0xff]
    %v3886 = vld [vmem:[#allocation24 + $0xd84] sm:$0xff]
    %v3887 = vld [vmem:[#allocation24 + $0xd8c] sm:$0xf]
    %v3888 = vld [vmem:[#allocation24 + $0xd90] sm:$0xff]
    %v3889 = vld [vmem:[#allocation24 + $0xd98] sm:$0xff]
    %v3890 = vld [vmem:[#allocation24 + $0xda0] sm:$0xff]
    %v3891 = vld [vmem:[#allocation24 + $0xda8] sm:$0xf]
    %v3892 = vld [vmem:[#allocation24 + $0xdac] sm:$0xff]
    %v3893 = vld [vmem:[#allocation24 + $0xdb4] sm:$0xff]
    %v3894 = vld [vmem:[#allocation24 + $0xdbc] sm:$0xff]
    %v3895 = vld [vmem:[#allocation24 + $0xdc4] sm:$0xf]
    %v3896 = vld [vmem:[#allocation24 + $0xdc8] sm:$0xff]
    %v3897 = vld [vmem:[#allocation24 + $0xdd0] sm:$0xff]
    %v3898 = vld [vmem:[#allocation24 + $0xdd8] sm:$0xff]
    %v3899 = vld [vmem:[#allocation24 + $0xde0] sm:$0xf]
    %v3900 = vld [vmem:[#allocation24 + $0xde4] sm:$0xff]
    %v3901 = vld [vmem:[#allocation24 + $0xdec] sm:$0xff]
    %v3902 = vld [vmem:[#allocation24 + $0xdf4] sm:$0xff]
    %v3903 = vld [vmem:[#allocation24 + $0xdfc] sm:$0xf]
    %v3904 = vld [vmem:[#allocation25] sm:$0xff]
    %v3906 = vlaneseq
    %v3907 = vshrl.u32 %v3906, 7
    %v3908 = vsub.s32 0, %v3907
    %v3909 = vrot.slane %v3904, %v3908
    %v3910 = vlaneseq
    %v3911 = vshrl.u32 %v3910, 7
    %v3912 = vsub.s32 1, %v3911
    %v3913 = vrot.slane %v3904, %v3912
    %v3914 = vlaneseq
    %v3915 = vshrl.u32 %v3914, 7
    %v3916 = vsub.s32 2, %v3915
    %v3917 = vrot.slane %v3904, %v3916
    %v3918 = vlaneseq
    %v3919 = vshrl.u32 %v3918, 7
    %v3920 = vsub.s32 3, %v3919
    %v3921 = vrot.slane %v3904, %v3920
    %v3922 = vlaneseq
    %v3923 = vshrl.u32 %v3922, 7
    %v3924 = vsub.s32 4, %v3923
    %v3925 = vrot.slane %v3904, %v3924
    %v3926 = vlaneseq
    %v3927 = vshrl.u32 %v3926, 7
    %v3928 = vsub.s32 5, %v3927
    %v3929 = vrot.slane %v3904, %v3928
    %v3930 = vlaneseq
    %v3931 = vshrl.u32 %v3930, 7
    %v3932 = vsub.s32 6, %v3931
    %v3933 = vrot.slane %v3904, %v3932
    %v4453 = vunpack.c.l.b16 %v3392
    %v4454 = vunpack.c.h.b16 %v3392
    %v4455 = vunpack.c.l.b16 %v3393
    %v4456 = vunpack.c.h.b16 %v3393
    %v4457 = vunpack.c.l.b16 %v3394
    %v4458 = vunpack.c.h.b16 %v3394
    %v4459 = vunpack.c.l.b16 %v3395
    %v4460 = vunpack.c.l.b16 %v3396
    %v4461 = vunpack.c.h.b16 %v3396
    %v4462 = vunpack.c.l.b16 %v3397
    %v4463 = vunpack.c.h.b16 %v3397
    %v4464 = vunpack.c.l.b16 %v3398
    %v4465 = vunpack.c.h.b16 %v3398
    %v4466 = vunpack.c.l.b16 %v3399
    %v4467 = vunpack.c.l.b16 %v3400
    %v4468 = vunpack.c.h.b16 %v3400
    %v4469 = vunpack.c.l.b16 %v3401
    %v4470 = vunpack.c.h.b16 %v3401
    %v4471 = vunpack.c.l.b16 %v3402
    %v4472 = vunpack.c.h.b16 %v3402
    %v4473 = vunpack.c.l.b16 %v3403
    %v4474 = vunpack.c.l.b16 %v3404
    %v4475 = vunpack.c.h.b16 %v3404
    %v4476 = vunpack.c.l.b16 %v3405
    %v4477 = vunpack.c.h.b16 %v3405
    %v4478 = vunpack.c.l.b16 %v3406
    %v4479 = vunpack.c.h.b16 %v3406
    %v4480 = vunpack.c.l.b16 %v3407
    %v4481 = vunpack.c.l.b16 %v3408
    %v4482 = vunpack.c.h.b16 %v3408
    %v4483 = vunpack.c.l.b16 %v3409
    %v4484 = vunpack.c.h.b16 %v3409
    %v4485 = vunpack.c.l.b16 %v3410
    %v4486 = vunpack.c.h.b16 %v3410
    %v4487 = vunpack.c.l.b16 %v3411
    %v4488 = vunpack.c.l.b16 %v3412
    %v4489 = vunpack.c.h.b16 %v3412
    %v4490 = vunpack.c.l.b16 %v3413
    %v4491 = vunpack.c.h.b16 %v3413
    %v4492 = vunpack.c.l.b16 %v3414
    %v4493 = vunpack.c.h.b16 %v3414
    %v4494 = vunpack.c.l.b16 %v3415
    %v4495 = vunpack.c.l.b16 %v3416
    %v4496 = vunpack.c.h.b16 %v3416
    %v4497 = vunpack.c.l.b16 %v3417
    %v4498 = vunpack.c.h.b16 %v3417
    %v4499 = vunpack.c.l.b16 %v3418
    %v4500 = vunpack.c.h.b16 %v3418
    %v4501 = vunpack.c.l.b16 %v3419
    %v4502 = vunpack.c.l.b16 %v3420
    %v4503 = vunpack.c.h.b16 %v3420
    %v4504 = vunpack.c.l.b16 %v3421
    %v4505 = vunpack.c.h.b16 %v3421
    %v4506 = vunpack.c.l.b16 %v3422
    %v4507 = vunpack.c.h.b16 %v3422
    %v4508 = vunpack.c.l.b16 %v3423
    %v4509 = vunpack.c.l.b16 %v3424
    %v4510 = vunpack.c.h.b16 %v3424
    %v4511 = vunpack.c.l.b16 %v3425
    %v4512 = vunpack.c.h.b16 %v3425
    %v4513 = vunpack.c.l.b16 %v3426
    %v4514 = vunpack.c.h.b16 %v3426
    %v4515 = vunpack.c.l.b16 %v3427
    %v4516 = vunpack.c.l.b16 %v3428
    %v4517 = vunpack.c.h.b16 %v3428
    %v4518 = vunpack.c.l.b16 %v3429
    %v4519 = vunpack.c.h.b16 %v3429
    %v4520 = vunpack.c.l.b16 %v3430
    %v4521 = vunpack.c.h.b16 %v3430
    %v4522 = vunpack.c.l.b16 %v3431
    %v4523 = vunpack.c.l.b16 %v3432
    %v4524 = vunpack.c.h.b16 %v3432
    %v4525 = vunpack.c.l.b16 %v3433
    %v4526 = vunpack.c.h.b16 %v3433
    %v4527 = vunpack.c.l.b16 %v3434
    %v4528 = vunpack.c.h.b16 %v3434
    %v4529 = vunpack.c.l.b16 %v3435
    %v4530 = vunpack.c.l.b16 %v3436
    %v4531 = vunpack.c.h.b16 %v3436
    %v4532 = vunpack.c.l.b16 %v3437
    %v4533 = vunpack.c.h.b16 %v3437
    %v4534 = vunpack.c.l.b16 %v3438
    %v4535 = vunpack.c.h.b16 %v3438
    %v4536 = vunpack.c.l.b16 %v3439
    %v4537 = vunpack.c.l.b16 %v3440
    %v4538 = vunpack.c.h.b16 %v3440
    %v4539 = vunpack.c.l.b16 %v3441
    %v4540 = vunpack.c.h.b16 %v3441
    %v4541 = vunpack.c.l.b16 %v3442
    %v4542 = vunpack.c.h.b16 %v3442
    %v4543 = vunpack.c.l.b16 %v3443
    %v4544 = vunpack.c.l.b16 %v3444
    %v4545 = vunpack.c.h.b16 %v3444
    %v4546 = vunpack.c.l.b16 %v3445
    %v4547 = vunpack.c.h.b16 %v3445
    %v4548 = vunpack.c.l.b16 %v3446
    %v4549 = vunpack.c.h.b16 %v3446
    %v4550 = vunpack.c.l.b16 %v3447
    %v4551 = vunpack.c.l.b16 %v3448
    %v4552 = vunpack.c.h.b16 %v3448
    %v4553 = vunpack.c.l.b16 %v3449
    %v4554 = vunpack.c.h.b16 %v3449
    %v4555 = vunpack.c.l.b16 %v3450
    %v4556 = vunpack.c.h.b16 %v3450
    %v4557 = vunpack.c.l.b16 %v3451
    %v4558 = vunpack.c.l.b16 %v3452
    %v4559 = vunpack.c.h.b16 %v3452
    %v4560 = vunpack.c.l.b16 %v3453
    %v4561 = vunpack.c.h.b16 %v3453
    %v4562 = vunpack.c.l.b16 %v3454
    %v4563 = vunpack.c.h.b16 %v3454
    %v4564 = vunpack.c.l.b16 %v3455
    %v4565 = vunpack.c.l.b16 %v3456
    %v4566 = vunpack.c.h.b16 %v3456
    %v4567 = vunpack.c.l.b16 %v3457
    %v4568 = vunpack.c.h.b16 %v3457
    %v4569 = vunpack.c.l.b16 %v3458
    %v4570 = vunpack.c.h.b16 %v3458
    %v4571 = vunpack.c.l.b16 %v3459
    %v4572 = vunpack.c.l.b16 %v3460
    %v4573 = vunpack.c.h.b16 %v3460
    %v4574 = vunpack.c.l.b16 %v3461
    %v4575 = vunpack.c.h.b16 %v3461
    %v4576 = vunpack.c.l.b16 %v3462
    %v4577 = vunpack.c.h.b16 %v3462
    %v4578 = vunpack.c.l.b16 %v3463
    %v4579 = vunpack.c.l.b16 %v3464
    %v4580 = vunpack.c.h.b16 %v3464
    %v4581 = vunpack.c.l.b16 %v3465
    %v4582 = vunpack.c.h.b16 %v3465
    %v4583 = vunpack.c.l.b16 %v3466
    %v4584 = vunpack.c.h.b16 %v3466
    %v4585 = vunpack.c.l.b16 %v3467
    %v4586 = vunpack.c.l.b16 %v3468
    %v4587 = vunpack.c.h.b16 %v3468
    %v4588 = vunpack.c.l.b16 %v3469
    %v4589 = vunpack.c.h.b16 %v3469
    %v4590 = vunpack.c.l.b16 %v3470
    %v4591 = vunpack.c.h.b16 %v3470
    %v4592 = vunpack.c.l.b16 %v3471
    %v4593 = vunpack.c.l.b16 %v3472
    %v4594 = vunpack.c.h.b16 %v3472
    %v4595 = vunpack.c.l.b16 %v3473
    %v4596 = vunpack.c.h.b16 %v3473
    %v4597 = vunpack.c.l.b16 %v3474
    %v4598 = vunpack.c.h.b16 %v3474
    %v4599 = vunpack.c.l.b16 %v3475
    %v4600 = vunpack.c.l.b16 %v3476
    %v4601 = vunpack.c.h.b16 %v3476
    %v4602 = vunpack.c.l.b16 %v3477
    %v4603 = vunpack.c.h.b16 %v3477
    %v4604 = vunpack.c.l.b16 %v3478
    %v4605 = vunpack.c.h.b16 %v3478
    %v4606 = vunpack.c.l.b16 %v3479
    %v4607 = vunpack.c.l.b16 %v3480
    %v4608 = vunpack.c.h.b16 %v3480
    %v4609 = vunpack.c.l.b16 %v3481
    %v4610 = vunpack.c.h.b16 %v3481
    %v4611 = vunpack.c.l.b16 %v3482
    %v4612 = vunpack.c.h.b16 %v3482
    %v4613 = vunpack.c.l.b16 %v3483
    %v4614 = vunpack.c.l.b16 %v3484
    %v4615 = vunpack.c.h.b16 %v3484
    %v4616 = vunpack.c.l.b16 %v3485
    %v4617 = vunpack.c.h.b16 %v3485
    %v4618 = vunpack.c.l.b16 %v3486
    %v4619 = vunpack.c.h.b16 %v3486
    %v4620 = vunpack.c.l.b16 %v3487
    %v4621 = vunpack.c.l.b16 %v3488
    %v4622 = vunpack.c.h.b16 %v3488
    %v4623 = vunpack.c.l.b16 %v3489
    %v4624 = vunpack.c.h.b16 %v3489
    %v4625 = vunpack.c.l.b16 %v3490
    %v4626 = vunpack.c.h.b16 %v3490
    %v4627 = vunpack.c.l.b16 %v3491
    %v4628 = vunpack.c.l.b16 %v3492
    %v4629 = vunpack.c.h.b16 %v3492
    %v4630 = vunpack.c.l.b16 %v3493
    %v4631 = vunpack.c.h.b16 %v3493
    %v4632 = vunpack.c.l.b16 %v3494
    %v4633 = vunpack.c.h.b16 %v3494
    %v4634 = vunpack.c.l.b16 %v3495
    %v4635 = vunpack.c.l.b16 %v3496
    %v4636 = vunpack.c.h.b16 %v3496
    %v4637 = vunpack.c.l.b16 %v3497
    %v4638 = vunpack.c.h.b16 %v3497
    %v4639 = vunpack.c.l.b16 %v3498
    %v4640 = vunpack.c.h.b16 %v3498
    %v4641 = vunpack.c.l.b16 %v3499
    %v4642 = vunpack.c.l.b16 %v3500
    %v4643 = vunpack.c.h.b16 %v3500
    %v4644 = vunpack.c.l.b16 %v3501
    %v4645 = vunpack.c.h.b16 %v3501
    %v4646 = vunpack.c.l.b16 %v3502
    %v4647 = vunpack.c.h.b16 %v3502
    %v4648 = vunpack.c.l.b16 %v3503
    %v4649 = vunpack.c.l.b16 %v3504
    %v4650 = vunpack.c.h.b16 %v3504
    %v4651 = vunpack.c.l.b16 %v3505
    %v4652 = vunpack.c.h.b16 %v3505
    %v4653 = vunpack.c.l.b16 %v3506
    %v4654 = vunpack.c.h.b16 %v3506
    %v4655 = vunpack.c.l.b16 %v3507
    %v4656 = vunpack.c.l.b16 %v3508
    %v4657 = vunpack.c.h.b16 %v3508
    %v4658 = vunpack.c.l.b16 %v3509
    %v4659 = vunpack.c.h.b16 %v3509
    %v4660 = vunpack.c.l.b16 %v3510
    %v4661 = vunpack.c.h.b16 %v3510
    %v4662 = vunpack.c.l.b16 %v3511
    %v4663 = vunpack.c.l.b16 %v3512
    %v4664 = vunpack.c.h.b16 %v3512
    %v4665 = vunpack.c.l.b16 %v3513
    %v4666 = vunpack.c.h.b16 %v3513
    %v4667 = vunpack.c.l.b16 %v3514
    %v4668 = vunpack.c.h.b16 %v3514
    %v4669 = vunpack.c.l.b16 %v3515
    %v4670 = vunpack.c.l.b16 %v3516
    %v4671 = vunpack.c.h.b16 %v3516
    %v4672 = vunpack.c.l.b16 %v3517
    %v4673 = vunpack.c.h.b16 %v3517
    %v4674 = vunpack.c.l.b16 %v3518
    %v4675 = vunpack.c.h.b16 %v3518
    %v4676 = vunpack.c.l.b16 %v3519
    %v4677 = vunpack.c.l.b16 %v3520
    %v4678 = vunpack.c.h.b16 %v3520
    %v4679 = vunpack.c.l.b16 %v3521
    %v4680 = vunpack.c.h.b16 %v3521
    %v4681 = vunpack.c.l.b16 %v3522
    %v4682 = vunpack.c.h.b16 %v3522
    %v4683 = vunpack.c.l.b16 %v3523
    %v4684 = vunpack.c.l.b16 %v3524
    %v4685 = vunpack.c.h.b16 %v3524
    %v4686 = vunpack.c.l.b16 %v3525
    %v4687 = vunpack.c.h.b16 %v3525
    %v4688 = vunpack.c.l.b16 %v3526
    %v4689 = vunpack.c.h.b16 %v3526
    %v4690 = vunpack.c.l.b16 %v3527
    %v4691 = vunpack.c.l.b16 %v3528
    %v4692 = vunpack.c.h.b16 %v3528
    %v4693 = vunpack.c.l.b16 %v3529
    %v4694 = vunpack.c.h.b16 %v3529
    %v4695 = vunpack.c.l.b16 %v3530
    %v4696 = vunpack.c.h.b16 %v3530
    %v4697 = vunpack.c.l.b16 %v3531
    %v4698 = vunpack.c.l.b16 %v3532
    %v4699 = vunpack.c.h.b16 %v3532
    %v4700 = vunpack.c.l.b16 %v3533
    %v4701 = vunpack.c.h.b16 %v3533
    %v4702 = vunpack.c.l.b16 %v3534
    %v4703 = vunpack.c.h.b16 %v3534
    %v4704 = vunpack.c.l.b16 %v3535
    %v4705 = vunpack.c.l.b16 %v3536
    %v4706 = vunpack.c.h.b16 %v3536
    %v4707 = vunpack.c.l.b16 %v3537
    %v4708 = vunpack.c.h.b16 %v3537
    %v4709 = vunpack.c.l.b16 %v3538
    %v4710 = vunpack.c.h.b16 %v3538
    %v4711 = vunpack.c.l.b16 %v3539
    %v4712 = vunpack.c.l.b16 %v3540
    %v4713 = vunpack.c.h.b16 %v3540
    %v4714 = vunpack.c.l.b16 %v3541
    %v4715 = vunpack.c.h.b16 %v3541
    %v4716 = vunpack.c.l.b16 %v3542
    %v4717 = vunpack.c.h.b16 %v3542
    %v4718 = vunpack.c.l.b16 %v3543
    %v4719 = vunpack.c.l.b16 %v3544
    %v4720 = vunpack.c.h.b16 %v3544
    %v4721 = vunpack.c.l.b16 %v3545
    %v4722 = vunpack.c.h.b16 %v3545
    %v4723 = vunpack.c.l.b16 %v3546
    %v4724 = vunpack.c.h.b16 %v3546
    %v4725 = vunpack.c.l.b16 %v3547
    %v4726 = vunpack.c.l.b16 %v3548
    %v4727 = vunpack.c.h.b16 %v3548
    %v4728 = vunpack.c.l.b16 %v3549
    %v4729 = vunpack.c.h.b16 %v3549
    %v4730 = vunpack.c.l.b16 %v3550
    %v4731 = vunpack.c.h.b16 %v3550
    %v4732 = vunpack.c.l.b16 %v3551
    %v4733 = vunpack.c.l.b16 %v3552
    %v4734 = vunpack.c.h.b16 %v3552
    %v4735 = vunpack.c.l.b16 %v3553
    %v4736 = vunpack.c.h.b16 %v3553
    %v4737 = vunpack.c.l.b16 %v3554
    %v4738 = vunpack.c.h.b16 %v3554
    %v4739 = vunpack.c.l.b16 %v3555
    %v4740 = vunpack.c.l.b16 %v3556
    %v4741 = vunpack.c.h.b16 %v3556
    %v4742 = vunpack.c.l.b16 %v3557
    %v4743 = vunpack.c.h.b16 %v3557
    %v4744 = vunpack.c.l.b16 %v3558
    %v4745 = vunpack.c.h.b16 %v3558
    %v4746 = vunpack.c.l.b16 %v3559
    %v4747 = vunpack.c.l.b16 %v3560
    %v4748 = vunpack.c.h.b16 %v3560
    %v4749 = vunpack.c.l.b16 %v3561
    %v4750 = vunpack.c.h.b16 %v3561
    %v4751 = vunpack.c.l.b16 %v3562
    %v4752 = vunpack.c.h.b16 %v3562
    %v4753 = vunpack.c.l.b16 %v3563
    %v4754 = vunpack.c.l.b16 %v3564
    %v4755 = vunpack.c.h.b16 %v3564
    %v4756 = vunpack.c.l.b16 %v3565
    %v4757 = vunpack.c.h.b16 %v3565
    %v4758 = vunpack.c.l.b16 %v3566
    %v4759 = vunpack.c.h.b16 %v3566
    %v4760 = vunpack.c.l.b16 %v3567
    %v4761 = vunpack.c.l.b16 %v3568
    %v4762 = vunpack.c.h.b16 %v3568
    %v4763 = vunpack.c.l.b16 %v3569
    %v4764 = vunpack.c.h.b16 %v3569
    %v4765 = vunpack.c.l.b16 %v3570
    %v4766 = vunpack.c.h.b16 %v3570
    %v4767 = vunpack.c.l.b16 %v3571
    %v4768 = vunpack.c.l.b16 %v3572
    %v4769 = vunpack.c.h.b16 %v3572
    %v4770 = vunpack.c.l.b16 %v3573
    %v4771 = vunpack.c.h.b16 %v3573
    %v4772 = vunpack.c.l.b16 %v3574
    %v4773 = vunpack.c.h.b16 %v3574
    %v4774 = vunpack.c.l.b16 %v3575
    %v4775 = vunpack.c.l.b16 %v3576
    %v4776 = vunpack.c.h.b16 %v3576
    %v4777 = vunpack.c.l.b16 %v3577
    %v4778 = vunpack.c.h.b16 %v3577
    %v4779 = vunpack.c.l.b16 %v3578
    %v4780 = vunpack.c.h.b16 %v3578
    %v4781 = vunpack.c.l.b16 %v3579
    %v4782 = vunpack.c.l.b16 %v3580
    %v4783 = vunpack.c.h.b16 %v3580
    %v4784 = vunpack.c.l.b16 %v3581
    %v4785 = vunpack.c.h.b16 %v3581
    %v4786 = vunpack.c.l.b16 %v3582
    %v4787 = vunpack.c.h.b16 %v3582
    %v4788 = vunpack.c.l.b16 %v3583
    %v4789 = vunpack.c.l.b16 %v3584
    %v4790 = vunpack.c.h.b16 %v3584
    %v4791 = vunpack.c.l.b16 %v3585
    %v4792 = vunpack.c.h.b16 %v3585
    %v4793 = vunpack.c.l.b16 %v3586
    %v4794 = vunpack.c.h.b16 %v3586
    %v4795 = vunpack.c.l.b16 %v3587
    %v4796 = vunpack.c.l.b16 %v3588
    %v4797 = vunpack.c.h.b16 %v3588
    %v4798 = vunpack.c.l.b16 %v3589
    %v4799 = vunpack.c.h.b16 %v3589
    %v4800 = vunpack.c.l.b16 %v3590
    %v4801 = vunpack.c.h.b16 %v3590
    %v4802 = vunpack.c.l.b16 %v3591
    %v4803 = vunpack.c.l.b16 %v3592
    %v4804 = vunpack.c.h.b16 %v3592
    %v4805 = vunpack.c.l.b16 %v3593
    %v4806 = vunpack.c.h.b16 %v3593
    %v4807 = vunpack.c.l.b16 %v3594
    %v4808 = vunpack.c.h.b16 %v3594
    %v4809 = vunpack.c.l.b16 %v3595
    %v4810 = vunpack.c.l.b16 %v3596
    %v4811 = vunpack.c.h.b16 %v3596
    %v4812 = vunpack.c.l.b16 %v3597
    %v4813 = vunpack.c.h.b16 %v3597
    %v4814 = vunpack.c.l.b16 %v3598
    %v4815 = vunpack.c.h.b16 %v3598
    %v4816 = vunpack.c.l.b16 %v3599
    %v4817 = vunpack.c.l.b16 %v3600
    %v4818 = vunpack.c.h.b16 %v3600
    %v4819 = vunpack.c.l.b16 %v3601
    %v4820 = vunpack.c.h.b16 %v3601
    %v4821 = vunpack.c.l.b16 %v3602
    %v4822 = vunpack.c.h.b16 %v3602
    %v4823 = vunpack.c.l.b16 %v3603
    %v4824 = vunpack.c.l.b16 %v3604
    %v4825 = vunpack.c.h.b16 %v3604
    %v4826 = vunpack.c.l.b16 %v3605
    %v4827 = vunpack.c.h.b16 %v3605
    %v4828 = vunpack.c.l.b16 %v3606
    %v4829 = vunpack.c.h.b16 %v3606
    %v4830 = vunpack.c.l.b16 %v3607
    %v4831 = vunpack.c.l.b16 %v3608
    %v4832 = vunpack.c.h.b16 %v3608
    %v4833 = vunpack.c.l.b16 %v3609
    %v4834 = vunpack.c.h.b16 %v3609
    %v4835 = vunpack.c.l.b16 %v3610
    %v4836 = vunpack.c.h.b16 %v3610
    %v4837 = vunpack.c.l.b16 %v3611
    %v4838 = vunpack.c.l.b16 %v3612
    %v4839 = vunpack.c.h.b16 %v3612
    %v4840 = vunpack.c.l.b16 %v3613
    %v4841 = vunpack.c.h.b16 %v3613
    %v4842 = vunpack.c.l.b16 %v3614
    %v4843 = vunpack.c.h.b16 %v3614
    %v4844 = vunpack.c.l.b16 %v3615
    %v4845 = vunpack.c.l.b16 %v3616
    %v4846 = vunpack.c.h.b16 %v3616
    %v4847 = vunpack.c.l.b16 %v3617
    %v4848 = vunpack.c.h.b16 %v3617
    %v4849 = vunpack.c.l.b16 %v3618
    %v4850 = vunpack.c.h.b16 %v3618
    %v4851 = vunpack.c.l.b16 %v3619
    %v4852 = vunpack.c.l.b16 %v3620
    %v4853 = vunpack.c.h.b16 %v3620
    %v4854 = vunpack.c.l.b16 %v3621
    %v4855 = vunpack.c.h.b16 %v3621
    %v4856 = vunpack.c.l.b16 %v3622
    %v4857 = vunpack.c.h.b16 %v3622
    %v4858 = vunpack.c.l.b16 %v3623
    %v4859 = vunpack.c.l.b16 %v3624
    %v4860 = vunpack.c.h.b16 %v3624
    %v4861 = vunpack.c.l.b16 %v3625
    %v4862 = vunpack.c.h.b16 %v3625
    %v4863 = vunpack.c.l.b16 %v3626
    %v4864 = vunpack.c.h.b16 %v3626
    %v4865 = vunpack.c.l.b16 %v3627
    %v4866 = vunpack.c.l.b16 %v3628
    %v4867 = vunpack.c.h.b16 %v3628
    %v4868 = vunpack.c.l.b16 %v3629
    %v4869 = vunpack.c.h.b16 %v3629
    %v4870 = vunpack.c.l.b16 %v3630
    %v4871 = vunpack.c.h.b16 %v3630
    %v4872 = vunpack.c.l.b16 %v3631
    %v4873 = vunpack.c.l.b16 %v3632
    %v4874 = vunpack.c.h.b16 %v3632
    %v4875 = vunpack.c.l.b16 %v3633
    %v4876 = vunpack.c.h.b16 %v3633
    %v4877 = vunpack.c.l.b16 %v3634
    %v4878 = vunpack.c.h.b16 %v3634
    %v4879 = vunpack.c.l.b16 %v3635
    %v4880 = vunpack.c.l.b16 %v3636
    %v4881 = vunpack.c.h.b16 %v3636
    %v4882 = vunpack.c.l.b16 %v3637
    %v4883 = vunpack.c.h.b16 %v3637
    %v4884 = vunpack.c.l.b16 %v3638
    %v4885 = vunpack.c.h.b16 %v3638
    %v4886 = vunpack.c.l.b16 %v3639
    %v4887 = vunpack.c.l.b16 %v3640
    %v4888 = vunpack.c.h.b16 %v3640
    %v4889 = vunpack.c.l.b16 %v3641
    %v4890 = vunpack.c.h.b16 %v3641
    %v4891 = vunpack.c.l.b16 %v3642
    %v4892 = vunpack.c.h.b16 %v3642
    %v4893 = vunpack.c.l.b16 %v3643
    %v4894 = vunpack.c.l.b16 %v3644
    %v4895 = vunpack.c.h.b16 %v3644
    %v4896 = vunpack.c.l.b16 %v3645
    %v4897 = vunpack.c.h.b16 %v3645
    %v4898 = vunpack.c.l.b16 %v3646
    %v4899 = vunpack.c.h.b16 %v3646
    %v4900 = vunpack.c.l.b16 %v3647
    %v4901 = vunpack.c.l.b16 %v3648
    %v4902 = vunpack.c.h.b16 %v3648
    %v4903 = vunpack.c.l.b16 %v3649
    %v4904 = vunpack.c.h.b16 %v3649
    %v4905 = vunpack.c.l.b16 %v3650
    %v4906 = vunpack.c.h.b16 %v3650
    %v4907 = vunpack.c.l.b16 %v3651
    %v4908 = vunpack.c.l.b16 %v3652
    %v4909 = vunpack.c.h.b16 %v3652
    %v4910 = vunpack.c.l.b16 %v3653
    %v4911 = vunpack.c.h.b16 %v3653
    %v4912 = vunpack.c.l.b16 %v3654
    %v4913 = vunpack.c.h.b16 %v3654
    %v4914 = vunpack.c.l.b16 %v3655
    %v4915 = vunpack.c.l.b16 %v3656
    %v4916 = vunpack.c.h.b16 %v3656
    %v4917 = vunpack.c.l.b16 %v3657
    %v4918 = vunpack.c.h.b16 %v3657
    %v4919 = vunpack.c.l.b16 %v3658
    %v4920 = vunpack.c.h.b16 %v3658
    %v4921 = vunpack.c.l.b16 %v3659
    %v4922 = vunpack.c.l.b16 %v3660
    %v4923 = vunpack.c.h.b16 %v3660
    %v4924 = vunpack.c.l.b16 %v3661
    %v4925 = vunpack.c.h.b16 %v3661
    %v4926 = vunpack.c.l.b16 %v3662
    %v4927 = vunpack.c.h.b16 %v3662
    %v4928 = vunpack.c.l.b16 %v3663
    %v4929 = vunpack.c.l.b16 %v3664
    %v4930 = vunpack.c.h.b16 %v3664
    %v4931 = vunpack.c.l.b16 %v3665
    %v4932 = vunpack.c.h.b16 %v3665
    %v4933 = vunpack.c.l.b16 %v3666
    %v4934 = vunpack.c.h.b16 %v3666
    %v4935 = vunpack.c.l.b16 %v3667
    %v4936 = vunpack.c.l.b16 %v3668
    %v4937 = vunpack.c.h.b16 %v3668
    %v4938 = vunpack.c.l.b16 %v3669
    %v4939 = vunpack.c.h.b16 %v3669
    %v4940 = vunpack.c.l.b16 %v3670
    %v4941 = vunpack.c.h.b16 %v3670
    %v4942 = vunpack.c.l.b16 %v3671
    %v4943 = vunpack.c.l.b16 %v3672
    %v4944 = vunpack.c.h.b16 %v3672
    %v4945 = vunpack.c.l.b16 %v3673
    %v4946 = vunpack.c.h.b16 %v3673
    %v4947 = vunpack.c.l.b16 %v3674
    %v4948 = vunpack.c.h.b16 %v3674
    %v4949 = vunpack.c.l.b16 %v3675
    %v4950 = vunpack.c.l.b16 %v3676
    %v4951 = vunpack.c.h.b16 %v3676
    %v4952 = vunpack.c.l.b16 %v3677
    %v4953 = vunpack.c.h.b16 %v3677
    %v4954 = vunpack.c.l.b16 %v3678
    %v4955 = vunpack.c.h.b16 %v3678
    %v4956 = vunpack.c.l.b16 %v3679
    %v4957 = vunpack.c.l.b16 %v3680
    %v4958 = vunpack.c.h.b16 %v3680
    %v4959 = vunpack.c.l.b16 %v3681
    %v4960 = vunpack.c.h.b16 %v3681
    %v4961 = vunpack.c.l.b16 %v3682
    %v4962 = vunpack.c.h.b16 %v3682
    %v4963 = vunpack.c.l.b16 %v3683
    %v4964 = vunpack.c.l.b16 %v3684
    %v4965 = vunpack.c.h.b16 %v3684
    %v4966 = vunpack.c.l.b16 %v3685
    %v4967 = vunpack.c.h.b16 %v3685
    %v4968 = vunpack.c.l.b16 %v3686
    %v4969 = vunpack.c.h.b16 %v3686
    %v4970 = vunpack.c.l.b16 %v3687
    %v4971 = vunpack.c.l.b16 %v3688
    %v4972 = vunpack.c.h.b16 %v3688
    %v4973 = vunpack.c.l.b16 %v3689
    %v4974 = vunpack.c.h.b16 %v3689
    %v4975 = vunpack.c.l.b16 %v3690
    %v4976 = vunpack.c.h.b16 %v3690
    %v4977 = vunpack.c.l.b16 %v3691
    %v4978 = vunpack.c.l.b16 %v3692
    %v4979 = vunpack.c.h.b16 %v3692
    %v4980 = vunpack.c.l.b16 %v3693
    %v4981 = vunpack.c.h.b16 %v3693
    %v4982 = vunpack.c.l.b16 %v3694
    %v4983 = vunpack.c.h.b16 %v3694
    %v4984 = vunpack.c.l.b16 %v3695
    %v4985 = vunpack.c.l.b16 %v3696
    %v4986 = vunpack.c.h.b16 %v3696
    %v4987 = vunpack.c.l.b16 %v3697
    %v4988 = vunpack.c.h.b16 %v3697
    %v4989 = vunpack.c.l.b16 %v3698
    %v4990 = vunpack.c.h.b16 %v3698
    %v4991 = vunpack.c.l.b16 %v3699
    %v4992 = vunpack.c.l.b16 %v3700
    %v4993 = vunpack.c.h.b16 %v3700
    %v4994 = vunpack.c.l.b16 %v3701
    %v4995 = vunpack.c.h.b16 %v3701
    %v4996 = vunpack.c.l.b16 %v3702
    %v4997 = vunpack.c.h.b16 %v3702
    %v4998 = vunpack.c.l.b16 %v3703
    %v4999 = vunpack.c.l.b16 %v3704
    %v5000 = vunpack.c.h.b16 %v3704
    %v5001 = vunpack.c.l.b16 %v3705
    %v5002 = vunpack.c.h.b16 %v3705
    %v5003 = vunpack.c.l.b16 %v3706
    %v5004 = vunpack.c.h.b16 %v3706
    %v5005 = vunpack.c.l.b16 %v3707
    %v5006 = vunpack.c.l.b16 %v3708
    %v5007 = vunpack.c.h.b16 %v3708
    %v5008 = vunpack.c.l.b16 %v3709
    %v5009 = vunpack.c.h.b16 %v3709
    %v5010 = vunpack.c.l.b16 %v3710
    %v5011 = vunpack.c.h.b16 %v3710
    %v5012 = vunpack.c.l.b16 %v3711
    %v5013 = vunpack.c.l.b16 %v3712
    %v5014 = vunpack.c.h.b16 %v3712
    %v5015 = vunpack.c.l.b16 %v3713
    %v5016 = vunpack.c.h.b16 %v3713
    %v5017 = vunpack.c.l.b16 %v3714
    %v5018 = vunpack.c.h.b16 %v3714
    %v5019 = vunpack.c.l.b16 %v3715
    %v5020 = vunpack.c.l.b16 %v3716
    %v5021 = vunpack.c.h.b16 %v3716
    %v5022 = vunpack.c.l.b16 %v3717
    %v5023 = vunpack.c.h.b16 %v3717
    %v5024 = vunpack.c.l.b16 %v3718
    %v5025 = vunpack.c.h.b16 %v3718
    %v5026 = vunpack.c.l.b16 %v3719
    %v5027 = vunpack.c.l.b16 %v3720
    %v5028 = vunpack.c.h.b16 %v3720
    %v5029 = vunpack.c.l.b16 %v3721
    %v5030 = vunpack.c.h.b16 %v3721
    %v5031 = vunpack.c.l.b16 %v3722
    %v5032 = vunpack.c.h.b16 %v3722
    %v5033 = vunpack.c.l.b16 %v3723
    %v5034 = vunpack.c.l.b16 %v3724
    %v5035 = vunpack.c.h.b16 %v3724
    %v5036 = vunpack.c.l.b16 %v3725
    %v5037 = vunpack.c.h.b16 %v3725
    %v5038 = vunpack.c.l.b16 %v3726
    %v5039 = vunpack.c.h.b16 %v3726
    %v5040 = vunpack.c.l.b16 %v3727
    %v5041 = vunpack.c.l.b16 %v3728
    %v5042 = vunpack.c.h.b16 %v3728
    %v5043 = vunpack.c.l.b16 %v3729
    %v5044 = vunpack.c.h.b16 %v3729
    %v5045 = vunpack.c.l.b16 %v3730
    %v5046 = vunpack.c.h.b16 %v3730
    %v5047 = vunpack.c.l.b16 %v3731
    %v5048 = vunpack.c.l.b16 %v3732
    %v5049 = vunpack.c.h.b16 %v3732
    %v5050 = vunpack.c.l.b16 %v3733
    %v5051 = vunpack.c.h.b16 %v3733
    %v5052 = vunpack.c.l.b16 %v3734
    %v5053 = vunpack.c.h.b16 %v3734
    %v5054 = vunpack.c.l.b16 %v3735
    %v5055 = vunpack.c.l.b16 %v3736
    %v5056 = vunpack.c.h.b16 %v3736
    %v5057 = vunpack.c.l.b16 %v3737
    %v5058 = vunpack.c.h.b16 %v3737
    %v5059 = vunpack.c.l.b16 %v3738
    %v5060 = vunpack.c.h.b16 %v3738
    %v5061 = vunpack.c.l.b16 %v3739
    %v5062 = vunpack.c.l.b16 %v3740
    %v5063 = vunpack.c.h.b16 %v3740
    %v5064 = vunpack.c.l.b16 %v3741
    %v5065 = vunpack.c.h.b16 %v3741
    %v5066 = vunpack.c.l.b16 %v3742
    %v5067 = vunpack.c.h.b16 %v3742
    %v5068 = vunpack.c.l.b16 %v3743
    %v5069 = vunpack.c.l.b16 %v3744
    %v5070 = vunpack.c.h.b16 %v3744
    %v5071 = vunpack.c.l.b16 %v3745
    %v5072 = vunpack.c.h.b16 %v3745
    %v5073 = vunpack.c.l.b16 %v3746
    %v5074 = vunpack.c.h.b16 %v3746
    %v5075 = vunpack.c.l.b16 %v3747
    %v5076 = vunpack.c.l.b16 %v3748
    %v5077 = vunpack.c.h.b16 %v3748
    %v5078 = vunpack.c.l.b16 %v3749
    %v5079 = vunpack.c.h.b16 %v3749
    %v5080 = vunpack.c.l.b16 %v3750
    %v5081 = vunpack.c.h.b16 %v3750
    %v5082 = vunpack.c.l.b16 %v3751
    %v5083 = vunpack.c.l.b16 %v3752
    %v5084 = vunpack.c.h.b16 %v3752
    %v5085 = vunpack.c.l.b16 %v3753
    %v5086 = vunpack.c.h.b16 %v3753
    %v5087 = vunpack.c.l.b16 %v3754
    %v5088 = vunpack.c.h.b16 %v3754
    %v5089 = vunpack.c.l.b16 %v3755
    %v5090 = vunpack.c.l.b16 %v3756
    %v5091 = vunpack.c.h.b16 %v3756
    %v5092 = vunpack.c.l.b16 %v3757
    %v5093 = vunpack.c.h.b16 %v3757
    %v5094 = vunpack.c.l.b16 %v3758
    %v5095 = vunpack.c.h.b16 %v3758
    %v5096 = vunpack.c.l.b16 %v3759
    %v5097 = vunpack.c.l.b16 %v3760
    %v5098 = vunpack.c.h.b16 %v3760
    %v5099 = vunpack.c.l.b16 %v3761
    %v5100 = vunpack.c.h.b16 %v3761
    %v5101 = vunpack.c.l.b16 %v3762
    %v5102 = vunpack.c.h.b16 %v3762
    %v5103 = vunpack.c.l.b16 %v3763
    %v5104 = vunpack.c.l.b16 %v3764
    %v5105 = vunpack.c.h.b16 %v3764
    %v5106 = vunpack.c.l.b16 %v3765
    %v5107 = vunpack.c.h.b16 %v3765
    %v5108 = vunpack.c.l.b16 %v3766
    %v5109 = vunpack.c.h.b16 %v3766
    %v5110 = vunpack.c.l.b16 %v3767
    %v5111 = vunpack.c.l.b16 %v3768
    %v5112 = vunpack.c.h.b16 %v3768
    %v5113 = vunpack.c.l.b16 %v3769
    %v5114 = vunpack.c.h.b16 %v3769
    %v5115 = vunpack.c.l.b16 %v3770
    %v5116 = vunpack.c.h.b16 %v3770
    %v5117 = vunpack.c.l.b16 %v3771
    %v5118 = vunpack.c.l.b16 %v3772
    %v5119 = vunpack.c.h.b16 %v3772
    %v5120 = vunpack.c.l.b16 %v3773
    %v5121 = vunpack.c.h.b16 %v3773
    %v5122 = vunpack.c.l.b16 %v3774
    %v5123 = vunpack.c.h.b16 %v3774
    %v5124 = vunpack.c.l.b16 %v3775
    %v5125 = vunpack.c.l.b16 %v3776
    %v5126 = vunpack.c.h.b16 %v3776
    %v5127 = vunpack.c.l.b16 %v3777
    %v5128 = vunpack.c.h.b16 %v3777
    %v5129 = vunpack.c.l.b16 %v3778
    %v5130 = vunpack.c.h.b16 %v3778
    %v5131 = vunpack.c.l.b16 %v3779
    %v5132 = vunpack.c.l.b16 %v3780
    %v5133 = vunpack.c.h.b16 %v3780
    %v5134 = vunpack.c.l.b16 %v3781
    %v5135 = vunpack.c.h.b16 %v3781
    %v5136 = vunpack.c.l.b16 %v3782
    %v5137 = vunpack.c.h.b16 %v3782
    %v5138 = vunpack.c.l.b16 %v3783
    %v5139 = vunpack.c.l.b16 %v3784
    %v5140 = vunpack.c.h.b16 %v3784
    %v5141 = vunpack.c.l.b16 %v3785
    %v5142 = vunpack.c.h.b16 %v3785
    %v5143 = vunpack.c.l.b16 %v3786
    %v5144 = vunpack.c.h.b16 %v3786
    %v5145 = vunpack.c.l.b16 %v3787
    %v5146 = vunpack.c.l.b16 %v3788
    %v5147 = vunpack.c.h.b16 %v3788
    %v5148 = vunpack.c.l.b16 %v3789
    %v5149 = vunpack.c.h.b16 %v3789
    %v5150 = vunpack.c.l.b16 %v3790
    %v5151 = vunpack.c.h.b16 %v3790
    %v5152 = vunpack.c.l.b16 %v3791
    %v5153 = vunpack.c.l.b16 %v3792
    %v5154 = vunpack.c.h.b16 %v3792
    %v5155 = vunpack.c.l.b16 %v3793
    %v5156 = vunpack.c.h.b16 %v3793
    %v5157 = vunpack.c.l.b16 %v3794
    %v5158 = vunpack.c.h.b16 %v3794
    %v5159 = vunpack.c.l.b16 %v3795
    %v5160 = vunpack.c.l.b16 %v3796
    %v5161 = vunpack.c.h.b16 %v3796
    %v5162 = vunpack.c.l.b16 %v3797
    %v5163 = vunpack.c.h.b16 %v3797
    %v5164 = vunpack.c.l.b16 %v3798
    %v5165 = vunpack.c.h.b16 %v3798
    %v5166 = vunpack.c.l.b16 %v3799
    %v5167 = vunpack.c.l.b16 %v3800
    %v5168 = vunpack.c.h.b16 %v3800
    %v5169 = vunpack.c.l.b16 %v3801
    %v5170 = vunpack.c.h.b16 %v3801
    %v5171 = vunpack.c.l.b16 %v3802
    %v5172 = vunpack.c.h.b16 %v3802
    %v5173 = vunpack.c.l.b16 %v3803
    %v5174 = vunpack.c.l.b16 %v3804
    %v5175 = vunpack.c.h.b16 %v3804
    %v5176 = vunpack.c.l.b16 %v3805
    %v5177 = vunpack.c.h.b16 %v3805
    %v5178 = vunpack.c.l.b16 %v3806
    %v5179 = vunpack.c.h.b16 %v3806
    %v5180 = vunpack.c.l.b16 %v3807
    %v5181 = vunpack.c.l.b16 %v3808
    %v5182 = vunpack.c.h.b16 %v3808
    %v5183 = vunpack.c.l.b16 %v3809
    %v5184 = vunpack.c.h.b16 %v3809
    %v5185 = vunpack.c.l.b16 %v3810
    %v5186 = vunpack.c.h.b16 %v3810
    %v5187 = vunpack.c.l.b16 %v3811
    %v5188 = vunpack.c.l.b16 %v3812
    %v5189 = vunpack.c.h.b16 %v3812
    %v5190 = vunpack.c.l.b16 %v3813
    %v5191 = vunpack.c.h.b16 %v3813
    %v5192 = vunpack.c.l.b16 %v3814
    %v5193 = vunpack.c.h.b16 %v3814
    %v5194 = vunpack.c.l.b16 %v3815
    %v5195 = vunpack.c.l.b16 %v3816
    %v5196 = vunpack.c.h.b16 %v3816
    %v5197 = vunpack.c.l.b16 %v3817
    %v5198 = vunpack.c.h.b16 %v3817
    %v5199 = vunpack.c.l.b16 %v3818
    %v5200 = vunpack.c.h.b16 %v3818
    %v5201 = vunpack.c.l.b16 %v3819
    %v5202 = vunpack.c.l.b16 %v3820
    %v5203 = vunpack.c.h.b16 %v3820
    %v5204 = vunpack.c.l.b16 %v3821
    %v5205 = vunpack.c.h.b16 %v3821
    %v5206 = vunpack.c.l.b16 %v3822
    %v5207 = vunpack.c.h.b16 %v3822
    %v5208 = vunpack.c.l.b16 %v3823
    %v5209 = vunpack.c.l.b16 %v3824
    %v5210 = vunpack.c.h.b16 %v3824
    %v5211 = vunpack.c.l.b16 %v3825
    %v5212 = vunpack.c.h.b16 %v3825
    %v5213 = vunpack.c.l.b16 %v3826
    %v5214 = vunpack.c.h.b16 %v3826
    %v5215 = vunpack.c.l.b16 %v3827
    %v5216 = vunpack.c.l.b16 %v3828
    %v5217 = vunpack.c.h.b16 %v3828
    %v5218 = vunpack.c.l.b16 %v3829
    %v5219 = vunpack.c.h.b16 %v3829
    %v5220 = vunpack.c.l.b16 %v3830
    %v5221 = vunpack.c.h.b16 %v3830
    %v5222 = vunpack.c.l.b16 %v3831
    %v5223 = vunpack.c.l.b16 %v3832
    %v5224 = vunpack.c.h.b16 %v3832
    %v5225 = vunpack.c.l.b16 %v3833
    %v5226 = vunpack.c.h.b16 %v3833
    %v5227 = vunpack.c.l.b16 %v3834
    %v5228 = vunpack.c.h.b16 %v3834
    %v5229 = vunpack.c.l.b16 %v3835
    %v5230 = vunpack.c.l.b16 %v3836
    %v5231 = vunpack.c.h.b16 %v3836
    %v5232 = vunpack.c.l.b16 %v3837
    %v5233 = vunpack.c.h.b16 %v3837
    %v5234 = vunpack.c.l.b16 %v3838
    %v5235 = vunpack.c.h.b16 %v3838
    %v5236 = vunpack.c.l.b16 %v3839
    %v5237 = vunpack.c.l.b16 %v3840
    %v5238 = vunpack.c.h.b16 %v3840
    %v5239 = vunpack.c.l.b16 %v3841
    %v5240 = vunpack.c.h.b16 %v3841
    %v5241 = vunpack.c.l.b16 %v3842
    %v5242 = vunpack.c.h.b16 %v3842
    %v5243 = vunpack.c.l.b16 %v3843
    %v5244 = vunpack.c.l.b16 %v3844
    %v5245 = vunpack.c.h.b16 %v3844
    %v5246 = vunpack.c.l.b16 %v3845
    %v5247 = vunpack.c.h.b16 %v3845
    %v5248 = vunpack.c.l.b16 %v3846
    %v5249 = vunpack.c.h.b16 %v3846
    %v5250 = vunpack.c.l.b16 %v3847
    %v5251 = vunpack.c.l.b16 %v3848
    %v5252 = vunpack.c.h.b16 %v3848
    %v5253 = vunpack.c.l.b16 %v3849
    %v5254 = vunpack.c.h.b16 %v3849
    %v5255 = vunpack.c.l.b16 %v3850
    %v5256 = vunpack.c.h.b16 %v3850
    %v5257 = vunpack.c.l.b16 %v3851
    %v5258 = vunpack.c.l.b16 %v3852
    %v5259 = vunpack.c.h.b16 %v3852
    %v5260 = vunpack.c.l.b16 %v3853
    %v5261 = vunpack.c.h.b16 %v3853
    %v5262 = vunpack.c.l.b16 %v3854
    %v5263 = vunpack.c.h.b16 %v3854
    %v5264 = vunpack.c.l.b16 %v3855
    %v5265 = vunpack.c.l.b16 %v3856
    %v5266 = vunpack.c.h.b16 %v3856
    %v5267 = vunpack.c.l.b16 %v3857
    %v5268 = vunpack.c.h.b16 %v3857
    %v5269 = vunpack.c.l.b16 %v3858
    %v5270 = vunpack.c.h.b16 %v3858
    %v5271 = vunpack.c.l.b16 %v3859
    %v5272 = vunpack.c.l.b16 %v3860
    %v5273 = vunpack.c.h.b16 %v3860
    %v5274 = vunpack.c.l.b16 %v3861
    %v5275 = vunpack.c.h.b16 %v3861
    %v5276 = vunpack.c.l.b16 %v3862
    %v5277 = vunpack.c.h.b16 %v3862
    %v5278 = vunpack.c.l.b16 %v3863
    %v5279 = vunpack.c.l.b16 %v3864
    %v5280 = vunpack.c.h.b16 %v3864
    %v5281 = vunpack.c.l.b16 %v3865
    %v5282 = vunpack.c.h.b16 %v3865
    %v5283 = vunpack.c.l.b16 %v3866
    %v5284 = vunpack.c.h.b16 %v3866
    %v5285 = vunpack.c.l.b16 %v3867
    %v5286 = vunpack.c.l.b16 %v3868
    %v5287 = vunpack.c.h.b16 %v3868
    %v5288 = vunpack.c.l.b16 %v3869
    %v5289 = vunpack.c.h.b16 %v3869
    %v5290 = vunpack.c.l.b16 %v3870
    %v5291 = vunpack.c.h.b16 %v3870
    %v5292 = vunpack.c.l.b16 %v3871
    %v5293 = vunpack.c.l.b16 %v3872
    %v5294 = vunpack.c.h.b16 %v3872
    %v5295 = vunpack.c.l.b16 %v3873
    %v5296 = vunpack.c.h.b16 %v3873
    %v5297 = vunpack.c.l.b16 %v3874
    %v5298 = vunpack.c.h.b16 %v3874
    %v5299 = vunpack.c.l.b16 %v3875
    %v5300 = vunpack.c.l.b16 %v3876
    %v5301 = vunpack.c.h.b16 %v3876
    %v5302 = vunpack.c.l.b16 %v3877
    %v5303 = vunpack.c.h.b16 %v3877
    %v5304 = vunpack.c.l.b16 %v3878
    %v5305 = vunpack.c.h.b16 %v3878
    %v5306 = vunpack.c.l.b16 %v3879
    %v5307 = vunpack.c.l.b16 %v3880
    %v5308 = vunpack.c.h.b16 %v3880
    %v5309 = vunpack.c.l.b16 %v3881
    %v5310 = vunpack.c.h.b16 %v3881
    %v5311 = vunpack.c.l.b16 %v3882
    %v5312 = vunpack.c.h.b16 %v3882
    %v5313 = vunpack.c.l.b16 %v3883
    %v5314 = vunpack.c.l.b16 %v3884
    %v5315 = vunpack.c.h.b16 %v3884
    %v5316 = vunpack.c.l.b16 %v3885
    %v5317 = vunpack.c.h.b16 %v3885
    %v5318 = vunpack.c.l.b16 %v3886
    %v5319 = vunpack.c.h.b16 %v3886
    %v5320 = vunpack.c.l.b16 %v3887
    %v5321 = vunpack.c.l.b16 %v3888
    %v5322 = vunpack.c.h.b16 %v3888
    %v5323 = vunpack.c.l.b16 %v3889
    %v5324 = vunpack.c.h.b16 %v3889
    %v5325 = vunpack.c.l.b16 %v3890
    %v5326 = vunpack.c.h.b16 %v3890
    %v5327 = vunpack.c.l.b16 %v3891
    %v5328 = vunpack.c.l.b16 %v3892
    %v5329 = vunpack.c.h.b16 %v3892
    %v5330 = vunpack.c.l.b16 %v3893
    %v5331 = vunpack.c.h.b16 %v3893
    %v5332 = vunpack.c.l.b16 %v3894
    %v5333 = vunpack.c.h.b16 %v3894
    %v5334 = vunpack.c.l.b16 %v3895
    %v5335 = vunpack.c.l.b16 %v3896
    %v5336 = vunpack.c.h.b16 %v3896
    %v5337 = vunpack.c.l.b16 %v3897
    %v5338 = vunpack.c.h.b16 %v3897
    %v5339 = vunpack.c.l.b16 %v3898
    %v5340 = vunpack.c.h.b16 %v3898
    %v5341 = vunpack.c.l.b16 %v3899
    %v5342 = vunpack.c.l.b16 %v3900
    %v5343 = vunpack.c.h.b16 %v3900
    %v5344 = vunpack.c.l.b16 %v3901
    %v5345 = vunpack.c.h.b16 %v3901
    %v5346 = vunpack.c.l.b16 %v3902
    %v5347 = vunpack.c.h.b16 %v3902
    %v5348 = vunpack.c.l.b16 %v3903
    %v5349 = vpack.c.b16 %v4460, %v4453
    %v5350 = vpack.c.b16 %v4461, %v4454
    %v5351 = vpack.c.b16 %v4462, %v4455
    %v5352 = vpack.c.b16 %v4463, %v4456
    %v5353 = vpack.c.b16 %v4464, %v4457
    %v5354 = vpack.c.b16 %v4465, %v4458
    %v5355 = vpack.c.b16 %v4466, %v4459
    %v5356 = vpack.c.b16 %v4474, %v4467
    %v5357 = vpack.c.b16 %v4475, %v4468
    %v5358 = vpack.c.b16 %v4476, %v4469
    %v5359 = vpack.c.b16 %v4477, %v4470
    %v5360 = vpack.c.b16 %v4478, %v4471
    %v5361 = vpack.c.b16 %v4479, %v4472
    %v5362 = vpack.c.b16 %v4480, %v4473
    %v5363 = vpack.c.b16 %v4488, %v4481
    %v5364 = vpack.c.b16 %v4489, %v4482
    %v5365 = vpack.c.b16 %v4490, %v4483
    %v5366 = vpack.c.b16 %v4491, %v4484
    %v5367 = vpack.c.b16 %v4492, %v4485
    %v5368 = vpack.c.b16 %v4493, %v4486
    %v5369 = vpack.c.b16 %v4494, %v4487
    %v5370 = vpack.c.b16 %v4502, %v4495
    %v5371 = vpack.c.b16 %v4503, %v4496
    %v5372 = vpack.c.b16 %v4504, %v4497
    %v5373 = vpack.c.b16 %v4505, %v4498
    %v5374 = vpack.c.b16 %v4506, %v4499
    %v5375 = vpack.c.b16 %v4507, %v4500
    %v5376 = vpack.c.b16 %v4508, %v4501
    %v5377 = vpack.c.b16 %v4516, %v4509
    %v5378 = vpack.c.b16 %v4517, %v4510
    %v5379 = vpack.c.b16 %v4518, %v4511
    %v5380 = vpack.c.b16 %v4519, %v4512
    %v5381 = vpack.c.b16 %v4520, %v4513
    %v5382 = vpack.c.b16 %v4521, %v4514
    %v5383 = vpack.c.b16 %v4522, %v4515
    %v5384 = vpack.c.b16 %v4530, %v4523
    %v5385 = vpack.c.b16 %v4531, %v4524
    %v5386 = vpack.c.b16 %v4532, %v4525
    %v5387 = vpack.c.b16 %v4533, %v4526
    %v5388 = vpack.c.b16 %v4534, %v4527
    %v5389 = vpack.c.b16 %v4535, %v4528
    %v5390 = vpack.c.b16 %v4536, %v4529
    %v5391 = vpack.c.b16 %v4544, %v4537
    %v5392 = vpack.c.b16 %v4545, %v4538
    %v5393 = vpack.c.b16 %v4546, %v4539
    %v5394 = vpack.c.b16 %v4547, %v4540
    %v5395 = vpack.c.b16 %v4548, %v4541
    %v5396 = vpack.c.b16 %v4549, %v4542
    %v5397 = vpack.c.b16 %v4550, %v4543
    %v5398 = vpack.c.b16 %v4558, %v4551
    %v5399 = vpack.c.b16 %v4559, %v4552
    %v5400 = vpack.c.b16 %v4560, %v4553
    %v5401 = vpack.c.b16 %v4561, %v4554
    %v5402 = vpack.c.b16 %v4562, %v4555
    %v5403 = vpack.c.b16 %v4563, %v4556
    %v5404 = vpack.c.b16 %v4564, %v4557
    %v5405 = vpack.c.b16 %v4572, %v4565
    %v5406 = vpack.c.b16 %v4573, %v4566
    %v5407 = vpack.c.b16 %v4574, %v4567
    %v5408 = vpack.c.b16 %v4575, %v4568
    %v5409 = vpack.c.b16 %v4576, %v4569
    %v5410 = vpack.c.b16 %v4577, %v4570
    %v5411 = vpack.c.b16 %v4578, %v4571
    %v5412 = vpack.c.b16 %v4586, %v4579
    %v5413 = vpack.c.b16 %v4587, %v4580
    %v5414 = vpack.c.b16 %v4588, %v4581
    %v5415 = vpack.c.b16 %v4589, %v4582
    %v5416 = vpack.c.b16 %v4590, %v4583
    %v5417 = vpack.c.b16 %v4591, %v4584
    %v5418 = vpack.c.b16 %v4592, %v4585
    %v5419 = vpack.c.b16 %v4600, %v4593
    %v5420 = vpack.c.b16 %v4601, %v4594
    %v5421 = vpack.c.b16 %v4602, %v4595
    %v5422 = vpack.c.b16 %v4603, %v4596
    %v5423 = vpack.c.b16 %v4604, %v4597
    %v5424 = vpack.c.b16 %v4605, %v4598
    %v5425 = vpack.c.b16 %v4606, %v4599
    %v5426 = vpack.c.b16 %v4614, %v4607
    %v5427 = vpack.c.b16 %v4615, %v4608
    %v5428 = vpack.c.b16 %v4616, %v4609
    %v5429 = vpack.c.b16 %v4617, %v4610
    %v5430 = vpack.c.b16 %v4618, %v4611
    %v5431 = vpack.c.b16 %v4619, %v4612
    %v5432 = vpack.c.b16 %v4620, %v4613
    %v5433 = vpack.c.b16 %v4628, %v4621
    %v5434 = vpack.c.b16 %v4629, %v4622
    %v5435 = vpack.c.b16 %v4630, %v4623
    %v5436 = vpack.c.b16 %v4631, %v4624
    %v5437 = vpack.c.b16 %v4632, %v4625
    %v5438 = vpack.c.b16 %v4633, %v4626
    %v5439 = vpack.c.b16 %v4634, %v4627
    %v5440 = vpack.c.b16 %v4642, %v4635
    %v5441 = vpack.c.b16 %v4643, %v4636
    %v5442 = vpack.c.b16 %v4644, %v4637
    %v5443 = vpack.c.b16 %v4645, %v4638
    %v5444 = vpack.c.b16 %v4646, %v4639
    %v5445 = vpack.c.b16 %v4647, %v4640
    %v5446 = vpack.c.b16 %v4648, %v4641
    %v5447 = vpack.c.b16 %v4656, %v4649
    %v5448 = vpack.c.b16 %v4657, %v4650
    %v5449 = vpack.c.b16 %v4658, %v4651
    %v5450 = vpack.c.b16 %v4659, %v4652
    %v5451 = vpack.c.b16 %v4660, %v4653
    %v5452 = vpack.c.b16 %v4661, %v4654
    %v5453 = vpack.c.b16 %v4662, %v4655
    %v5454 = vpack.c.b16 %v4670, %v4663
    %v5455 = vpack.c.b16 %v4671, %v4664
    %v5456 = vpack.c.b16 %v4672, %v4665
    %v5457 = vpack.c.b16 %v4673, %v4666
    %v5458 = vpack.c.b16 %v4674, %v4667
    %v5459 = vpack.c.b16 %v4675, %v4668
    %v5460 = vpack.c.b16 %v4676, %v4669
    %v5461 = vpack.c.b16 %v4684, %v4677
    %v5462 = vpack.c.b16 %v4685, %v4678
    %v5463 = vpack.c.b16 %v4686, %v4679
    %v5464 = vpack.c.b16 %v4687, %v4680
    %v5465 = vpack.c.b16 %v4688, %v4681
    %v5466 = vpack.c.b16 %v4689, %v4682
    %v5467 = vpack.c.b16 %v4690, %v4683
    %v5468 = vpack.c.b16 %v4698, %v4691
    %v5469 = vpack.c.b16 %v4699, %v4692
    %v5470 = vpack.c.b16 %v4700, %v4693
    %v5471 = vpack.c.b16 %v4701, %v4694
    %v5472 = vpack.c.b16 %v4702, %v4695
    %v5473 = vpack.c.b16 %v4703, %v4696
    %v5474 = vpack.c.b16 %v4704, %v4697
    %v5475 = vpack.c.b16 %v4712, %v4705
    %v5476 = vpack.c.b16 %v4713, %v4706
    %v5477 = vpack.c.b16 %v4714, %v4707
    %v5478 = vpack.c.b16 %v4715, %v4708
    %v5479 = vpack.c.b16 %v4716, %v4709
    %v5480 = vpack.c.b16 %v4717, %v4710
    %v5481 = vpack.c.b16 %v4718, %v4711
    %v5482 = vpack.c.b16 %v4726, %v4719
    %v5483 = vpack.c.b16 %v4727, %v4720
    %v5484 = vpack.c.b16 %v4728, %v4721
    %v5485 = vpack.c.b16 %v4729, %v4722
    %v5486 = vpack.c.b16 %v4730, %v4723
    %v5487 = vpack.c.b16 %v4731, %v4724
    %v5488 = vpack.c.b16 %v4732, %v4725
    %v5489 = vpack.c.b16 %v4740, %v4733
    %v5490 = vpack.c.b16 %v4741, %v4734
    %v5491 = vpack.c.b16 %v4742, %v4735
    %v5492 = vpack.c.b16 %v4743, %v4736
    %v5493 = vpack.c.b16 %v4744, %v4737
    %v5494 = vpack.c.b16 %v4745, %v4738
    %v5495 = vpack.c.b16 %v4746, %v4739
    %v5496 = vpack.c.b16 %v4754, %v4747
    %v5497 = vpack.c.b16 %v4755, %v4748
    %v5498 = vpack.c.b16 %v4756, %v4749
    %v5499 = vpack.c.b16 %v4757, %v4750
    %v5500 = vpack.c.b16 %v4758, %v4751
    %v5501 = vpack.c.b16 %v4759, %v4752
    %v5502 = vpack.c.b16 %v4760, %v4753
    %v5503 = vpack.c.b16 %v4768, %v4761
    %v5504 = vpack.c.b16 %v4769, %v4762
    %v5505 = vpack.c.b16 %v4770, %v4763
    %v5506 = vpack.c.b16 %v4771, %v4764
    %v5507 = vpack.c.b16 %v4772, %v4765
    %v5508 = vpack.c.b16 %v4773, %v4766
    %v5509 = vpack.c.b16 %v4774, %v4767
    %v5510 = vpack.c.b16 %v4782, %v4775
    %v5511 = vpack.c.b16 %v4783, %v4776
    %v5512 = vpack.c.b16 %v4784, %v4777
    %v5513 = vpack.c.b16 %v4785, %v4778
    %v5514 = vpack.c.b16 %v4786, %v4779
    %v5515 = vpack.c.b16 %v4787, %v4780
    %v5516 = vpack.c.b16 %v4788, %v4781
    %v5517 = vpack.c.b16 %v4796, %v4789
    %v5518 = vpack.c.b16 %v4797, %v4790
    %v5519 = vpack.c.b16 %v4798, %v4791
    %v5520 = vpack.c.b16 %v4799, %v4792
    %v5521 = vpack.c.b16 %v4800, %v4793
    %v5522 = vpack.c.b16 %v4801, %v4794
    %v5523 = vpack.c.b16 %v4802, %v4795
    %v5524 = vpack.c.b16 %v4810, %v4803
    %v5525 = vpack.c.b16 %v4811, %v4804
    %v5526 = vpack.c.b16 %v4812, %v4805
    %v5527 = vpack.c.b16 %v4813, %v4806
    %v5528 = vpack.c.b16 %v4814, %v4807
    %v5529 = vpack.c.b16 %v4815, %v4808
    %v5530 = vpack.c.b16 %v4816, %v4809
    %v5531 = vpack.c.b16 %v4824, %v4817
    %v5532 = vpack.c.b16 %v4825, %v4818
    %v5533 = vpack.c.b16 %v4826, %v4819
    %v5534 = vpack.c.b16 %v4827, %v4820
    %v5535 = vpack.c.b16 %v4828, %v4821
    %v5536 = vpack.c.b16 %v4829, %v4822
    %v5537 = vpack.c.b16 %v4830, %v4823
    %v5538 = vpack.c.b16 %v4838, %v4831
    %v5539 = vpack.c.b16 %v4839, %v4832
    %v5540 = vpack.c.b16 %v4840, %v4833
    %v5541 = vpack.c.b16 %v4841, %v4834
    %v5542 = vpack.c.b16 %v4842, %v4835
    %v5543 = vpack.c.b16 %v4843, %v4836
    %v5544 = vpack.c.b16 %v4844, %v4837
    %v5545 = vpack.c.b16 %v4852, %v4845
    %v5546 = vpack.c.b16 %v4853, %v4846
    %v5547 = vpack.c.b16 %v4854, %v4847
    %v5548 = vpack.c.b16 %v4855, %v4848
    %v5549 = vpack.c.b16 %v4856, %v4849
    %v5550 = vpack.c.b16 %v4857, %v4850
    %v5551 = vpack.c.b16 %v4858, %v4851
    %v5552 = vpack.c.b16 %v4866, %v4859
    %v5553 = vpack.c.b16 %v4867, %v4860
    %v5554 = vpack.c.b16 %v4868, %v4861
    %v5555 = vpack.c.b16 %v4869, %v4862
    %v5556 = vpack.c.b16 %v4870, %v4863
    %v5557 = vpack.c.b16 %v4871, %v4864
    %v5558 = vpack.c.b16 %v4872, %v4865
    %v5559 = vpack.c.b16 %v4880, %v4873
    %v5560 = vpack.c.b16 %v4881, %v4874
    %v5561 = vpack.c.b16 %v4882, %v4875
    %v5562 = vpack.c.b16 %v4883, %v4876
    %v5563 = vpack.c.b16 %v4884, %v4877
    %v5564 = vpack.c.b16 %v4885, %v4878
    %v5565 = vpack.c.b16 %v4886, %v4879
    %v5566 = vpack.c.b16 %v4894, %v4887
    %v5567 = vpack.c.b16 %v4895, %v4888
    %v5568 = vpack.c.b16 %v4896, %v4889
    %v5569 = vpack.c.b16 %v4897, %v4890
    %v5570 = vpack.c.b16 %v4898, %v4891
    %v5571 = vpack.c.b16 %v4899, %v4892
    %v5572 = vpack.c.b16 %v4900, %v4893
    %v5573 = vpack.c.b16 %v4908, %v4901
    %v5574 = vpack.c.b16 %v4909, %v4902
    %v5575 = vpack.c.b16 %v4910, %v4903
    %v5576 = vpack.c.b16 %v4911, %v4904
    %v5577 = vpack.c.b16 %v4912, %v4905
    %v5578 = vpack.c.b16 %v4913, %v4906
    %v5579 = vpack.c.b16 %v4914, %v4907
    %v5580 = vpack.c.b16 %v4922, %v4915
    %v5581 = vpack.c.b16 %v4923, %v4916
    %v5582 = vpack.c.b16 %v4924, %v4917
    %v5583 = vpack.c.b16 %v4925, %v4918
    %v5584 = vpack.c.b16 %v4926, %v4919
    %v5585 = vpack.c.b16 %v4927, %v4920
    %v5586 = vpack.c.b16 %v4928, %v4921
    %v5587 = vpack.c.b16 %v4936, %v4929
    %v5588 = vpack.c.b16 %v4937, %v4930
    %v5589 = vpack.c.b16 %v4938, %v4931
    %v5590 = vpack.c.b16 %v4939, %v4932
    %v5591 = vpack.c.b16 %v4940, %v4933
    %v5592 = vpack.c.b16 %v4941, %v4934
    %v5593 = vpack.c.b16 %v4942, %v4935
    %v5594 = vpack.c.b16 %v4950, %v4943
    %v5595 = vpack.c.b16 %v4951, %v4944
    %v5596 = vpack.c.b16 %v4952, %v4945
    %v5597 = vpack.c.b16 %v4953, %v4946
    %v5598 = vpack.c.b16 %v4954, %v4947
    %v5599 = vpack.c.b16 %v4955, %v4948
    %v5600 = vpack.c.b16 %v4956, %v4949
    %v5601 = vpack.c.b16 %v4964, %v4957
    %v5602 = vpack.c.b16 %v4965, %v4958
    %v5603 = vpack.c.b16 %v4966, %v4959
    %v5604 = vpack.c.b16 %v4967, %v4960
    %v5605 = vpack.c.b16 %v4968, %v4961
    %v5606 = vpack.c.b16 %v4969, %v4962
    %v5607 = vpack.c.b16 %v4970, %v4963
    %v5608 = vpack.c.b16 %v4978, %v4971
    %v5609 = vpack.c.b16 %v4979, %v4972
    %v5610 = vpack.c.b16 %v4980, %v4973
    %v5611 = vpack.c.b16 %v4981, %v4974
    %v5612 = vpack.c.b16 %v4982, %v4975
    %v5613 = vpack.c.b16 %v4983, %v4976
    %v5614 = vpack.c.b16 %v4984, %v4977
    %v5615 = vpack.c.b16 %v4992, %v4985
    %v5616 = vpack.c.b16 %v4993, %v4986
    %v5617 = vpack.c.b16 %v4994, %v4987
    %v5618 = vpack.c.b16 %v4995, %v4988
    %v5619 = vpack.c.b16 %v4996, %v4989
    %v5620 = vpack.c.b16 %v4997, %v4990
    %v5621 = vpack.c.b16 %v4998, %v4991
    %v5622 = vpack.c.b16 %v5006, %v4999
    %v5623 = vpack.c.b16 %v5007, %v5000
    %v5624 = vpack.c.b16 %v5008, %v5001
    %v5625 = vpack.c.b16 %v5009, %v5002
    %v5626 = vpack.c.b16 %v5010, %v5003
    %v5627 = vpack.c.b16 %v5011, %v5004
    %v5628 = vpack.c.b16 %v5012, %v5005
    %v5629 = vpack.c.b16 %v5020, %v5013
    %v5630 = vpack.c.b16 %v5021, %v5014
    %v5631 = vpack.c.b16 %v5022, %v5015
    %v5632 = vpack.c.b16 %v5023, %v5016
    %v5633 = vpack.c.b16 %v5024, %v5017
    %v5634 = vpack.c.b16 %v5025, %v5018
    %v5635 = vpack.c.b16 %v5026, %v5019
    %v5636 = vpack.c.b16 %v5034, %v5027
    %v5637 = vpack.c.b16 %v5035, %v5028
    %v5638 = vpack.c.b16 %v5036, %v5029
    %v5639 = vpack.c.b16 %v5037, %v5030
    %v5640 = vpack.c.b16 %v5038, %v5031
    %v5641 = vpack.c.b16 %v5039, %v5032
    %v5642 = vpack.c.b16 %v5040, %v5033
    %v5643 = vpack.c.b16 %v5048, %v5041
    %v5644 = vpack.c.b16 %v5049, %v5042
    %v5645 = vpack.c.b16 %v5050, %v5043
    %v5646 = vpack.c.b16 %v5051, %v5044
    %v5647 = vpack.c.b16 %v5052, %v5045
    %v5648 = vpack.c.b16 %v5053, %v5046
    %v5649 = vpack.c.b16 %v5054, %v5047
    %v5650 = vpack.c.b16 %v5062, %v5055
    %v5651 = vpack.c.b16 %v5063, %v5056
    %v5652 = vpack.c.b16 %v5064, %v5057
    %v5653 = vpack.c.b16 %v5065, %v5058
    %v5654 = vpack.c.b16 %v5066, %v5059
    %v5655 = vpack.c.b16 %v5067, %v5060
    %v5656 = vpack.c.b16 %v5068, %v5061
    %v5657 = vpack.c.b16 %v5076, %v5069
    %v5658 = vpack.c.b16 %v5077, %v5070
    %v5659 = vpack.c.b16 %v5078, %v5071
    %v5660 = vpack.c.b16 %v5079, %v5072
    %v5661 = vpack.c.b16 %v5080, %v5073
    %v5662 = vpack.c.b16 %v5081, %v5074
    %v5663 = vpack.c.b16 %v5082, %v5075
    %v5664 = vpack.c.b16 %v5090, %v5083
    %v5665 = vpack.c.b16 %v5091, %v5084
    %v5666 = vpack.c.b16 %v5092, %v5085
    %v5667 = vpack.c.b16 %v5093, %v5086
    %v5668 = vpack.c.b16 %v5094, %v5087
    %v5669 = vpack.c.b16 %v5095, %v5088
    %v5670 = vpack.c.b16 %v5096, %v5089
    %v5671 = vpack.c.b16 %v5104, %v5097
    %v5672 = vpack.c.b16 %v5105, %v5098
    %v5673 = vpack.c.b16 %v5106, %v5099
    %v5674 = vpack.c.b16 %v5107, %v5100
    %v5675 = vpack.c.b16 %v5108, %v5101
    %v5676 = vpack.c.b16 %v5109, %v5102
    %v5677 = vpack.c.b16 %v5110, %v5103
    %v5678 = vpack.c.b16 %v5118, %v5111
    %v5679 = vpack.c.b16 %v5119, %v5112
    %v5680 = vpack.c.b16 %v5120, %v5113
    %v5681 = vpack.c.b16 %v5121, %v5114
    %v5682 = vpack.c.b16 %v5122, %v5115
    %v5683 = vpack.c.b16 %v5123, %v5116
    %v5684 = vpack.c.b16 %v5124, %v5117
    %v5685 = vpack.c.b16 %v5132, %v5125
    %v5686 = vpack.c.b16 %v5133, %v5126
    %v5687 = vpack.c.b16 %v5134, %v5127
    %v5688 = vpack.c.b16 %v5135, %v5128
    %v5689 = vpack.c.b16 %v5136, %v5129
    %v5690 = vpack.c.b16 %v5137, %v5130
    %v5691 = vpack.c.b16 %v5138, %v5131
    %v5692 = vpack.c.b16 %v5146, %v5139
    %v5693 = vpack.c.b16 %v5147, %v5140
    %v5694 = vpack.c.b16 %v5148, %v5141
    %v5695 = vpack.c.b16 %v5149, %v5142
    %v5696 = vpack.c.b16 %v5150, %v5143
    %v5697 = vpack.c.b16 %v5151, %v5144
    %v5698 = vpack.c.b16 %v5152, %v5145
    %v5699 = vpack.c.b16 %v5160, %v5153
    %v5700 = vpack.c.b16 %v5161, %v5154
    %v5701 = vpack.c.b16 %v5162, %v5155
    %v5702 = vpack.c.b16 %v5163, %v5156
    %v5703 = vpack.c.b16 %v5164, %v5157
    %v5704 = vpack.c.b16 %v5165, %v5158
    %v5705 = vpack.c.b16 %v5166, %v5159
    %v5706 = vpack.c.b16 %v5174, %v5167
    %v5707 = vpack.c.b16 %v5175, %v5168
    %v5708 = vpack.c.b16 %v5176, %v5169
    %v5709 = vpack.c.b16 %v5177, %v5170
    %v5710 = vpack.c.b16 %v5178, %v5171
    %v5711 = vpack.c.b16 %v5179, %v5172
    %v5712 = vpack.c.b16 %v5180, %v5173
    %v5713 = vpack.c.b16 %v5188, %v5181
    %v5714 = vpack.c.b16 %v5189, %v5182
    %v5715 = vpack.c.b16 %v5190, %v5183
    %v5716 = vpack.c.b16 %v5191, %v5184
    %v5717 = vpack.c.b16 %v5192, %v5185
    %v5718 = vpack.c.b16 %v5193, %v5186
    %v5719 = vpack.c.b16 %v5194, %v5187
    %v5720 = vpack.c.b16 %v5202, %v5195
    %v5721 = vpack.c.b16 %v5203, %v5196
    %v5722 = vpack.c.b16 %v5204, %v5197
    %v5723 = vpack.c.b16 %v5205, %v5198
    %v5724 = vpack.c.b16 %v5206, %v5199
    %v5725 = vpack.c.b16 %v5207, %v5200
    %v5726 = vpack.c.b16 %v5208, %v5201
    %v5727 = vpack.c.b16 %v5216, %v5209
    %v5728 = vpack.c.b16 %v5217, %v5210
    %v5729 = vpack.c.b16 %v5218, %v5211
    %v5730 = vpack.c.b16 %v5219, %v5212
    %v5731 = vpack.c.b16 %v5220, %v5213
    %v5732 = vpack.c.b16 %v5221, %v5214
    %v5733 = vpack.c.b16 %v5222, %v5215
    %v5734 = vpack.c.b16 %v5230, %v5223
    %v5735 = vpack.c.b16 %v5231, %v5224
    %v5736 = vpack.c.b16 %v5232, %v5225
    %v5737 = vpack.c.b16 %v5233, %v5226
    %v5738 = vpack.c.b16 %v5234, %v5227
    %v5739 = vpack.c.b16 %v5235, %v5228
    %v5740 = vpack.c.b16 %v5236, %v5229
    %v5741 = vpack.c.b16 %v5244, %v5237
    %v5742 = vpack.c.b16 %v5245, %v5238
    %v5743 = vpack.c.b16 %v5246, %v5239
    %v5744 = vpack.c.b16 %v5247, %v5240
    %v5745 = vpack.c.b16 %v5248, %v5241
    %v5746 = vpack.c.b16 %v5249, %v5242
    %v5747 = vpack.c.b16 %v5250, %v5243
    %v5748 = vpack.c.b16 %v5258, %v5251
    %v5749 = vpack.c.b16 %v5259, %v5252
    %v5750 = vpack.c.b16 %v5260, %v5253
    %v5751 = vpack.c.b16 %v5261, %v5254
    %v5752 = vpack.c.b16 %v5262, %v5255
    %v5753 = vpack.c.b16 %v5263, %v5256
    %v5754 = vpack.c.b16 %v5264, %v5257
    %v5755 = vpack.c.b16 %v5272, %v5265
    %v5756 = vpack.c.b16 %v5273, %v5266
    %v5757 = vpack.c.b16 %v5274, %v5267
    %v5758 = vpack.c.b16 %v5275, %v5268
    %v5759 = vpack.c.b16 %v5276, %v5269
    %v5760 = vpack.c.b16 %v5277, %v5270
    %v5761 = vpack.c.b16 %v5278, %v5271
    %v5762 = vpack.c.b16 %v5286, %v5279
    %v5763 = vpack.c.b16 %v5287, %v5280
    %v5764 = vpack.c.b16 %v5288, %v5281
    %v5765 = vpack.c.b16 %v5289, %v5282
    %v5766 = vpack.c.b16 %v5290, %v5283
    %v5767 = vpack.c.b16 %v5291, %v5284
    %v5768 = vpack.c.b16 %v5292, %v5285
    %v5769 = vpack.c.b16 %v5300, %v5293
    %v5770 = vpack.c.b16 %v5301, %v5294
    %v5771 = vpack.c.b16 %v5302, %v5295
    %v5772 = vpack.c.b16 %v5303, %v5296
    %v5773 = vpack.c.b16 %v5304, %v5297
    %v5774 = vpack.c.b16 %v5305, %v5298
    %v5775 = vpack.c.b16 %v5306, %v5299
    %v5776 = vpack.c.b16 %v5314, %v5307
    %v5777 = vpack.c.b16 %v5315, %v5308
    %v5778 = vpack.c.b16 %v5316, %v5309
    %v5779 = vpack.c.b16 %v5317, %v5310
    %v5780 = vpack.c.b16 %v5318, %v5311
    %v5781 = vpack.c.b16 %v5319, %v5312
    %v5782 = vpack.c.b16 %v5320, %v5313
    %v5783 = vpack.c.b16 %v5328, %v5321
    %v5784 = vpack.c.b16 %v5329, %v5322
    %v5785 = vpack.c.b16 %v5330, %v5323
    %v5786 = vpack.c.b16 %v5331, %v5324
    %v5787 = vpack.c.b16 %v5332, %v5325
    %v5788 = vpack.c.b16 %v5333, %v5326
    %v5789 = vpack.c.b16 %v5334, %v5327
    %v5790 = vpack.c.b16 %v5342, %v5335
    %v5791 = vpack.c.b16 %v5343, %v5336
    %v5792 = vpack.c.b16 %v5344, %v5337
    %v5793 = vpack.c.b16 %v5345, %v5338
    %v5794 = vpack.c.b16 %v5346, %v5339
    %v5795 = vpack.c.b16 %v5347, %v5340
    %v5796 = vpack.c.b16 %v5348, %v5341
    %6245 = vmatprep.subr.bf16.mxu0 %v5350
    %6246 = vmatpush1.bf16.msra.mxu0 %v5349
    %6247 = vmatprep.subr.bf16.mxu0 %v5357
    %6248 = vmatpush1.bf16.msra.mxu0 %v5356
    %6249 = vmatprep.subr.bf16.mxu0 %v5364
    %6250 = vmatpush1.bf16.msra.mxu0 %v5363
    %6251 = vmatprep.subr.bf16.mxu0 %v5371
    %6252 = vmatpush1.bf16.msra.mxu0 %v5370
    %6253 = vmatprep.subr.bf16.mxu0 %v5378
    %6254 = vmatpush1.bf16.msra.mxu0 %v5377
    %6255 = vmatprep.subr.bf16.mxu0 %v5385
    %6256 = vmatpush1.bf16.msra.mxu0 %v5384
    %6257 = vmatprep.subr.bf16.mxu0 %v5392
    %6258 = vmatpush1.bf16.msra.mxu0 %v5391
    %6259 = vmatprep.subr.bf16.mxu0 %v5399
    %6260 = vmatpush1.bf16.msra.mxu0 %v5398
    %6261 = vmatprep.subr.bf16.mxu0 %v5406
    %6262 = vmatpush1.bf16.msra.mxu0 %v5405
    %6263 = vmatprep.subr.bf16.mxu0 %v5413
    %6264 = vmatpush1.bf16.msra.mxu0 %v5412
    %6265 = vmatprep.subr.bf16.mxu0 %v5420
    %6266 = vmatpush1.bf16.msra.mxu0 %v5419
    %6267 = vmatprep.subr.bf16.mxu0 %v5427
    %6268 = vmatpush1.bf16.msra.mxu0 %v5426
    %6269 = vmatprep.subr.bf16.mxu0 %v5434
    %6270 = vmatpush1.bf16.msra.mxu0 %v5433
    %6271 = vmatprep.subr.bf16.mxu0 %v5441
    %6272 = vmatpush1.bf16.msra.mxu0 %v5440
    %6273 = vmatprep.subr.bf16.mxu0 %v5448
    %6274 = vmatpush1.bf16.msra.mxu0 %v5447
    %6275 = vmatprep.subr.bf16.mxu0 %v5455
    %6276 = vmatpush1.bf16.msra.mxu0 %v5454
    %6277 = vmatprep.mubr.bf16.mxu0 %v3385
    %6278 = vmatmul.mubr.bf16.gmra.mrb[0].mxu0 %v3384
    %v6279 = vpop.f32.mrb[0].mxu0
    %v6280 = vadd.f32 %v3909, %v6279
    %v6281 = vpop.f32.mrb[0].mxu0
    %v6282 = vadd.f32 %v3913, %v6281
    %v6283 = vpop.f32.mrb[0].mxu0
    %v6284 = vpop.f32.mrb[0].mxu0
    %6285 = vdwg.mxu0
    %6286 = vmatprep.subr.bf16.mxu0 %v5462
    %6287 = vmatpush1.bf16.msra.mxu0 %v5461
    %6288 = vmatprep.subr.bf16.mxu0 %v5469
    %6289 = vmatpush1.bf16.msra.mxu0 %v5468
    %6290 = vmatprep.subr.bf16.mxu0 %v5476
    %6291 = vmatpush1.bf16.msra.mxu0 %v5475
    %6292 = vmatprep.subr.bf16.mxu0 %v5483
    %6293 = vmatpush1.bf16.msra.mxu0 %v5482
    %6294 = vmatprep.subr.bf16.mxu0 %v5490
    %6295 = vmatpush1.bf16.msra.mxu0 %v5489
    %6296 = vmatprep.subr.bf16.mxu0 %v5497
    %6297 = vmatpush1.bf16.msra.mxu0 %v5496
    %6298 = vmatprep.subr.bf16.mxu0 %v5504
    %6299 = vmatpush1.bf16.msra.mxu0 %v5503
    %6300 = vmatprep.subr.bf16.mxu0 %v5511
    %6301 = vmatpush1.bf16.msra.mxu0 %v5510
    %6302 = vmatprep.subr.bf16.mxu0 %v5518
    %6303 = vmatpush1.bf16.msra.mxu0 %v5517
    %6304 = vmatprep.subr.bf16.mxu0 %v5525
    %6305 = vmatpush1.bf16.msra.mxu0 %v5524
    %6306 = vmatprep.subr.bf16.mxu0 %v5532
    %6307 = vmatpush1.bf16.msra.mxu0 %v5531
    %6308 = vmatprep.subr.bf16.mxu0 %v5539
    %6309 = vmatpush1.bf16.msra.mxu0 %v5538
    %6310 = vmatprep.subr.bf16.mxu0 %v5546
    %6311 = vmatpush1.bf16.msra.mxu0 %v5545
    %6312 = vmatprep.subr.bf16.mxu0 %v5553
    %6313 = vmatpush1.bf16.msra.mxu0 %v5552
    %6314 = vmatprep.subr.bf16.mxu0 %v5560
    %6315 = vmatpush1.bf16.msra.mxu0 %v5559
    %6316 = vmatprep.subr.bf16.mxu0 %v5567
    %6317 = vmatpush1.bf16.msra.mxu0 %v5566
    %6318 = vmatprep.mubr.bf16.mxu0 %v3387
    %6319 = vmatmul.mubr.bf16.gmra.mrb[0].mxu0 %v3386
    %v6320 = vpop.f32.mrb[0].mxu0
    %v6321 = vadd.f32 %v6280, %v6320
    %v6322 = vpop.f32.mrb[0].mxu0
    %v6323 = vadd.f32 %v6282, %v6322
    %v6324 = vpop.f32.mrb[0].mxu0
    %v6325 = vpop.f32.mrb[0].mxu0
    %6326 = vdwg.mxu0
    %6327 = vmatprep.subr.bf16.mxu0 %v5574
    %6328 = vmatpush1.bf16.msra.mxu0 %v5573
    %6329 = vmatprep.subr.bf16.mxu0 %v5581
    %6330 = vmatpush1.bf16.msra.mxu0 %v5580
    %6331 = vmatprep.subr.bf16.mxu0 %v5588
    %6332 = vmatpush1.bf16.msra.mxu0 %v5587
    %6333 = vmatprep.subr.bf16.mxu0 %v5595
    %6334 = vmatpush1.bf16.msra.mxu0 %v5594
    %6335 = vmatprep.subr.bf16.mxu0 %v5602
    %6336 = vmatpush1.bf16.msra.mxu0 %v5601
    %6337 = vmatprep.subr.bf16.mxu0 %v5609
    %6338 = vmatpush1.bf16.msra.mxu0 %v5608
    %6339 = vmatprep.subr.bf16.mxu0 %v5616
    %6340 = vmatpush1.bf16.msra.mxu0 %v5615
    %6341 = vmatprep.subr.bf16.mxu0 %v5623
    %6342 = vmatpush1.bf16.msra.mxu0 %v5622
    %6343 = vmatprep.subr.bf16.mxu0 %v5630
    %6344 = vmatpush1.bf16.msra.mxu0 %v5629
    %6345 = vmatprep.subr.bf16.mxu0 %v5637
    %6346 = vmatpush1.bf16.msra.mxu0 %v5636
    %6347 = vmatprep.subr.bf16.mxu0 %v5644
    %6348 = vmatpush1.bf16.msra.mxu0 %v5643
    %6349 = vmatprep.subr.bf16.mxu0 %v5651
    %6350 = vmatpush1.bf16.msra.mxu0 %v5650
    %6351 = vmatprep.subr.bf16.mxu0 %v5658
    %6352 = vmatpush1.bf16.msra.mxu0 %v5657
    %6353 = vmatprep.subr.bf16.mxu0 %v5665
    %6354 = vmatpush1.bf16.msra.mxu0 %v5664
    %6355 = vmatprep.subr.bf16.mxu0 %v5672
    %6356 = vmatpush1.bf16.msra.mxu0 %v5671
    %6357 = vmatprep.subr.bf16.mxu0 %v5679
    %6358 = vmatpush1.bf16.msra.mxu0 %v5678
    %6359 = vmatprep.mubr.bf16.mxu0 %v3389
    %6360 = vmatmul.mubr.bf16.gmra.mrb[0].mxu0 %v3388
    %v6361 = vpop.f32.mrb[0].mxu0
    %v6362 = vadd.f32 %v6321, %v6361
    %v6363 = vpop.f32.mrb[0].mxu0
    %v6364 = vadd.f32 %v6323, %v6363
    %v6365 = vpop.f32.mrb[0].mxu0
    %v6366 = vpop.f32.mrb[0].mxu0
    %6367 = vdwg.mxu0
    %6368 = vmatprep.subr.bf16.mxu0 %v5686
    %6369 = vmatpush1.bf16.msra.mxu0 %v5685
    %6370 = vmatprep.subr.bf16.mxu0 %v5693
    %6371 = vmatpush1.bf16.msra.mxu0 %v5692
    %6372 = vmatprep.subr.bf16.mxu0 %v5700
    %6373 = vmatpush1.bf16.msra.mxu0 %v5699
    %6374 = vmatprep.subr.bf16.mxu0 %v5707
    %6375 = vmatpush1.bf16.msra.mxu0 %v5706
    %6376 = vmatprep.subr.bf16.mxu0 %v5714
    %6377 = vmatpush1.bf16.msra.mxu0 %v5713
    %6378 = vmatprep.subr.bf16.mxu0 %v5721
    %6379 = vmatpush1.bf16.msra.mxu0 %v5720
    %6380 = vmatprep.subr.bf16.mxu0 %v5728
    %6381 = vmatpush1.bf16.msra.mxu0 %v5727
    %6382 = vmatprep.subr.bf16.mxu0 %v5735
    %6383 = vmatpush1.bf16.msra.mxu0 %v5734
    %6384 = vmatprep.subr.bf16.mxu0 %v5742
    %6385 = vmatpush1.bf16.msra.mxu0 %v5741
    %6386 = vmatprep.subr.bf16.mxu0 %v5749
    %6387 = vmatpush1.bf16.msra.mxu0 %v5748
    %6388 = vmatprep.subr.bf16.mxu0 %v5756
    %6389 = vmatpush1.bf16.msra.mxu0 %v5755
    %6390 = vmatprep.subr.bf16.mxu0 %v5763
    %6391 = vmatpush1.bf16.msra.mxu0 %v5762
    %6392 = vmatprep.subr.bf16.mxu0 %v5770
    %6393 = vmatpush1.bf16.msra.mxu0 %v5769
    %6394 = vmatprep.subr.bf16.mxu0 %v5777
    %6395 = vmatpush1.bf16.msra.mxu0 %v5776
    %6396 = vmatprep.subr.bf16.mxu0 %v5784
    %6397 = vmatpush1.bf16.msra.mxu0 %v5783
    %6398 = vmatprep.subr.bf16.mxu0 %v5791
    %6399 = vmatpush1.bf16.msra.mxu0 %v5790
    %6400 = vmatprep.mubr.bf16.mxu0 %v3391
    %6401 = vmatmul.mubr.bf16.gmra.mrb[0].mxu0 %v3390
    %v6402 = vpop.f32.mrb[0].mxu0
    %v6403 = vadd.f32 %v6362, %v6402
    %v6404 = vpop.f32.mrb[0].mxu0
    %v6405 = vadd.f32 %v6364, %v6404
    %v6406 = vpop.f32.mrb[0].mxu0
    %v6407 = vpop.f32.mrb[0].mxu0
    %6408 = vdwg.mxu0
    %6409 = vmatprep.subr.bf16.mxu0 %v5352
    %6410 = vmatpush1.bf16.msra.mxu0 %v5351
    %6411 = vmatprep.subr.bf16.mxu0 %v5359
    %6412 = vmatpush1.bf16.msra.mxu0 %v5358
    %6413 = vmatprep.subr.bf16.mxu0 %v5366
    %6414 = vmatpush1.bf16.msra.mxu0 %v5365
    %6415 = vmatprep.subr.bf16.mxu0 %v5373
    %6416 = vmatpush1.bf16.msra.mxu0 %v5372
    %6417 = vmatprep.subr.bf16.mxu0 %v5380
    %6418 = vmatpush1.bf16.msra.mxu0 %v5379
    %6419 = vmatprep.subr.bf16.mxu0 %v5387
    %6420 = vmatpush1.bf16.msra.mxu0 %v5386
    %6421 = vmatprep.subr.bf16.mxu0 %v5394
    %6422 = vmatpush1.bf16.msra.mxu0 %v5393
    %6423 = vmatprep.subr.bf16.mxu0 %v5401
    %6424 = vmatpush1.bf16.msra.mxu0 %v5400
    %6425 = vmatprep.subr.bf16.mxu0 %v5408
    %6426 = vmatpush1.bf16.msra.mxu0 %v5407
    %6427 = vmatprep.subr.bf16.mxu0 %v5415
    %6428 = vmatpush1.bf16.msra.mxu0 %v5414
    %6429 = vmatprep.subr.bf16.mxu0 %v5422
    %6430 = vmatpush1.bf16.msra.mxu0 %v5421
    %6431 = vmatprep.subr.bf16.mxu0 %v5429
    %6432 = vmatpush1.bf16.msra.mxu0 %v5428
    %6433 = vmatprep.subr.bf16.mxu0 %v5436
    %6434 = vmatpush1.bf16.msra.mxu0 %v5435
    %6435 = vmatprep.subr.bf16.mxu0 %v5443
    %6436 = vmatpush1.bf16.msra.mxu0 %v5442
    %6437 = vmatprep.subr.bf16.mxu0 %v5450
    %6438 = vmatpush1.bf16.msra.mxu0 %v5449
    %6439 = vmatprep.subr.bf16.mxu0 %v5457
    %6440 = vmatpush1.bf16.msra.mxu0 %v5456
    %6441 = vmatprep.mubr.bf16.mxu0 %v3385
    %6442 = vmatmul.mubr.bf16.gmra.mrb[0].mxu0 %v3384
    %v6443 = vpop.f32.mrb[0].mxu0
    %v6444 = vadd.f32 %v3917, %v6443
    %v6445 = vpop.f32.mrb[0].mxu0
    %v6446 = vadd.f32 %v3921, %v6445
    %v6447 = vpop.f32.mrb[0].mxu0
    %v6448 = vpop.f32.mrb[0].mxu0
    %6449 = vdwg.mxu0
    %6450 = vmatprep.subr.bf16.mxu0 %v5464
    %6451 = vmatpush1.bf16.msra.mxu0 %v5463
    %6452 = vmatprep.subr.bf16.mxu0 %v5471
    %6453 = vmatpush1.bf16.msra.mxu0 %v5470
    %6454 = vmatprep.subr.bf16.mxu0 %v5478
    %6455 = vmatpush1.bf16.msra.mxu0 %v5477
    %6456 = vmatprep.subr.bf16.mxu0 %v5485
    %6457 = vmatpush1.bf16.msra.mxu0 %v5484
    %6458 = vmatprep.subr.bf16.mxu0 %v5492
    %6459 = vmatpush1.bf16.msra.mxu0 %v5491
    %6460 = vmatprep.subr.bf16.mxu0 %v5499
    %6461 = vmatpush1.bf16.msra.mxu0 %v5498
    %6462 = vmatprep.subr.bf16.mxu0 %v5506
    %6463 = vmatpush1.bf16.msra.mxu0 %v5505
    %6464 = vmatprep.subr.bf16.mxu0 %v5513
    %6465 = vmatpush1.bf16.msra.mxu0 %v5512
    %6466 = vmatprep.subr.bf16.mxu0 %v5520
    %6467 = vmatpush1.bf16.msra.mxu0 %v5519
    %6468 = vmatprep.subr.bf16.mxu0 %v5527
    %6469 = vmatpush1.bf16.msra.mxu0 %v5526
    %6470 = vmatprep.subr.bf16.mxu0 %v5534
    %6471 = vmatpush1.bf16.msra.mxu0 %v5533
    %6472 = vmatprep.subr.bf16.mxu0 %v5541
    %6473 = vmatpush1.bf16.msra.mxu0 %v5540
    %6474 = vmatprep.subr.bf16.mxu0 %v5548
    %6475 = vmatpush1.bf16.msra.mxu0 %v5547
    %6476 = vmatprep.subr.bf16.mxu0 %v5555
    %6477 = vmatpush1.bf16.msra.mxu0 %v5554
    %6478 = vmatprep.subr.bf16.mxu0 %v5562
    %6479 = vmatpush1.bf16.msra.mxu0 %v5561
    %6480 = vmatprep.subr.bf16.mxu0 %v5569
    %6481 = vmatpush1.bf16.msra.mxu0 %v5568
    %6482 = vmatprep.mubr.bf16.mxu0 %v3387
    %6483 = vmatmul.mubr.bf16.gmra.mrb[0].mxu0 %v3386
    %v6484 = vpop.f32.mrb[0].mxu0
    %v6485 = vadd.f32 %v6444, %v6484
    %v6486 = vpop.f32.mrb[0].mxu0
    %v6487 = vadd.f32 %v6446, %v6486
    %v6488 = vpop.f32.mrb[0].mxu0
    %v6489 = vpop.f32.mrb[0].mxu0
    %6490 = vdwg.mxu0
    %6491 = vmatprep.subr.bf16.mxu0 %v5576
    %6492 = vmatpush1.bf16.msra.mxu0 %v5575
    %6493 = vmatprep.subr.bf16.mxu0 %v5583
    %6494 = vmatpush1.bf16.msra.mxu0 %v5582
    %6495 = vmatprep.subr.bf16.mxu0 %v5590
    %6496 = vmatpush1.bf16.msra.mxu0 %v5589
    %6497 = vmatprep.subr.bf16.mxu0 %v5597
    %6498 = vmatpush1.bf16.msra.mxu0 %v5596
    %6499 = vmatprep.subr.bf16.mxu0 %v5604
    %6500 = vmatpush1.bf16.msra.mxu0 %v5603
    %6501 = vmatprep.subr.bf16.mxu0 %v5611
    %6502 = vmatpush1.bf16.msra.mxu0 %v5610
    %6503 = vmatprep.subr.bf16.mxu0 %v5618
    %6504 = vmatpush1.bf16.msra.mxu0 %v5617
    %6505 = vmatprep.subr.bf16.mxu0 %v5625
    %6506 = vmatpush1.bf16.msra.mxu0 %v5624
    %6507 = vmatprep.subr.bf16.mxu0 %v5632
    %6508 = vmatpush1.bf16.msra.mxu0 %v5631
    %6509 = vmatprep.subr.bf16.mxu0 %v5639
    %6510 = vmatpush1.bf16.msra.mxu0 %v5638
    %6511 = vmatprep.subr.bf16.mxu0 %v5646
    %6512 = vmatpush1.bf16.msra.mxu0 %v5645
    %6513 = vmatprep.subr.bf16.mxu0 %v5653
    %6514 = vmatpush1.bf16.msra.mxu0 %v5652
    %6515 = vmatprep.subr.bf16.mxu0 %v5660
    %6516 = vmatpush1.bf16.msra.mxu0 %v5659
    %6517 = vmatprep.subr.bf16.mxu0 %v5667
    %6518 = vmatpush1.bf16.msra.mxu0 %v5666
    %6519 = vmatprep.subr.bf16.mxu0 %v5674
    %6520 = vmatpush1.bf16.msra.mxu0 %v5673
    %6521 = vmatprep.subr.bf16.mxu0 %v5681
    %6522 = vmatpush1.bf16.msra.mxu0 %v5680
    %6523 = vmatprep.mubr.bf16.mxu0 %v3389
    %6524 = vmatmul.mubr.bf16.gmra.mrb[0].mxu0 %v3388
    %v6525 = vpop.f32.mrb[0].mxu0
    %v6526 = vadd.f32 %v6485, %v6525
    %v6527 = vpop.f32.mrb[0].mxu0
    %v6528 = vadd.f32 %v6487, %v6527
    %v6529 = vpop.f32.mrb[0].mxu0
    %v6530 = vpop.f32.mrb[0].mxu0
    %6531 = vdwg.mxu0
    %6532 = vmatprep.subr.bf16.mxu0 %v5688
    %6533 = vmatpush1.bf16.msra.mxu0 %v5687
    %6534 = vmatprep.subr.bf16.mxu0 %v5695
    %6535 = vmatpush1.bf16.msra.mxu0 %v5694
    %6536 = vmatprep.subr.bf16.mxu0 %v5702
    %6537 = vmatpush1.bf16.msra.mxu0 %v5701
    %6538 = vmatprep.subr.bf16.mxu0 %v5709
    %6539 = vmatpush1.bf16.msra.mxu0 %v5708
    %6540 = vmatprep.subr.bf16.mxu0 %v5716
    %6541 = vmatpush1.bf16.msra.mxu0 %v5715
    %6542 = vmatprep.subr.bf16.mxu0 %v5723
    %6543 = vmatpush1.bf16.msra.mxu0 %v5722
    %6544 = vmatprep.subr.bf16.mxu0 %v5730
    %6545 = vmatpush1.bf16.msra.mxu0 %v5729
    %6546 = vmatprep.subr.bf16.mxu0 %v5737
    %6547 = vmatpush1.bf16.msra.mxu0 %v5736
    %6548 = vmatprep.subr.bf16.mxu0 %v5744
    %6549 = vmatpush1.bf16.msra.mxu0 %v5743
    %6550 = vmatprep.subr.bf16.mxu0 %v5751
    %6551 = vmatpush1.bf16.msra.mxu0 %v5750
    %6552 = vmatprep.subr.bf16.mxu0 %v5758
    %6553 = vmatpush1.bf16.msra.mxu0 %v5757
    %6554 = vmatprep.subr.bf16.mxu0 %v5765
    %6555 = vmatpush1.bf16.msra.mxu0 %v5764
    %6556 = vmatprep.subr.bf16.mxu0 %v5772
    %6557 = vmatpush1.bf16.msra.mxu0 %v5771
    %6558 = vmatprep.subr.bf16.mxu0 %v5779
    %6559 = vmatpush1.bf16.msra.mxu0 %v5778
    %6560 = vmatprep.subr.bf16.mxu0 %v5786
    %6561 = vmatpush1.bf16.msra.mxu0 %v5785
    %6562 = vmatprep.subr.bf16.mxu0 %v5793
    %6563 = vmatpush1.bf16.msra.mxu0 %v5792
    %6564 = vmatprep.mubr.bf16.mxu0 %v3391
    %6565 = vmatmul.mubr.bf16.gmra.mrb[0].mxu0 %v3390
    %v6566 = vpop.f32.mrb[0].mxu0
    %v6567 = vadd.f32 %v6526, %v6566
    %v6568 = vpop.f32.mrb[0].mxu0
    %v6569 = vadd.f32 %v6528, %v6568
    %v6570 = vpop.f32.mrb[0].mxu0
    %v6571 = vpop.f32.mrb[0].mxu0
    %6572 = vdwg.mxu0
    %6573 = vmatprep.subr.bf16.mxu0 %v5354
    %6574 = vmatpush1.bf16.msra.mxu0 %v5353
    %6575 = vmatprep.subr.bf16.mxu0 %v5361
    %6576 = vmatpush1.bf16.msra.mxu0 %v5360
    %6577 = vmatprep.subr.bf16.mxu0 %v5368
    %6578 = vmatpush1.bf16.msra.mxu0 %v5367
    %6579 = vmatprep.subr.bf16.mxu0 %v5375
    %6580 = vmatpush1.bf16.msra.mxu0 %v5374
    %6581 = vmatprep.subr.bf16.mxu0 %v5382
    %6582 = vmatpush1.bf16.msra.mxu0 %v5381
    %6583 = vmatprep.subr.bf16.mxu0 %v5389
    %6584 = vmatpush1.bf16.msra.mxu0 %v5388
    %6585 = vmatprep.subr.bf16.mxu0 %v5396
    %6586 = vmatpush1.bf16.msra.mxu0 %v5395
    %6587 = vmatprep.subr.bf16.mxu0 %v5403
    %6588 = vmatpush1.bf16.msra.mxu0 %v5402
    %6589 = vmatprep.subr.bf16.mxu0 %v5410
    %6590 = vmatpush1.bf16.msra.mxu0 %v5409
    %6591 = vmatprep.subr.bf16.mxu0 %v5417
    %6592 = vmatpush1.bf16.msra.mxu0 %v5416
    %6593 = vmatprep.subr.bf16.mxu0 %v5424
    %6594 = vmatpush1.bf16.msra.mxu0 %v5423
    %6595 = vmatprep.subr.bf16.mxu0 %v5431
    %6596 = vmatpush1.bf16.msra.mxu0 %v5430
    %6597 = vmatprep.subr.bf16.mxu0 %v5438
    %6598 = vmatpush1.bf16.msra.mxu0 %v5437
    %6599 = vmatprep.subr.bf16.mxu0 %v5445
    %6600 = vmatpush1.bf16.msra.mxu0 %v5444
    %6601 = vmatprep.subr.bf16.mxu0 %v5452
    %6602 = vmatpush1.bf16.msra.mxu0 %v5451
    %6603 = vmatprep.subr.bf16.mxu0 %v5459
    %6604 = vmatpush1.bf16.msra.mxu0 %v5458
    %6605 = vmatprep.mubr.bf16.mxu0 %v3385
    %6606 = vmatmul.mubr.bf16.gmra.mrb[0].mxu0 %v3384
    %v6607 = vpop.f32.mrb[0].mxu0
    %v6608 = vadd.f32 %v3925, %v6607
    %v6609 = vpop.f32.mrb[0].mxu0
    %v6610 = vadd.f32 %v3929, %v6609
    %v6611 = vpop.f32.mrb[0].mxu0
    %v6612 = vpop.f32.mrb[0].mxu0
    %6613 = vdwg.mxu0
    %6614 = vmatprep.subr.bf16.mxu0 %v5466
    %6615 = vmatpush1.bf16.msra.mxu0 %v5465
    %6616 = vmatprep.subr.bf16.mxu0 %v5473
    %6617 = vmatpush1.bf16.msra.mxu0 %v5472
    %6618 = vmatprep.subr.bf16.mxu0 %v5480
    %6619 = vmatpush1.bf16.msra.mxu0 %v5479
    %6620 = vmatprep.subr.bf16.mxu0 %v5487
    %6621 = vmatpush1.bf16.msra.mxu0 %v5486
    %6622 = vmatprep.subr.bf16.mxu0 %v5494
    %6623 = vmatpush1.bf16.msra.mxu0 %v5493
    %6624 = vmatprep.subr.bf16.mxu0 %v5501
    %6625 = vmatpush1.bf16.msra.mxu0 %v5500
    %6626 = vmatprep.subr.bf16.mxu0 %v5508
    %6627 = vmatpush1.bf16.msra.mxu0 %v5507
    %6628 = vmatprep.subr.bf16.mxu0 %v5515
    %6629 = vmatpush1.bf16.msra.mxu0 %v5514
    %6630 = vmatprep.subr.bf16.mxu0 %v5522
    %6631 = vmatpush1.bf16.msra.mxu0 %v5521
    %6632 = vmatprep.subr.bf16.mxu0 %v5529
    %6633 = vmatpush1.bf16.msra.mxu0 %v5528
    %6634 = vmatprep.subr.bf16.mxu0 %v5536
    %6635 = vmatpush1.bf16.msra.mxu0 %v5535
    %6636 = vmatprep.subr.bf16.mxu0 %v5543
    %6637 = vmatpush1.bf16.msra.mxu0 %v5542
    %6638 = vmatprep.subr.bf16.mxu0 %v5550
    %6639 = vmatpush1.bf16.msra.mxu0 %v5549
    %6640 = vmatprep.subr.bf16.mxu0 %v5557
    %6641 = vmatpush1.bf16.msra.mxu0 %v5556
    %6642 = vmatprep.subr.bf16.mxu0 %v5564
    %6643 = vmatpush1.bf16.msra.mxu0 %v5563
    %6644 = vmatprep.subr.bf16.mxu0 %v5571
    %6645 = vmatpush1.bf16.msra.mxu0 %v5570
    %6646 = vmatprep.mubr.bf16.mxu0 %v3387
    %6647 = vmatmul.mubr.bf16.gmra.mrb[0].mxu0 %v3386
    %v6648 = vpop.f32.mrb[0].mxu0
    %v6649 = vadd.f32 %v6608, %v6648
    %v6650 = vpop.f32.mrb[0].mxu0
    %v6651 = vadd.f32 %v6610, %v6650
    %v6652 = vpop.f32.mrb[0].mxu0
    %v6653 = vpop.f32.mrb[0].mxu0
    %6654 = vdwg.mxu0
    %6655 = vmatprep.subr.bf16.mxu0 %v5578
    %6656 = vmatpush1.bf16.msra.mxu0 %v5577
    %6657 = vmatprep.subr.bf16.mxu0 %v5585
    %6658 = vmatpush1.bf16.msra.mxu0 %v5584
    %6659 = vmatprep.subr.bf16.mxu0 %v5592
    %6660 = vmatpush1.bf16.msra.mxu0 %v5591
    %6661 = vmatprep.subr.bf16.mxu0 %v5599
    %6662 = vmatpush1.bf16.msra.mxu0 %v5598
    %6663 = vmatprep.subr.bf16.mxu0 %v5606
    %6664 = vmatpush1.bf16.msra.mxu0 %v5605
    %6665 = vmatprep.subr.bf16.mxu0 %v5613
    %6666 = vmatpush1.bf16.msra.mxu0 %v5612
    %6667 = vmatprep.subr.bf16.mxu0 %v5620
    %6668 = vmatpush1.bf16.msra.mxu0 %v5619
    %6669 = vmatprep.subr.bf16.mxu0 %v5627
    %6670 = vmatpush1.bf16.msra.mxu0 %v5626
    %6671 = vmatprep.subr.bf16.mxu0 %v5634
    %6672 = vmatpush1.bf16.msra.mxu0 %v5633
    %6673 = vmatprep.subr.bf16.mxu0 %v5641
    %6674 = vmatpush1.bf16.msra.mxu0 %v5640
    %6675 = vmatprep.subr.bf16.mxu0 %v5648
    %6676 = vmatpush1.bf16.msra.mxu0 %v5647
    %6677 = vmatprep.subr.bf16.mxu0 %v5655
    %6678 = vmatpush1.bf16.msra.mxu0 %v5654
    %6679 = vmatprep.subr.bf16.mxu0 %v5662
    %6680 = vmatpush1.bf16.msra.mxu0 %v5661
    %6681 = vmatprep.subr.bf16.mxu0 %v5669
    %6682 = vmatpush1.bf16.msra.mxu0 %v5668
    %6683 = vmatprep.subr.bf16.mxu0 %v5676
    %6684 = vmatpush1.bf16.msra.mxu0 %v5675
    %6685 = vmatprep.subr.bf16.mxu0 %v5683
    %6686 = vmatpush1.bf16.msra.mxu0 %v5682
    %6687 = vmatprep.mubr.bf16.mxu0 %v3389
    %6688 = vmatmul.mubr.bf16.gmra.mrb[0].mxu0 %v3388
    %v6689 = vpop.f32.mrb[0].mxu0
    %v6690 = vadd.f32 %v6649, %v6689
    %v6691 = vpop.f32.mrb[0].mxu0
    %v6692 = vadd.f32 %v6651, %v6691
    %v6693 = vpop.f32.mrb[0].mxu0
    %v6694 = vpop.f32.mrb[0].mxu0
    %6695 = vdwg.mxu0
    %6696 = vmatprep.subr.bf16.mxu0 %v5690
    %6697 = vmatpush1.bf16.msra.mxu0 %v5689
    %6698 = vmatprep.subr.bf16.mxu0 %v5697
    %6699 = vmatpush1.bf16.msra.mxu0 %v5696
    %6700 = vmatprep.subr.bf16.mxu0 %v5704
    %6701 = vmatpush1.bf16.msra.mxu0 %v5703
    %6702 = vmatprep.subr.bf16.mxu0 %v5711
    %6703 = vmatpush1.bf16.msra.mxu0 %v5710
    %6704 = vmatprep.subr.bf16.mxu0 %v5718
    %6705 = vmatpush1.bf16.msra.mxu0 %v5717
    %6706 = vmatprep.subr.bf16.mxu0 %v5725
    %6707 = vmatpush1.bf16.msra.mxu0 %v5724
    %6708 = vmatprep.subr.bf16.mxu0 %v5732
    %6709 = vmatpush1.bf16.msra.mxu0 %v5731
    %6710 = vmatprep.subr.bf16.mxu0 %v5739
    %6711 = vmatpush1.bf16.msra.mxu0 %v5738
    %6712 = vmatprep.subr.bf16.mxu0 %v5746
    %6713 = vmatpush1.bf16.msra.mxu0 %v5745
    %6714 = vmatprep.subr.bf16.mxu0 %v5753
    %6715 = vmatpush1.bf16.msra.mxu0 %v5752
    %6716 = vmatprep.subr.bf16.mxu0 %v5760
    %6717 = vmatpush1.bf16.msra.mxu0 %v5759
    %6718 = vmatprep.subr.bf16.mxu0 %v5767
    %6719 = vmatpush1.bf16.msra.mxu0 %v5766
    %6720 = vmatprep.subr.bf16.mxu0 %v5774
    %6721 = vmatpush1.bf16.msra.mxu0 %v5773
    %6722 = vmatprep.subr.bf16.mxu0 %v5781
    %6723 = vmatpush1.bf16.msra.mxu0 %v5780
    %6724 = vmatprep.subr.bf16.mxu0 %v5788
    %6725 = vmatpush1.bf16.msra.mxu0 %v5787
    %6726 = vmatprep.subr.bf16.mxu0 %v5795
    %6727 = vmatpush1.bf16.msra.mxu0 %v5794
    %6728 = vmatprep.mubr.bf16.mxu0 %v3391
    %6729 = vmatmul.mubr.bf16.gmra.mrb[0].mxu0 %v3390
    %v6730 = vpop.f32.mrb[0].mxu0
    %v6731 = vadd.f32 %v6690, %v6730
    %v6732 = vpop.f32.mrb[0].mxu0
    %v6733 = vadd.f32 %v6692, %v6732
    %v6734 = vpop.f32.mrb[0].mxu0
    %v6735 = vpop.f32.mrb[0].mxu0
    %6736 = vdwg.mxu0
    %6737 = vmatprep.subr.bf16.mxu0 0
    %6738 = vmatpush1.bf16.msra.mxu0 %v5355
    %6739 = vmatprep.subr.bf16.mxu0 0
    %6740 = vmatpush1.bf16.msra.mxu0 %v5362
    %6741 = vmatprep.subr.bf16.mxu0 0
    %6742 = vmatpush1.bf16.msra.mxu0 %v5369
    %6743 = vmatprep.subr.bf16.mxu0 0
    %6744 = vmatpush1.bf16.msra.mxu0 %v5376
    %6745 = vmatprep.subr.bf16.mxu0 0
    %6746 = vmatpush1.bf16.msra.mxu0 %v5383
    %6747 = vmatprep.subr.bf16.mxu0 0
    %6748 = vmatpush1.bf16.msra.mxu0 %v5390
    %6749 = vmatprep.subr.bf16.mxu0 0
    %6750 = vmatpush1.bf16.msra.mxu0 %v5397
    %6751 = vmatprep.subr.bf16.mxu0 0
    %6752 = vmatpush1.bf16.msra.mxu0 %v5404
    %6753 = vmatprep.subr.bf16.mxu0 0
    %6754 = vmatpush1.bf16.msra.mxu0 %v5411
    %6755 = vmatprep.subr.bf16.mxu0 0
    %6756 = vmatpush1.bf16.msra.mxu0 %v5418
    %6757 = vmatprep.subr.bf16.mxu0 0
    %6758 = vmatpush1.bf16.msra.mxu0 %v5425
    %6759 = vmatprep.subr.bf16.mxu0 0
    %6760 = vmatpush1.bf16.msra.mxu0 %v5432
    %6761 = vmatprep.subr.bf16.mxu0 0
    %6762 = vmatpush1.bf16.msra.mxu0 %v5439
    %6763 = vmatprep.subr.bf16.mxu0 0
    %6764 = vmatpush1.bf16.msra.mxu0 %v5446
    %6765 = vmatprep.subr.bf16.mxu0 0
    %6766 = vmatpush1.bf16.msra.mxu0 %v5453
    %6767 = vmatprep.subr.bf16.mxu0 0
    %6768 = vmatpush1.bf16.msra.mxu0 %v5460
    %6769 = vmatprep.mubr.bf16.mxu0 %v3385
    %6770 = vmatmul.mubr.bf16.gmra.mrb[0].mxu0 %v3384
    %v6771 = vpop.f32.mrb[0].mxu0
    %v6772 = vadd.f32 %v3933, %v6771
    %v6773 = vpop.f32.mrb[0].mxu0
    %v6774 = vpop.f32.mrb[0].mxu0
    %v6775 = vpop.f32.mrb[0].mxu0
    %6776 = vdwg.mxu0
    %6777 = vmatprep.subr.bf16.mxu0 0
    %6778 = vmatpush1.bf16.msra.mxu0 %v5467
    %6779 = vmatprep.subr.bf16.mxu0 0
    %6780 = vmatpush1.bf16.msra.mxu0 %v5474
    %6781 = vmatprep.subr.bf16.mxu0 0
    %6782 = vmatpush1.bf16.msra.mxu0 %v5481
    %6783 = vmatprep.subr.bf16.mxu0 0
    %6784 = vmatpush1.bf16.msra.mxu0 %v5488
    %6785 = vmatprep.subr.bf16.mxu0 0
    %6786 = vmatpush1.bf16.msra.mxu0 %v5495
    %6787 = vmatprep.subr.bf16.mxu0 0
    %6788 = vmatpush1.bf16.msra.mxu0 %v5502
    %6789 = vmatprep.subr.bf16.mxu0 0
    %6790 = vmatpush1.bf16.msra.mxu0 %v5509
    %6791 = vmatprep.subr.bf16.mxu0 0
    %6792 = vmatpush1.bf16.msra.mxu0 %v5516
    %6793 = vmatprep.subr.bf16.mxu0 0
    %6794 = vmatpush1.bf16.msra.mxu0 %v5523
    %6795 = vmatprep.subr.bf16.mxu0 0
    %6796 = vmatpush1.bf16.msra.mxu0 %v5530
    %6797 = vmatprep.subr.bf16.mxu0 0
    %6798 = vmatpush1.bf16.msra.mxu0 %v5537
    %6799 = vmatprep.subr.bf16.mxu0 0
    %6800 = vmatpush1.bf16.msra.mxu0 %v5544
    %6801 = vmatprep.subr.bf16.mxu0 0
    %6802 = vmatpush1.bf16.msra.mxu0 %v5551
    %6803 = vmatprep.subr.bf16.mxu0 0
    %6804 = vmatpush1.bf16.msra.mxu0 %v5558
    %6805 = vmatprep.subr.bf16.mxu0 0
    %6806 = vmatpush1.bf16.msra.mxu0 %v5565
    %6807 = vmatprep.subr.bf16.mxu0 0
    %6808 = vmatpush1.bf16.msra.mxu0 %v5572
    %6809 = vmatprep.mubr.bf16.mxu0 %v3387
    %6810 = vmatmul.mubr.bf16.gmra.mrb[0].mxu0 %v3386
    %v6811 = vpop.f32.mrb[0].mxu0
    %v6812 = vadd.f32 %v6772, %v6811
    %v6813 = vpop.f32.mrb[0].mxu0
    %v6814 = vpop.f32.mrb[0].mxu0
    %v6815 = vpop.f32.mrb[0].mxu0
    %6816 = vdwg.mxu0
    %6817 = vmatprep.subr.bf16.mxu0 0
    %6818 = vmatpush1.bf16.msra.mxu0 %v5579
    %6819 = vmatprep.subr.bf16.mxu0 0
    %6820 = vmatpush1.bf16.msra.mxu0 %v5586
    %6821 = vmatprep.subr.bf16.mxu0 0
    %6822 = vmatpush1.bf16.msra.mxu0 %v5593
    %6823 = vmatprep.subr.bf16.mxu0 0
    %6824 = vmatpush1.bf16.msra.mxu0 %v5600
    %6825 = vmatprep.subr.bf16.mxu0 0
    %6826 = vmatpush1.bf16.msra.mxu0 %v5607
    %6827 = vmatprep.subr.bf16.mxu0 0
    %6828 = vmatpush1.bf16.msra.mxu0 %v5614
    %6829 = vmatprep.subr.bf16.mxu0 0
    %6830 = vmatpush1.bf16.msra.mxu0 %v5621
    %6831 = vmatprep.subr.bf16.mxu0 0
    %6832 = vmatpush1.bf16.msra.mxu0 %v5628
    %6833 = vmatprep.subr.bf16.mxu0 0
    %6834 = vmatpush1.bf16.msra.mxu0 %v5635
    %6835 = vmatprep.subr.bf16.mxu0 0
    %6836 = vmatpush1.bf16.msra.mxu0 %v5642
    %6837 = vmatprep.subr.bf16.mxu0 0
    %6838 = vmatpush1.bf16.msra.mxu0 %v5649
    %6839 = vmatprep.subr.bf16.mxu0 0
    %6840 = vmatpush1.bf16.msra.mxu0 %v5656
    %6841 = vmatprep.subr.bf16.mxu0 0
    %6842 = vmatpush1.bf16.msra.mxu0 %v5663
    %6843 = vmatprep.subr.bf16.mxu0 0
    %6844 = vmatpush1.bf16.msra.mxu0 %v5670
    %6845 = vmatprep.subr.bf16.mxu0 0
    %6846 = vmatpush1.bf16.msra.mxu0 %v5677
    %6847 = vmatprep.subr.bf16.mxu0 0
    %6848 = vmatpush1.bf16.msra.mxu0 %v5684
    %6849 = vmatprep.mubr.bf16.mxu0 %v3389
    %6850 = vmatmul.mubr.bf16.gmra.mrb[0].mxu0 %v3388
    %v6851 = vpop.f32.mrb[0].mxu0
    %v6852 = vadd.f32 %v6812, %v6851
    %v6853 = vpop.f32.mrb[0].mxu0
    %v6854 = vpop.f32.mrb[0].mxu0
    %v6855 = vpop.f32.mrb[0].mxu0
    %6856 = vdwg.mxu0
    %6857 = vmatprep.subr.bf16.mxu0 0
    %6858 = vmatpush1.bf16.msra.mxu0 %v5691
    %6859 = vmatprep.subr.bf16.mxu0 0
    %6860 = vmatpush1.bf16.msra.mxu0 %v5698
    %6861 = vmatprep.subr.bf16.mxu0 0
    %6862 = vmatpush1.bf16.msra.mxu0 %v5705
    %6863 = vmatprep.subr.bf16.mxu0 0
    %6864 = vmatpush1.bf16.msra.mxu0 %v5712
    %6865 = vmatprep.subr.bf16.mxu0 0
    %6866 = vmatpush1.bf16.msra.mxu0 %v5719
    %6867 = vmatprep.subr.bf16.mxu0 0
    %6868 = vmatpush1.bf16.msra.mxu0 %v5726
    %6869 = vmatprep.subr.bf16.mxu0 0
    %6870 = vmatpush1.bf16.msra.mxu0 %v5733
    %6871 = vmatprep.subr.bf16.mxu0 0
    %6872 = vmatpush1.bf16.msra.mxu0 %v5740
    %6873 = vmatprep.subr.bf16.mxu0 0
    %6874 = vmatpush1.bf16.msra.mxu0 %v5747
    %6875 = vmatprep.subr.bf16.mxu0 0
    %6876 = vmatpush1.bf16.msra.mxu0 %v5754
    %6877 = vmatprep.subr.bf16.mxu0 0
    %6878 = vmatpush1.bf16.msra.mxu0 %v5761
    %6879 = vmatprep.subr.bf16.mxu0 0
    %6880 = vmatpush1.bf16.msra.mxu0 %v5768
    %6881 = vmatprep.subr.bf16.mxu0 0
    %6882 = vmatpush1.bf16.msra.mxu0 %v5775
    %6883 = vmatprep.subr.bf16.mxu0 0
    %6884 = vmatpush1.bf16.msra.mxu0 %v5782
    %6885 = vmatprep.subr.bf16.mxu0 0
    %6886 = vmatpush1.bf16.msra.mxu0 %v5789
    %6887 = vmatprep.subr.bf16.mxu0 0
    %6888 = vmatpush1.bf16.msra.mxu0 %v5796
    %6889 = vmatprep.mubr.bf16.mxu0 %v3391
    %6890 = vmatmul.mubr.bf16.gmra.mrb[0].mxu0 %v3390
    %v6891 = vpop.f32.mrb[0].mxu0
    %v6892 = vadd.f32 %v6852, %v6891
    %v6893 = vpop.f32.mrb[0].mxu0
    %v6894 = vpop.f32.mrb[0].mxu0
    %v6895 = vpop.f32.mrb[0].mxu0
    %6896 = vdwg.mxu0
    %v6897 = vtanh.pop %v6403
    %v6898 = vtanh.pop %v6405
    %v6899 = vtanh.pop %v6567
    %v6900 = vtanh.pop %v6569
    %v6901 = vtanh.pop %v6731
    %v6902 = vtanh.pop %v6733
    %v6903 = vtanh.pop %v6892
    %6904 = vst [vmem:[%s16] sm:$0xff] %v6897
    %6905 = vst [vmem:[%s16 + $0x8] sm:$0xff] %v6898
    %6906 = vst [vmem:[%s16 + $0x10] sm:$0xff] %v6899
    %6907 = vst [vmem:[%s16 + $0x18] sm:$0xff] %v6900
    %6908 = vst [vmem:[%s16 + $0x20] sm:$0xff] %v6901
    %6909 = vst [vmem:[%s16 + $0x28] sm:$0xff] %v6902
    %6910 = vst [vmem:[%s16 + $0x30] sm:$0xff] %v6903
    // Predicated region
    $region130: #{generator_forward.1} parent=1 // pred_check
      _
    $region131: #{generator_forward.1} parent=1 // pred_check_branch
      %6912 = sbr.rel (0) target = $region133
    $region132: #{generator_forward.1} parent=1 // pred_region
      _
    $region133: #{generator_forward.1} parent=1 // pred_fallthru
      _
    // Predicated region
    $region134: #{generator_forward.1} parent=1 // pred_check
      _
    $region135: #{generator_forward.1} parent=1 // pred_check_branch
      %6914 = sbr.rel (0) target = $region137
    $region136: #{generator_forward.1} parent=1 // pred_region
      _
    $region137: #{generator_forward.1} parent=1 // pred_fallthru
      _
    %6915 = vsyncpa [#allocation3], 1
    %6916 = vsyncpa [#allocation5], 1
    %6917 = vsyncpa [#allocation8], 1
    %6918 = vsyncpa [#allocation11], 1
    %6919 = vsyncpa [#allocation14], 1
    %6920 = vsyncpa [#allocation17], 1
    %6921 = vsyncpa [#allocation20], 1
    %6922 = vsyncpa [#allocation23], 1
    %6923 = vsyncpa [#allocation26], 1

</llo_original>
